<compile_context>
chip_gen: v7x
topology: tpu7x:2x2x1
jax: 0.10.0
libtpu: 0.0.40
codegen_flags: <defaults>
</compile_context>

<pallas_src>
import functools

import jax
import jax.numpy as jnp
from jax.experimental import pallas as pl
from jax.experimental.pallas import tpu as pltpu

BN_EPS = 1e-5  # PyTorch BatchNorm2d default
LANE = 128


def _round_up(n, m):
    return (n + m - 1) // m * m


def _vmem_limit_bytes():
    """~75% of physical VMEM, capped at 96 MiB (v7x ~48 MiB, v5e/v6e ~96 MiB)."""
    cap = 128 * 1024 * 1024
    try:
        info = pltpu.get_tpu_info()
        cap = int(getattr(info, "vmem_capacity_bytes", cap))
    except Exception:
        pass
    return int(min(cap - cap // 4, 96 * 1024 * 1024))


def _pick_spatial_tile(hw, cout_p, budget_bytes):
    """Largest spatial tile (divisor of H*W, mult of 8 or full) within budget."""
    per_row = cout_p * (2 + 4) * 2  # bf16 in + f32 out, double-buffered
    cap = max(budget_bytes // per_row, 1)
    if hw <= cap:
        return hw
    for d in range(int(min(cap, hw)), 7, -1):
        if hw % d == 0 and d % 8 == 0:
            return d
    return hw


def _conv_stats_kernel(x_ref, w_ref, y_ref, stats_ref, acc_ref, *,
                       H, W, CinP, TC, use_k3):
    """Pass 1: 3x3 conv for one image x one Cout tile + BN tile statistics.

    x_ref:     (H+2, W+2, CinP) bf16  spatially padded NHWC input
    w_ref:     (3, 3*CinP, TC)  bf16  taps, kh-major, (kw, cin) flattened
    y_ref:     (H*W, TC)        bf16  conv output (pre-BN), spatially flat
    stats_ref: (2, TC)          f32   row 0 = tile mean, row 1 = centered M2
    acc_ref:   (H*W, TC)        f32   VMEM accumulator scratch
    """
    first = True
    for kh in range(3):
        xh = x_ref[kh:kh + H]                          # (H, W+2, CinP) bf16
        if use_k3:
            # Concatenate the three kw-shifted views along channels so the
            # MXU contraction is K = 3*CinP (only worth it when CinP == 128).
            patch = jnp.concatenate(
                [xh[:, kw:kw + W, :] for kw in range(3)], axis=-1)
            patch = patch.reshape(H * W, 3 * CinP)
            contrib = jnp.dot(patch, w_ref[kh],
                              preferred_element_type=jnp.float32)
            if first:
                acc_ref[...] = contrib
                first = False
            else:
                acc_ref[...] += contrib
        else:
            # K = CinP already fills MXU depth -> 9 matmuls, no concat copies.
            for kw in range(3):
                patch = xh[:, kw:kw + W, :].reshape(H * W, CinP)
                wk = w_ref[kh, kw * CinP:(kw + 1) * CinP, :]
                contrib = jnp.dot(patch, wk,
                                  preferred_element_type=jnp.float32)
                if first:
                    acc_ref[...] = contrib
                    first = False
                else:
                    acc_ref[...] += contrib

    acc = acc_ref[...]                                 # (H*W, TC) f32
    y_ref[...] = acc.astype(y_ref.dtype)               # bf16 writeback

    # Per-tile mean + centered sum of squares (numerically safe combine later).
    inv_cnt = 1.0 / float(H * W)
    mean_t = jnp.sum(acc, axis=0, keepdims=True) * inv_cnt     # (1, TC)
    d = acc - mean_t
    m2_t = jnp.sum(d * d, axis=0, keepdims=True)               # (1, TC)
    stats_ref[...] = jnp.concatenate([mean_t, m2_t], axis=0)


def _bn_relu_kernel(y_ref, a_ref, b_ref, o_ref, *, with_relu):
    """Pass 2: per-channel y * a + b, optional ReLU, lane-dense blocks."""
    y = y_ref[...].astype(jnp.float32)                 # (S_T, CoutP)
    out = y * a_ref[...] + b_ref[...]                  # (1, CoutP) broadcasts
    if with_relu:
        out = jnp.maximum(out, 0.0)
    o_ref[...] = out.astype(o_ref.dtype)


def conv_block_forward(x_nchw, params, *, with_nonlinearity=True,
                       cout_tile=None, eps=BN_EPS):
    """ConvBlock forward. Input/output are NCHW to match the PyTorch module."""
    w_hwio = params["w"]                               # (3, 3, Cin, Cout)
    gamma, beta = params["gamma"], params["beta"]
    # NOTE: params["b"] (conv bias) is intentionally unused: under
    # training-mode BatchNorm a per-channel constant offset is removed exactly
    # by the mean subtraction, so it cannot change the forward output.

    N, Cin, H, W = x_nchw.shape
    Cout = w_hwio.shape[-1]
    HW = H * W
    cin_p = _round_up(Cin, LANE)
    cout_p = _round_up(Cout, LANE)
    if cout_tile is None:
        # 256-wide output tiles feed the 2x256x256 MXUs (v6e/v7x) at full
        # width; on v5e (4x128x128) pass cout_tile=128 explicitly if desired.
        cout_tile = 256 if cout_p % 256 == 0 else LANE
    TC = cout_tile
    cout_p = _round_up(cout_p, TC)
    n_j = cout_p // TC
    use_k3 = cin_p < 256      # K=3*CinP concat only when CinP alone is shallow

    # --- Host-side (XLA) prep: layout, channel/spatial padding, bf16 cast.
    x = jnp.transpose(x_nchw, (0, 2, 3, 1))                        # NHWC
    x = jnp.pad(x, ((0, 0), (1, 1), (1, 1), (0, cin_p - Cin)))     # pad=1
    x = x.astype(jnp.bfloat16)

    w = jnp.pad(w_hwio, ((0, 0), (0, 0), (0, cin_p - Cin), (0, cout_p - Cout)))
    w3 = w.reshape(3, 3 * cin_p, cout_p).astype(jnp.bfloat16)

    gamma_p = jnp.pad(gamma.astype(jnp.float32), (0, cout_p - Cout))
    beta_p = jnp.pad(beta.astype(jnp.float32), (0, cout_p - Cout))

    cparams = pltpu.CompilerParams(
        dimension_semantics=("parallel", "parallel"),
        vmem_limit_bytes=_vmem_limit_bytes())

    # --- Pass 1: conv + per-(image, cout-tile) BN statistics.
    # Grid order: keep the heavier operand grid-invariant along the inner axis
    # (Pallas only skips the DMA when the block index repeats between steps).
    x_blk_bytes = (H + 2) * (W + 2) * cin_p * 2
    w_blk_bytes = 9 * cin_p * TC * 2
    traffic_batch_major = N * x_blk_bytes + N * n_j * w_blk_bytes
    traffic_weight_major = n_j * N * x_blk_bytes + n_j * w_blk_bytes
    weight_major = traffic_weight_major < traffic_batch_major

    if weight_major:
        grid1 = (n_j, N)
        x_map = lambda j, n: (n, 0, 0, 0)
        w_map = lambda j, n: (0, 0, j)
        y_map = lambda j, n: (n, 0, j)
        s_map = lambda j, n: (n, 0, j)
    else:
        grid1 = (N, n_j)
        x_map = lambda n, j: (n, 0, 0, 0)
        w_map = lambda n, j: (0, 0, j)
        y_map = lambda n, j: (n, 0, j)
        s_map = lambda n, j: (n, 0, j)

    kern1 = functools.partial(_conv_stats_kernel, H=H, W=W, CinP=cin_p,
                              TC=TC, use_k3=use_k3)
    y_conv, stats = pl.pallas_call(
        kern1,
        grid=grid1,
        in_specs=[
            pl.BlockSpec((None, H + 2, W + 2, cin_p), x_map),
            pl.BlockSpec((3, 3 * cin_p, TC), w_map),
        ],
        out_specs=[
            pl.BlockSpec((None, HW, TC), y_map),
            pl.BlockSpec((None, 2, TC), s_map),
        ],
        out_shape=[
            jax.ShapeDtypeStruct((N, HW, cout_p), jnp.bfloat16),
            jax.ShapeDtypeStruct((N, 2, cout_p), jnp.float32),
        ],
        scratch_shapes=[pltpu.VMEM((HW, TC), jnp.float32)],
        compiler_params=cparams,
    )(x, w3)

    # --- Tiny O(C) exact variance combine + BN scale/shift fold (plain XLA).
    count_tile = float(HW)
    count = float(N * HW)
    tile_mean = stats[:, 0, :]                         # (N, cout_p)
    tile_m2 = stats[:, 1, :]                           # (N, cout_p)
    mean = jnp.mean(tile_mean, axis=0)
    m2 = jnp.sum(tile_m2, axis=0) + count_tile * jnp.sum(
        (tile_mean - mean[None, :]) ** 2, axis=0)
    var = jnp.maximum(m2 / count, 0.0)
    a = gamma_p * jax.lax.rsqrt(var + eps)
    b = beta_p - mean * a

    # --- Pass 2: normalize + affine + ReLU; big lane-dense elementwise blocks.
    s_tile = _pick_spatial_tile(HW, cout_p, budget_bytes=12 * 1024 * 1024)
    n_s = HW // s_tile
    kern2 = functools.partial(_bn_relu_kernel, with_relu=with_nonlinearity)
    out = pl.pallas_call(
        kern2,
        grid=(N, n_s),
        in_specs=[
            pl.BlockSpec((None, s_tile, cout_p), lambda n, s: (n, s, 0)),
            pl.BlockSpec((1, cout_p), lambda n, s: (0, 0)),
            pl.BlockSpec((1, cout_p), lambda n, s: (0, 0)),
        ],
        out_specs=pl.BlockSpec((None, s_tile, cout_p), lambda n, s: (n, s, 0)),
        out_shape=jax.ShapeDtypeStruct((N, HW, cout_p), jnp.float32),
        compiler_params=cparams,
    )(y_conv, a.reshape(1, cout_p), b.reshape(1, cout_p))

    out = out.reshape(N, H, W, cout_p)[..., :Cout]      # drop channel padding
    return jnp.transpose(out, (0, 3, 1, 2))             # NHWC -> NCHW


def init_conv_block_params(key, in_channels, out_channels):
    """Deterministic synthetic params mirroring ConvBlock.__init__ shapes."""
    kw_key, kb_key = jax.random.split(key)
    fan_in = in_channels * 3 * 3
    bound = 1.0 / float(jnp.sqrt(jnp.float32(fan_in)))
    w = jax.random.uniform(kw_key, (3, 3, in_channels, out_channels),
                           jnp.float32, minval=-bound, maxval=bound)   # HWIO
    b = jax.random.uniform(kb_key, (out_channels,), jnp.float32,
                           minval=-bound, maxval=bound)
    gamma = jnp.ones((out_channels,), jnp.float32)
    beta = jnp.zeros((out_channels,), jnp.float32)
    return dict(w=w, b=b, gamma=gamma, beta=beta)


def conv_block_reference(x_nchw, params, with_nonlinearity=True, eps=BN_EPS):
    """Pure-JAX reference (Conv2d + training-mode BatchNorm2d + ReLU)."""
    w_oihw = jnp.transpose(params["w"], (3, 2, 0, 1))
    conv = jax.lax.conv_general_dilated(
        x_nchw, w_oihw, window_strides=(1, 1), padding="SAME",
        dimension_numbers=("NCHW", "OIHW", "NCHW"),
        precision=jax.lax.Precision.HIGHEST,
        preferred_element_type=jnp.float32)
    conv = conv + params["b"][None, :, None, None]
    mean = jnp.mean(conv, axis=(0, 2, 3), keepdims=True)
    var = jnp.mean((conv - mean) ** 2, axis=(0, 2, 3), keepdims=True)
    y = (conv - mean) * jax.lax.rsqrt(var + eps)
    y = y * params["gamma"][None, :, None, None] + params["beta"][None, :, None, None]
    if with_nonlinearity:
        y = jnp.maximum(y, 0.0)
    return y


if __name__ == "__main__":
    key = jax.random.PRNGKey(0)
    pkey, xkey = jax.random.split(key)

    batch, in_channels, out_channels, spatial = 2, 4, 8, 16
    params = init_conv_block_params(pkey, in_channels, out_channels)
    x = jax.random.normal(xkey, (batch, in_channels, spatial, spatial),
                          dtype=jnp.float32)

    out = conv_block_forward(x, params)
    out = jax.block_until_ready(out)
    assert out.shape == (batch, out_channels, spatial, spatial), out.shape

    # Sanity check vs. a pure-JAX reference (loose tol: bf16 MXU inputs).
    ref = conv_block_reference(x, params)
    max_err = float(jnp.max(jnp.abs(out - ref)))
    assert max_err < 0.2, f"max abs error too large: {max_err}"

    print("KERNEL_OK")
</pallas_src>

<mosaic_0001>
module attributes {stable_mosaic.version = 11 : i64} {
  func.func @_conv_stats_kernel(%arg0: i32, %arg1: i32, %arg2: memref<1x18x18x128xbf16, #tpu.memory_space<vmem>>, %arg3: memref<3x384x128xbf16, #tpu.memory_space<vmem>>, %arg4: memref<1x256x128xbf16, #tpu.memory_space<vmem>>, %arg5: memref<1x2x128xf32, #tpu.memory_space<vmem>>, %arg6: memref<256x128xf32, #tpu.memory_space<vmem>>) attributes {dimension_semantics = [#tpu.dimension_semantics<parallel>, #tpu.dimension_semantics<parallel>], iteration_bounds = array<i64: 1, 2>, scalar_prefetch = 0 : i64, scratch_operands = 1 : i64, tpu.core_type = #tpu.core_type<tc>, window_params = [{transform_indices = @transform_0, window_bounds = array<i64: 1, 18, 18, 128>}, {transform_indices = @transform_1, window_bounds = array<i64: 3, 384, 128>}, {transform_indices = @transform_2, window_bounds = array<i64: 1, 256, 128>}, {transform_indices = @transform_3, window_bounds = array<i64: 1, 2, 128>}]} {
    %c0 = arith.constant 0 : index
    %c0_0 = arith.constant 0 : index
    %c0_1 = arith.constant 0 : index
    %c0_2 = arith.constant 0 : index
    %0 = vector.load %arg2[%c0, %c0_0, %c0_1, %c0_2] : memref<1x18x18x128xbf16, #tpu.memory_space<vmem>>, vector<1x16x18x128xbf16>
    %1 = vector.shape_cast %0 : vector<1x16x18x128xbf16> to vector<16x18x128xbf16>
    %2 = vector.extract_strided_slice %1 {offsets = [0, 0, 0], sizes = [16, 16, 128], strides = [1, 1, 1]} : vector<16x18x128xbf16> to vector<16x16x128xbf16>
    %3 = vector.extract_strided_slice %1 {offsets = [0, 1, 0], sizes = [16, 16, 128], strides = [1, 1, 1]} : vector<16x18x128xbf16> to vector<16x16x128xbf16>
    %4 = vector.extract_strided_slice %1 {offsets = [0, 2, 0], sizes = [16, 16, 128], strides = [1, 1, 1]} : vector<16x18x128xbf16> to vector<16x16x128xbf16>
    %5 = tpu.concatenate %2, %3, %4 in 2 : vector<16x16x128xbf16>, vector<16x16x128xbf16>, vector<16x16x128xbf16> -> vector<16x16x384xbf16>
    %6 = vector.shape_cast %5 : vector<16x16x384xbf16> to vector<256x384xbf16>
    %c0_3 = arith.constant 0 : index
    %c0_4 = arith.constant 0 : index
    %c0_5 = arith.constant 0 : index
    %7 = vector.load %arg3[%c0_3, %c0_4, %c0_5] : memref<3x384x128xbf16, #tpu.memory_space<vmem>>, vector<1x384x128xbf16>
    %8 = vector.shape_cast %7 : vector<1x384x128xbf16> to vector<384x128xbf16>
    %cst = arith.constant dense<0.000000e+00> : vector<256x128xf32>
    %9 = tpu.matmul %6, %8, %cst {dimension_numbers = #tpu.dot_dimension_numbers<[1], [0], [0], [1], [0, 0, 1, 1], [], []>} : vector<256x384xbf16>, vector<384x128xbf16>, vector<256x128xf32> -> vector<256x128xf32>
    %c0_6 = arith.constant 0 : index
    %c0_7 = arith.constant 0 : index
    %10 = vector.load %arg6[%c0_6, %c0_7] : memref<256x128xf32, #tpu.memory_space<vmem>>, vector<256x128xf32>
    tpu.vector_store %arg6[%c0_6, %c0_7], %9 {strides = array<i32>} : memref<256x128xf32, #tpu.memory_space<vmem>>, vector<256x128xf32>,
    %c0_8 = arith.constant 0 : index
    %c1 = arith.constant 1 : index
    %c0_9 = arith.constant 0 : index
    %c0_10 = arith.constant 0 : index
    %11 = vector.load %arg2[%c0_8, %c1, %c0_9, %c0_10] : memref<1x18x18x128xbf16, #tpu.memory_space<vmem>>, vector<1x16x18x128xbf16>
    %12 = vector.shape_cast %11 : vector<1x16x18x128xbf16> to vector<16x18x128xbf16>
    %13 = vector.extract_strided_slice %12 {offsets = [0, 0, 0], sizes = [16, 16, 128], strides = [1, 1, 1]} : vector<16x18x128xbf16> to vector<16x16x128xbf16>
    %14 = vector.extract_strided_slice %12 {offsets = [0, 1, 0], sizes = [16, 16, 128], strides = [1, 1, 1]} : vector<16x18x128xbf16> to vector<16x16x128xbf16>
    %15 = vector.extract_strided_slice %12 {offsets = [0, 2, 0], sizes = [16, 16, 128], strides = [1, 1, 1]} : vector<16x18x128xbf16> to vector<16x16x128xbf16>
    %16 = tpu.concatenate %13, %14, %15 in 2 : vector<16x16x128xbf16>, vector<16x16x128xbf16>, vector<16x16x128xbf16> -> vector<16x16x384xbf16>
    %17 = vector.shape_cast %16 : vector<16x16x384xbf16> to vector<256x384xbf16>
    %c1_11 = arith.constant 1 : index
    %c0_12 = arith.constant 0 : index
    %c0_13 = arith.constant 0 : index
    %18 = vector.load %arg3[%c1_11, %c0_12, %c0_13] : memref<3x384x128xbf16, #tpu.memory_space<vmem>>, vector<1x384x128xbf16>
    %19 = vector.shape_cast %18 : vector<1x384x128xbf16> to vector<384x128xbf16>
    %cst_14 = arith.constant dense<0.000000e+00> : vector<256x128xf32>
    %20 = tpu.matmul %17, %19, %cst_14 {dimension_numbers = #tpu.dot_dimension_numbers<[1], [0], [0], [1], [0, 0, 1, 1], [], []>} : vector<256x384xbf16>, vector<384x128xbf16>, vector<256x128xf32> -> vector<256x128xf32>
    %c0_15 = arith.constant 0 : index
    %c0_16 = arith.constant 0 : index
    %21 = vector.load %arg6[%c0_15, %c0_16] : memref<256x128xf32, #tpu.memory_space<vmem>>, vector<256x128xf32>
    %22 = arith.addf %21, %20 : vector<256x128xf32>
    %c0_17 = arith.constant 0 : index
    %c0_18 = arith.constant 0 : index
    %23 = vector.load %arg6[%c0_17, %c0_18] : memref<256x128xf32, #tpu.memory_space<vmem>>, vector<256x128xf32>
    tpu.vector_store %arg6[%c0_17, %c0_18], %22 {strides = array<i32>} : memref<256x128xf32, #tpu.memory_space<vmem>>, vector<256x128xf32>,
    %c0_19 = arith.constant 0 : index
    %c2 = arith.constant 2 : index
    %c0_20 = arith.constant 0 : index
    %c0_21 = arith.constant 0 : index
    %24 = vector.load %arg2[%c0_19, %c2, %c0_20, %c0_21] : memref<1x18x18x128xbf16, #tpu.memory_space<vmem>>, vector<1x16x18x128xbf16>
    %25 = vector.shape_cast %24 : vector<1x16x18x128xbf16> to vector<16x18x128xbf16>
    %26 = vector.extract_strided_slice %25 {offsets = [0, 0, 0], sizes = [16, 16, 128], strides = [1, 1, 1]} : vector<16x18x128xbf16> to vector<16x16x128xbf16>
    %27 = vector.extract_strided_slice %25 {offsets = [0, 1, 0], sizes = [16, 16, 128], strides = [1, 1, 1]} : vector<16x18x128xbf16> to vector<16x16x128xbf16>
    %28 = vector.extract_strided_slice %25 {offsets = [0, 2, 0], sizes = [16, 16, 128], strides = [1, 1, 1]} : vector<16x18x128xbf16> to vector<16x16x128xbf16>
    %29 = tpu.concatenate %26, %27, %28 in 2 : vector<16x16x128xbf16>, vector<16x16x128xbf16>, vector<16x16x128xbf16> -> vector<16x16x384xbf16>
    %30 = vector.shape_cast %29 : vector<16x16x384xbf16> to vector<256x384xbf16>
    %c2_22 = arith.constant 2 : index
    %c0_23 = arith.constant 0 : index
    %c0_24 = arith.constant 0 : index
    %31 = vector.load %arg3[%c2_22, %c0_23, %c0_24] : memref<3x384x128xbf16, #tpu.memory_space<vmem>>, vector<1x384x128xbf16>
    %32 = vector.shape_cast %31 : vector<1x384x128xbf16> to vector<384x128xbf16>
    %cst_25 = arith.constant dense<0.000000e+00> : vector<256x128xf32>
    %33 = tpu.matmul %30, %32, %cst_25 {dimension_numbers = #tpu.dot_dimension_numbers<[1], [0], [0], [1], [0, 0, 1, 1], [], []>} : vector<256x384xbf16>, vector<384x128xbf16>, vector<256x128xf32> -> vector<256x128xf32>
    %c0_26 = arith.constant 0 : index
    %c0_27 = arith.constant 0 : index
    %34 = vector.load %arg6[%c0_26, %c0_27] : memref<256x128xf32, #tpu.memory_space<vmem>>, vector<256x128xf32>
    %35 = arith.addf %34, %33 : vector<256x128xf32>
    %c0_28 = arith.constant 0 : index
    %c0_29 = arith.constant 0 : index
    %36 = vector.load %arg6[%c0_28, %c0_29] : memref<256x128xf32, #tpu.memory_space<vmem>>, vector<256x128xf32>
    tpu.vector_store %arg6[%c0_28, %c0_29], %35 {strides = array<i32>} : memref<256x128xf32, #tpu.memory_space<vmem>>, vector<256x128xf32>,
    %c0_30 = arith.constant 0 : index
    %c0_31 = arith.constant 0 : index
    %37 = vector.load %arg6[%c0_30, %c0_31] : memref<256x128xf32, #tpu.memory_space<vmem>>, vector<256x128xf32>
    %38 = arith.truncf %37 : vector<256x128xf32> to vector<256x128xbf16>
    %c0_32 = arith.constant 0 : index
    %c0_33 = arith.constant 0 : index
    %c0_34 = arith.constant 0 : index
    %39 = vector.load %arg4[%c0_32, %c0_33, %c0_34] : memref<1x256x128xbf16, #tpu.memory_space<vmem>>, vector<1x256x128xbf16>
    %40 = vector.shape_cast %39 : vector<1x256x128xbf16> to vector<256x128xbf16>
    %41 = vector.shape_cast %38 : vector<256x128xbf16> to vector<1x256x128xbf16>
    tpu.vector_store %arg4[%c0_32, %c0_33, %c0_34], %41 {strides = array<i32>} : memref<1x256x128xbf16, #tpu.memory_space<vmem>>, vector<1x256x128xbf16>,
    %cst_35 = arith.constant dense<0.000000e+00> : vector<128xf32>
    %42 = vector.multi_reduction <add>, %37, %cst_35 [0] : vector<256x128xf32> to vector<128xf32>
    %43 = vector.shape_cast %42 : vector<128xf32> to vector<1x128xf32>
    %cst_36 = arith.constant 3.906250e-03 : f32
    %44 = vector.broadcast %cst_36 : f32 to vector<1x128xf32>
    %45 = arith.mulf %43, %44 : vector<1x128xf32>
    %46 = vector.broadcast %45 : vector<1x128xf32> to vector<256x128xf32>
    %47 = arith.subf %37, %46 : vector<256x128xf32>
    %48 = arith.mulf %47, %47 : vector<256x128xf32>
    %cst_37 = arith.constant dense<0.000000e+00> : vector<128xf32>
    %49 = vector.multi_reduction <add>, %48, %cst_37 [0] : vector<256x128xf32> to vector<128xf32>
    %50 = vector.shape_cast %49 : vector<128xf32> to vector<1x128xf32>
    %51 = tpu.concatenate %45, %50 in 0 : vector<1x128xf32>, vector<1x128xf32> -> vector<2x128xf32>
    %c0_38 = arith.constant 0 : index
    %c0_39 = arith.constant 0 : index
    %c0_40 = arith.constant 0 : index
    %52 = vector.load %arg5[%c0_38, %c0_39, %c0_40] : memref<1x2x128xf32, #tpu.memory_space<vmem>>, vector<1x2x128xf32>
    %53 = vector.shape_cast %52 : vector<1x2x128xf32> to vector<2x128xf32>
    %54 = vector.shape_cast %51 : vector<2x128xf32> to vector<1x2x128xf32>
    tpu.vector_store %arg5[%c0_38, %c0_39, %c0_40], %54 {strides = array<i32>} : memref<1x2x128xf32, #tpu.memory_space<vmem>>, vector<1x2x128xf32>,
    return
  }
  func.func @transform_0(%arg0: i32, %arg1: i32) -> (i32, i32, i32, i32) {
    %c0_i32 = arith.constant 0 : i32
    %c0_i32_0 = arith.constant 0 : i32
    %c0_i32_1 = arith.constant 0 : i32
    %c0_i32_2 = arith.constant 0 : i32
    return %arg1, %c0_i32, %c0_i32_0, %c0_i32_1 : i32, i32, i32, i32
  }
  func.func @transform_1(%arg0: i32, %arg1: i32) -> (i32, i32, i32) {
    %c0_i32 = arith.constant 0 : i32
    %c0_i32_0 = arith.constant 0 : i32
    %c0_i32_1 = arith.constant 0 : i32
    return %c0_i32, %c0_i32_0, %arg0 : i32, i32, i32
  }
  func.func @transform_2(%arg0: i32, %arg1: i32) -> (i32, i32, i32) {
    %c0_i32 = arith.constant 0 : i32
    %c0_i32_0 = arith.constant 0 : i32
    return %arg1, %c0_i32, %arg0 : i32, i32, i32
  }
  func.func @transform_3(%arg0: i32, %arg1: i32) -> (i32, i32, i32) {
    %c0_i32 = arith.constant 0 : i32
    %c0_i32_0 = arith.constant 0 : i32
    return %arg1, %c0_i32, %arg0 : i32, i32, i32
  }
}

</mosaic_0001>

<llo_original>
// kernel: tpu_custom_call.1
$region0: #{tpu_custom_call.1}
  #allocation0 [shape = 'u32[]', space=smem, size = 0x4, offset = 0x4, fixed_abs, tag = 'smem constant byte address 0x4 - core index']
  #allocation1 [shape = 'u32[144,128]{1,0:T(1,128)}', space=vmem, size = 0x12000, scoped, tag = 'internal scratch']
  #allocation2 [shape = 'f32[256,128]{1,0:T(8,128)}', space=vmem, size = 0x20000, scoped, tag = 'scratch operand']
  %s0 = inlined_call_operand.hbm [shape: bf16[2,18,18,128], index: 0, kind: input, shape index: {}]
  %s1 = inlined_call_operand.hbm [shape: bf16[3,384,128], index: 1, kind: input, shape index: {}]
  %s2 = inlined_call_operand.hbm [shape: bf16[2,256,128], index: 2, kind: output, shape index: {0}]
  %s3 = inlined_call_operand.hbm [shape: f32[2,2,128], index: 3, kind: output, shape index: {1}]
  %4 = xla_tuple %s2, %s3
  %s5 = sld [smem:[#allocation0]]
  $region57: #{tpu_custom_call.1} parent=0
    _
  %s7 = ssub.s32 1, %s5
  %s8 = scalar_select 0, %s7, %s5
  $region1: #{tpu_custom_call.1} parent=0
    #allocation3 [shape = 'u8[221184]{0}', space=vmem, size = 0x36000, scoped, tag = 'input window, operand 0']
    #allocation4 [shape = 's32[2]{0}', space=sflag, size = 0x8, scoped, tag = 'scoped memory for tpu_custom_call.1']
    #allocation5 [shape = 's32[2]{0}', space=sflag, size = 0x8, scoped, tag = 'scoped memory for tpu_custom_call.1']
    #allocation6 [shape = 'u8[294912]{0}', space=vmem, size = 0x48000, scoped, tag = 'input window, operand 1, single buffered']
    #allocation7 [shape = 's32[1]{0}', space=sflag, size = 0x4, scoped, tag = 'scoped memory for tpu_custom_call.1']
    #allocation8 [shape = 'u8[131072]{0}', space=vmem, size = 0x20000, scoped, tag = 'output window, operand 0']
    #allocation9 [shape = 'u8[2048]{0}', space=vmem, size = 0x800, scoped, tag = 'output window, operand 1']
    #allocation10 [shape = 's32[2]{0}', space=sflag, size = 0x8, scoped, tag = 'scoped memory for tpu_custom_call.1']
    %9 = vsyncpa [#allocation4], 0
    %s10 = scalar_lea.sflag [#allocation4], 1
    %11 = vsyncpa %s10, 0
    %12 = vsyncpa [#allocation7], 0
    %13 = vsyncpa [#allocation5], 0
    %s14 = scalar_lea.sflag [#allocation5], 1
    %15 = vsyncpa %s14, 0
    %16 = vsyncpa [#allocation10], 0
    %s17 = scalar_lea.sflag [#allocation10], 1
    %18 = vsyncpa %s17, 0
    loop: start=0, step=1, limit=4
    $region2: #{tpu_custom_call.1} parent=1 // loop_pre_header
      _
    $region3: #{tpu_custom_call.1} parent=1 // loop_header
      %s20 = sphi 0, %s24
      %p21 = scmp.ge.s32.totalorder %s20, 4
      %s27 = sphi 0, %s39
      %s28 = sphi 0, %s35
      %s29 = sphi 0, %s27
      %s30 = sphi 0, %s28
      %s31 = sphi 0, %s29
      %s32 = sphi 0, %s30
      %s42 = sphi 0, %s44
      %s45 = sphi 0, %s42
      %s46 = sphi 0, %s45
      %s62 = sphi 0, %s46
      %s68 = sphi 0, %s70
      %s71 = sphi 0, %s68
      %s72 = sphi 0, %s71
      %s88 = sphi 0, %s72
      %s96 = sphi 0, %s98
      %s99 = sphi 0, %s96
      %s100 = sphi 0, %s99
      %s116 = sphi 0, %s100
      %s124 = sphi 0, %s126
      %s127 = sphi 0, %s124
      %s128 = sphi 0, %s127
      %s144 = sphi 0, %s128
    $region4: #{tpu_custom_call.1} parent=1 // loop_header_branch
      %23 = sbr.rel (%p21) target = $region8
    $region5: #{tpu_custom_call.1} parent=1 // loop_body
      %s25 = ssub.s32 %s20, 1
      %s26 = ssub.s32 %s20, 2
      %s33 = sadd.s32 1, %s28
      %p34 = scmp.ge.s32.totalorder %s33, 2
      %s35 = scalar_select %p34, 0, %s33
      %s36 = sadd.s32 1, %s27
      %s37 = scalar_select %p34, %s36, %s27
      %p38 = scmp.ge.s32.totalorder %s37, 1
      %s39 = scalar_select %p38, 0, %s37
      %s40 = ssub.s32 %s28, %s35
      %p41 = scmp.eq.s32.totalorder %s40, 0
      %s43 = sadd.s32 %s42, 1
      %s44 = scalar_select %p41, %s42, %s43
      %p47 = pneg %p41
      %p48 = scmp.eq.s32.totalorder %s20, 1
      %p49 = por %p47, %p48
      %p50 = scmp.ne.s32.totalorder %s42, %s45
      %p51 = scmp.eq.s32.totalorder %s20, 0
      %p52 = por %p50, %p51
      %p53 = scmp.ne.s32.totalorder %s42, %s45
      %p54 = scmp.eq.s32.totalorder %s25, 1
      %p55 = por %p53, %p54
      %p56 = scmp.ne.s32.totalorder %s45, %s46
      %p57 = scmp.eq.s32.totalorder %s25, 0
      %p58 = por %p56, %p57
      %p59 = scmp.ne.s32.totalorder %s45, %s46
      %p60 = scmp.eq.s32.totalorder %s26, 1
      %p61 = por %p59, %p60
      %p63 = scmp.ne.s32.totalorder %s46, %s62
      %p64 = scmp.eq.s32.totalorder %s26, 0
      %p65 = por %p63, %p64
      %s66 = ssub.s32 %s27, %s39
      %p67 = scmp.eq.s32.totalorder %s66, 0
      %s69 = sadd.s32 %s68, 1
      %s70 = scalar_select %p67, %s68, %s69
      %p73 = pneg %p67
      %p74 = scmp.eq.s32.totalorder %s20, 1
      %p75 = por %p73, %p74
      %p76 = scmp.ne.s32.totalorder %s68, %s71
      %p77 = scmp.eq.s32.totalorder %s20, 0
      %p78 = por %p76, %p77
      %p79 = scmp.ne.s32.totalorder %s68, %s71
      %p80 = scmp.eq.s32.totalorder %s25, 1
      %p81 = por %p79, %p80
      %p82 = scmp.ne.s32.totalorder %s71, %s72
      %p83 = scmp.eq.s32.totalorder %s25, 0
      %p84 = por %p82, %p83
      %p85 = scmp.ne.s32.totalorder %s71, %s72
      %p86 = scmp.eq.s32.totalorder %s26, 1
      %p87 = por %p85, %p86
      %p89 = scmp.ne.s32.totalorder %s72, %s88
      %p90 = scmp.eq.s32.totalorder %s26, 0
      %p91 = por %p89, %p90
      %s92 = ssub.s32 %s28, %s35
      %s93 = ssub.s32 %s27, %s39
      %s94 = sor.u32 %s92, %s93
      %p95 = scmp.eq.s32.totalorder %s94, 0
      %s97 = sadd.s32 %s96, 1
      %s98 = scalar_select %p95, %s96, %s97
      %p101 = pneg %p95
      %p102 = scmp.eq.s32.totalorder %s20, 1
      %p103 = por %p101, %p102
      %p104 = scmp.ne.s32.totalorder %s96, %s99
      %p105 = scmp.eq.s32.totalorder %s20, 0
      %p106 = por %p104, %p105
      %p107 = scmp.ne.s32.totalorder %s96, %s99
      %p108 = scmp.eq.s32.totalorder %s25, 1
      %p109 = por %p107, %p108
      %p110 = scmp.ne.s32.totalorder %s99, %s100
      %p111 = scmp.eq.s32.totalorder %s25, 0
      %p112 = por %p110, %p111
      %p113 = scmp.ne.s32.totalorder %s99, %s100
      %p114 = scmp.eq.s32.totalorder %s26, 1
      %p115 = por %p113, %p114
      %p117 = scmp.ne.s32.totalorder %s100, %s116
      %p118 = scmp.eq.s32.totalorder %s26, 0
      %p119 = por %p117, %p118
      %s120 = ssub.s32 %s28, %s35
      %s121 = ssub.s32 %s27, %s39
      %s122 = sor.u32 %s120, %s121
      %p123 = scmp.eq.s32.totalorder %s122, 0
      %s125 = sadd.s32 %s124, 1
      %s126 = scalar_select %p123, %s124, %s125
      %p129 = pneg %p123
      %p130 = scmp.eq.s32.totalorder %s20, 1
      %p131 = por %p129, %p130
      %p132 = scmp.ne.s32.totalorder %s124, %s127
      %p133 = scmp.eq.s32.totalorder %s20, 0
      %p134 = por %p132, %p133
      %p135 = scmp.ne.s32.totalorder %s124, %s127
      %p136 = scmp.eq.s32.totalorder %s25, 1
      %p137 = por %p135, %p136
      %p138 = scmp.ne.s32.totalorder %s127, %s128
      %p139 = scmp.eq.s32.totalorder %s25, 0
      %p140 = por %p138, %p139
      %p141 = scmp.ne.s32.totalorder %s127, %s128
      %p142 = scmp.eq.s32.totalorder %s26, 1
      %p143 = por %p141, %p142
      %p145 = scmp.ne.s32.totalorder %s128, %s144
      %p146 = scmp.eq.s32.totalorder %s26, 0
      %p147 = por %p145, %p146
      %p148 = scmp.le.s32.totalorder 1, %s20
      %p149 = scmp.lt.s32.totalorder %s20, 3
      %p150 = pnand %p148, %p149
      %p151 = pneg %p150
      // Predicated region
      $region9: #{tpu_custom_call.1} parent=5 // pred_check
        _
      $region10: #{tpu_custom_call.1} parent=5 // pred_check_branch
        %153 = sbr.rel (%p150) target = $region12
      $region11: #{tpu_custom_call.1} parent=5 // pred_region
        %s154 = ssub.s32 %s20, 1
        // Predicated region
        $region13: #{tpu_custom_call.1} parent=11 // pred_check
          %p155 = pneg %p84
        $region14: #{tpu_custom_call.1} parent=11 // pred_check_branch
          %157 = sbr.rel (%p155) target = $region16
        $region15: #{tpu_custom_call.1} parent=11 // pred_region
          %s159 = ssub.s32 9216, 9216
          %160 = vsyncadd [#allocation7], %s159
          %s161 = smul.addr %s29, 64
          %s162 = scalar_lea.hbm %s1, %s161
          %s163 = sshll.u32 [#allocation6], 4
          %s164 = int_to_ptr.vmem [resolvable:$true] %s163
          %169 = dma.hbm_to_vmem [thread:$0]  %s162, 9216, %s164, [#allocation7], 64, 64, 4
        $region16: #{tpu_custom_call.1} parent=11 // pred_fallthru
          _
      $region12: #{tpu_custom_call.1} parent=5 // pred_fallthru
        _
      %p170 = scmp.lt.s32.totalorder %s20, 2
      // Predicated region
      $region17: #{tpu_custom_call.1} parent=5 // pred_check
        %p171 = pneg %p170
      $region18: #{tpu_custom_call.1} parent=5 // pred_check_branch
        %173 = sbr.rel (%p171) target = $region20
      $region19: #{tpu_custom_call.1} parent=5 // pred_region
        // Predicated region
        $region21: #{tpu_custom_call.1} parent=19 // pred_check
          %p174 = pneg %p52
        $region22: #{tpu_custom_call.1} parent=19 // pred_check_branch
          %176 = sbr.rel (%p174) target = $region24
        $region23: #{tpu_custom_call.1} parent=19 // pred_region
          %s177 = sand.u32 %s42, 1
          %s178 = scalar_lea.sflag [#allocation4], %s177
          %s179 = sand.u32 %s42, 1
          %s180 = smul.addr %s179, 216
          %s181 = scalar_lea.vmem [#allocation3], %s180
          %s183 = ssub.s32 3456, 3456
          %184 = vsyncadd %s178, %s183
          %s185 = smul.addr %s28, 54
          %s186 = smul.addr %s185, 64
          %s187 = scalar_lea.hbm %s0, %s186
          %s188 = sshll.u32 %s181, 4
          %s189 = int_to_ptr.vmem [resolvable:$true] %s188
          %194 = dma.hbm_to_vmem [thread:$0]  %s187, 3456, %s189, %s178, 64, 64, 4
        $region24: #{tpu_custom_call.1} parent=19 // pred_fallthru
          _
      $region20: #{tpu_custom_call.1} parent=5 // pred_fallthru
        _
      %p195 = scmp.le.s32.totalorder 1, %s20
      %p196 = scmp.lt.s32.totalorder %s20, 3
      %p197 = pnand %p195, %p196
      %p198 = pneg %p197
      // Predicated region
      $region25: #{tpu_custom_call.1} parent=5 // pred_check
        _
      $region26: #{tpu_custom_call.1} parent=5 // pred_check_branch
        %200 = sbr.rel (%p197) target = $region28
      $region27: #{tpu_custom_call.1} parent=5 // pred_region
        %s201 = ssub.s32 %s20, 1
        %s202 = sand.u32 %s45, 1
        %s203 = scalar_lea.sflag [#allocation4], %s202
        %s204 = sand.u32 %s45, 1
        %s205 = smul.addr %s204, 216
        %s206 = scalar_lea.vmem [#allocation3], %s205
        // Predicated region
        $region29: #{tpu_custom_call.1} parent=27 // pred_check
          %p207 = pneg %p58
        $region30: #{tpu_custom_call.1} parent=27 // pred_check_branch
          %209 = sbr.rel (%p207) target = $region32
        $region31: #{tpu_custom_call.1} parent=27 // pred_region
          %210 = dma.done %s203, 3456
        $region32: #{tpu_custom_call.1} parent=27 // pred_fallthru
          _
        // Predicated region
        $region33: #{tpu_custom_call.1} parent=27 // pred_check
          %p211 = pneg %p84
        $region34: #{tpu_custom_call.1} parent=27 // pred_check_branch
          %213 = sbr.rel (%p211) target = $region36
        $region35: #{tpu_custom_call.1} parent=27 // pred_region
          %214 = dma.done [#allocation7], 9216
        $region36: #{tpu_custom_call.1} parent=27 // pred_fallthru
          _
        %s215 = sand.u32 %s45, 1
        %s216 = scalar_lea.sflag [#allocation4], %s215
        %s217 = sand.u32 %s45, 1
        %s218 = smul.addr %s217, 216
        %s219 = scalar_lea.vmem [#allocation3], %s218
        %p220 = pneg %p58
        %p221 = pneg %p55
        %p222 = pneg %p84
        %p223 = pneg %p81
        %p224 = pneg %p112
        %p225 = pneg %p109
        %s226 = sand.u32 %s99, 1
        %s227 = scalar_lea.sflag [#allocation5], %s226
        %s228 = sand.u32 %s99, 1
        %s229 = smul.addr %s228, 128
        %s230 = scalar_lea.vmem [#allocation8], %s229
        %p231 = pneg %p140
        %p232 = pneg %p137
        %s233 = sand.u32 %s127, 1
        %s234 = scalar_lea.sflag [#allocation10], %s233
        %s235 = sand.u32 %s127, 1
        %s236 = smul.addr %s235, 2
        %s237 = scalar_lea.vmem [#allocation9], %s236
        %v239 = vld [vmem:[%s206] sm:$0xf]
        %v240 = vld [vmem:[%s206 + $0x4] sm:$0xf]
        %v241 = vld [vmem:[%s206 + $0x8] sm:$0x1]
        %v242 = vld [vmem:[%s206 + $0xc] sm:$0xf]
        %v243 = vld [vmem:[%s206 + $0x10] sm:$0xf]
        %v244 = vld [vmem:[%s206 + $0x14] sm:$0x1]
        %v245 = vld [vmem:[%s206 + $0x18] sm:$0xf]
        %v246 = vld [vmem:[%s206 + $0x1c] sm:$0xf]
        %v247 = vld [vmem:[%s206 + $0x20] sm:$0x1]
        %v248 = vld [vmem:[%s206 + $0x24] sm:$0xf]
        %v249 = vld [vmem:[%s206 + $0x28] sm:$0xf]
        %v250 = vld [vmem:[%s206 + $0x2c] sm:$0x1]
        %v251 = vld [vmem:[%s206 + $0x30] sm:$0xf]
        %v252 = vld [vmem:[%s206 + $0x34] sm:$0xf]
        %v253 = vld [vmem:[%s206 + $0x38] sm:$0x1]
        %v254 = vld [vmem:[%s206 + $0x3c] sm:$0xf]
        %v255 = vld [vmem:[%s206 + $0x40] sm:$0xf]
        %v256 = vld [vmem:[%s206 + $0x44] sm:$0x1]
        %v257 = vld [vmem:[%s206 + $0x48] sm:$0xf]
        %v258 = vld [vmem:[%s206 + $0x4c] sm:$0xf]
        %v259 = vld [vmem:[%s206 + $0x50] sm:$0x1]
        %v260 = vld [vmem:[%s206 + $0x54] sm:$0xf]
        %v261 = vld [vmem:[%s206 + $0x58] sm:$0xf]
        %v262 = vld [vmem:[%s206 + $0x5c] sm:$0x1]
        %v263 = vld [vmem:[%s206 + $0x60] sm:$0xf]
        %v264 = vld [vmem:[%s206 + $0x64] sm:$0xf]
        %v265 = vld [vmem:[%s206 + $0x68] sm:$0x1]
        %v266 = vld [vmem:[%s206 + $0x6c] sm:$0xf]
        %v267 = vld [vmem:[%s206 + $0x70] sm:$0xf]
        %v268 = vld [vmem:[%s206 + $0x74] sm:$0x1]
        %v269 = vld [vmem:[%s206 + $0x78] sm:$0xf]
        %v270 = vld [vmem:[%s206 + $0x7c] sm:$0xf]
        %v271 = vld [vmem:[%s206 + $0x80] sm:$0x1]
        %v272 = vld [vmem:[%s206 + $0x84] sm:$0xf]
        %v273 = vld [vmem:[%s206 + $0x88] sm:$0xf]
        %v274 = vld [vmem:[%s206 + $0x8c] sm:$0x1]
        %v275 = vld [vmem:[%s206 + $0x90] sm:$0xf]
        %v276 = vld [vmem:[%s206 + $0x94] sm:$0xf]
        %v277 = vld [vmem:[%s206 + $0x98] sm:$0x1]
        %v278 = vld [vmem:[%s206 + $0x9c] sm:$0xf]
        %v279 = vld [vmem:[%s206 + $0xa0] sm:$0xf]
        %v280 = vld [vmem:[%s206 + $0xa4] sm:$0x1]
        %v281 = vld [vmem:[%s206 + $0xa8] sm:$0xf]
        %v282 = vld [vmem:[%s206 + $0xac] sm:$0xf]
        %v283 = vld [vmem:[%s206 + $0xb0] sm:$0x1]
        %v284 = vld [vmem:[%s206 + $0xb4] sm:$0xf]
        %v285 = vld [vmem:[%s206 + $0xb8] sm:$0xf]
        %v286 = vld [vmem:[%s206 + $0xbc] sm:$0x1]
        %v319 = vunpack.c.l.b16 %v239
        %v320 = vunpack.c.l.b16 %v240
        %v321 = vunpack.c.l.b16 %v242
        %v322 = vunpack.c.l.b16 %v243
        %v323 = vunpack.c.l.b16 %v245
        %v324 = vunpack.c.l.b16 %v246
        %v325 = vunpack.c.l.b16 %v248
        %v326 = vunpack.c.l.b16 %v249
        %v327 = vunpack.c.l.b16 %v251
        %v328 = vunpack.c.l.b16 %v252
        %v329 = vunpack.c.l.b16 %v254
        %v330 = vunpack.c.l.b16 %v255
        %v331 = vunpack.c.l.b16 %v257
        %v332 = vunpack.c.l.b16 %v258
        %v333 = vunpack.c.l.b16 %v260
        %v334 = vunpack.c.l.b16 %v261
        %v335 = vunpack.c.l.b16 %v263
        %v336 = vunpack.c.l.b16 %v264
        %v337 = vunpack.c.l.b16 %v266
        %v338 = vunpack.c.l.b16 %v267
        %v339 = vunpack.c.l.b16 %v269
        %v340 = vunpack.c.l.b16 %v270
        %v341 = vunpack.c.l.b16 %v272
        %v342 = vunpack.c.l.b16 %v273
        %v343 = vunpack.c.l.b16 %v275
        %v344 = vunpack.c.l.b16 %v276
        %v345 = vunpack.c.l.b16 %v278
        %v346 = vunpack.c.l.b16 %v279
        %v347 = vunpack.c.l.b16 %v281
        %v348 = vunpack.c.l.b16 %v282
        %v349 = vunpack.c.l.b16 %v284
        %v350 = vunpack.c.l.b16 %v285
        %v351 = vpack.c.b16 %v320, %v319
        %v352 = vpack.c.b16 %v322, %v321
        %v353 = vpack.c.b16 %v324, %v323
        %v354 = vpack.c.b16 %v326, %v325
        %v355 = vpack.c.b16 %v328, %v327
        %v356 = vpack.c.b16 %v330, %v329
        %v357 = vpack.c.b16 %v332, %v331
        %v358 = vpack.c.b16 %v334, %v333
        %v359 = vpack.c.b16 %v336, %v335
        %v360 = vpack.c.b16 %v338, %v337
        %v361 = vpack.c.b16 %v340, %v339
        %v362 = vpack.c.b16 %v342, %v341
        %v363 = vpack.c.b16 %v344, %v343
        %v364 = vpack.c.b16 %v346, %v345
        %v365 = vpack.c.b16 %v348, %v347
        %v366 = vpack.c.b16 %v350, %v349
        %v399 = vunpack.c.l.b16 %v241
        %v400 = vunpack.c.l.b16 %v244
        %v401 = vunpack.c.l.b16 %v247
        %v402 = vunpack.c.l.b16 %v250
        %v403 = vunpack.c.l.b16 %v253
        %v404 = vunpack.c.l.b16 %v256
        %v405 = vunpack.c.l.b16 %v259
        %v406 = vunpack.c.l.b16 %v262
        %v407 = vunpack.c.l.b16 %v265
        %v408 = vunpack.c.l.b16 %v268
        %v409 = vunpack.c.l.b16 %v271
        %v410 = vunpack.c.l.b16 %v274
        %v411 = vunpack.c.l.b16 %v277
        %v412 = vunpack.c.l.b16 %v280
        %v413 = vunpack.c.l.b16 %v283
        %v414 = vunpack.c.l.b16 %v286
        %v415 = vpack.c.b16 %v399, %v399
        %v416 = vpack.c.b16 %v400, %v400
        %v417 = vpack.c.b16 %v401, %v401
        %v418 = vpack.c.b16 %v402, %v402
        %v419 = vpack.c.b16 %v403, %v403
        %v420 = vpack.c.b16 %v404, %v404
        %v421 = vpack.c.b16 %v405, %v405
        %v422 = vpack.c.b16 %v406, %v406
        %v423 = vpack.c.b16 %v407, %v407
        %v424 = vpack.c.b16 %v408, %v408
        %v425 = vpack.c.b16 %v409, %v409
        %v426 = vpack.c.b16 %v410, %v410
        %v427 = vpack.c.b16 %v411, %v411
        %v428 = vpack.c.b16 %v412, %v412
        %v429 = vpack.c.b16 %v413, %v413
        %v430 = vpack.c.b16 %v414, %v414
        %vm431 = vsmask.f32 7424
        %v433 = vshrl.u32 %v351, 16
        %v435 = vshll.u32 %v351, 16
        %v437 = vrot.slane %v435, 1
        %v438 = vor.u32 %v433, %v437
        %v440 = vshll.u32 %v415, 16
        %v442 = vrot.slane %v440, 1
        %v443 = vsel %vm431, %v438, %v442
        %v445 = vshrl.u32 %v352, 16
        %v447 = vshll.u32 %v352, 16
        %v449 = vrot.slane %v447, 1
        %v450 = vor.u32 %v445, %v449
        %v452 = vshll.u32 %v416, 16
        %v454 = vrot.slane %v452, 1
        %v455 = vsel %vm431, %v450, %v454
        %v457 = vshrl.u32 %v353, 16
        %v459 = vshll.u32 %v353, 16
        %v461 = vrot.slane %v459, 1
        %v462 = vor.u32 %v457, %v461
        %v464 = vshll.u32 %v417, 16
        %v466 = vrot.slane %v464, 1
        %v467 = vsel %vm431, %v462, %v466
        %v469 = vshrl.u32 %v354, 16
        %v471 = vshll.u32 %v354, 16
        %v473 = vrot.slane %v471, 1
        %v474 = vor.u32 %v469, %v473
        %v476 = vshll.u32 %v418, 16
        %v478 = vrot.slane %v476, 1
        %v479 = vsel %vm431, %v474, %v478
        %v481 = vshrl.u32 %v355, 16
        %v483 = vshll.u32 %v355, 16
        %v485 = vrot.slane %v483, 1
        %v486 = vor.u32 %v481, %v485
        %v488 = vshll.u32 %v419, 16
        %v490 = vrot.slane %v488, 1
        %v491 = vsel %vm431, %v486, %v490
        %v493 = vshrl.u32 %v356, 16
        %v495 = vshll.u32 %v356, 16
        %v497 = vrot.slane %v495, 1
        %v498 = vor.u32 %v493, %v497
        %v500 = vshll.u32 %v420, 16
        %v502 = vrot.slane %v500, 1
        %v503 = vsel %vm431, %v498, %v502
        %v505 = vshrl.u32 %v357, 16
        %v507 = vshll.u32 %v357, 16
        %v509 = vrot.slane %v507, 1
        %v510 = vor.u32 %v505, %v509
        %v512 = vshll.u32 %v421, 16
        %v514 = vrot.slane %v512, 1
        %v515 = vsel %vm431, %v510, %v514
        %v517 = vshrl.u32 %v358, 16
        %v519 = vshll.u32 %v358, 16
        %v521 = vrot.slane %v519, 1
        %v522 = vor.u32 %v517, %v521
        %v524 = vshll.u32 %v422, 16
        %v526 = vrot.slane %v524, 1
        %v527 = vsel %vm431, %v522, %v526
        %v529 = vshrl.u32 %v359, 16
        %v531 = vshll.u32 %v359, 16
        %v533 = vrot.slane %v531, 1
        %v534 = vor.u32 %v529, %v533
        %v536 = vshll.u32 %v423, 16
        %v538 = vrot.slane %v536, 1
        %v539 = vsel %vm431, %v534, %v538
        %v541 = vshrl.u32 %v360, 16
        %v543 = vshll.u32 %v360, 16
        %v545 = vrot.slane %v543, 1
        %v546 = vor.u32 %v541, %v545
        %v548 = vshll.u32 %v424, 16
        %v550 = vrot.slane %v548, 1
        %v551 = vsel %vm431, %v546, %v550
        %v553 = vshrl.u32 %v361, 16
        %v555 = vshll.u32 %v361, 16
        %v557 = vrot.slane %v555, 1
        %v558 = vor.u32 %v553, %v557
        %v560 = vshll.u32 %v425, 16
        %v562 = vrot.slane %v560, 1
        %v563 = vsel %vm431, %v558, %v562
        %v565 = vshrl.u32 %v362, 16
        %v567 = vshll.u32 %v362, 16
        %v569 = vrot.slane %v567, 1
        %v570 = vor.u32 %v565, %v569
        %v572 = vshll.u32 %v426, 16
        %v574 = vrot.slane %v572, 1
        %v575 = vsel %vm431, %v570, %v574
        %v577 = vshrl.u32 %v363, 16
        %v579 = vshll.u32 %v363, 16
        %v581 = vrot.slane %v579, 1
        %v582 = vor.u32 %v577, %v581
        %v584 = vshll.u32 %v427, 16
        %v586 = vrot.slane %v584, 1
        %v587 = vsel %vm431, %v582, %v586
        %v589 = vshrl.u32 %v364, 16
        %v591 = vshll.u32 %v364, 16
        %v593 = vrot.slane %v591, 1
        %v594 = vor.u32 %v589, %v593
        %v596 = vshll.u32 %v428, 16
        %v598 = vrot.slane %v596, 1
        %v599 = vsel %vm431, %v594, %v598
        %v601 = vshrl.u32 %v365, 16
        %v603 = vshll.u32 %v365, 16
        %v605 = vrot.slane %v603, 1
        %v606 = vor.u32 %v601, %v605
        %v608 = vshll.u32 %v429, 16
        %v610 = vrot.slane %v608, 1
        %v611 = vsel %vm431, %v606, %v610
        %v613 = vshrl.u32 %v366, 16
        %v615 = vshll.u32 %v366, 16
        %v617 = vrot.slane %v615, 1
        %v618 = vor.u32 %v613, %v617
        %v620 = vshll.u32 %v430, 16
        %v622 = vrot.slane %v620, 1
        %v623 = vsel %vm431, %v618, %v622
        %vm640 = vcmask 1046528
        %v641 = vrot.slane %v351, 1
        %v642 = vrot.slane %v415, 1
        %v643 = vsel %vm640, %v641, %v642
        %v644 = vrot.slane %v352, 1
        %v645 = vrot.slane %v416, 1
        %v646 = vsel %vm640, %v644, %v645
        %v647 = vrot.slane %v353, 1
        %v648 = vrot.slane %v417, 1
        %v649 = vsel %vm640, %v647, %v648
        %v650 = vrot.slane %v354, 1
        %v651 = vrot.slane %v418, 1
        %v652 = vsel %vm640, %v650, %v651
        %v653 = vrot.slane %v355, 1
        %v654 = vrot.slane %v419, 1
        %v655 = vsel %vm640, %v653, %v654
        %v656 = vrot.slane %v356, 1
        %v657 = vrot.slane %v420, 1
        %v658 = vsel %vm640, %v656, %v657
        %v659 = vrot.slane %v357, 1
        %v660 = vrot.slane %v421, 1
        %v661 = vsel %vm640, %v659, %v660
        %v662 = vrot.slane %v358, 1
        %v663 = vrot.slane %v422, 1
        %v664 = vsel %vm640, %v662, %v663
        %v665 = vrot.slane %v359, 1
        %v666 = vrot.slane %v423, 1
        %v667 = vsel %vm640, %v665, %v666
        %v668 = vrot.slane %v360, 1
        %v669 = vrot.slane %v424, 1
        %v670 = vsel %vm640, %v668, %v669
        %v671 = vrot.slane %v361, 1
        %v672 = vrot.slane %v425, 1
        %v673 = vsel %vm640, %v671, %v672
        %v674 = vrot.slane %v362, 1
        %v675 = vrot.slane %v426, 1
        %v676 = vsel %vm640, %v674, %v675
        %v677 = vrot.slane %v363, 1
        %v678 = vrot.slane %v427, 1
        %v679 = vsel %vm640, %v677, %v678
        %v680 = vrot.slane %v364, 1
        %v681 = vrot.slane %v428, 1
        %v682 = vsel %vm640, %v680, %v681
        %v683 = vrot.slane %v365, 1
        %v684 = vrot.slane %v429, 1
        %v685 = vsel %vm640, %v683, %v684
        %v686 = vrot.slane %v366, 1
        %v687 = vrot.slane %v430, 1
        %v688 = vsel %vm640, %v686, %v687
        %v705 = vld [vmem:[#allocation6] sm:$0xf]
        %v706 = vld [vmem:[#allocation6 + $0x4] sm:$0xf]
        %v707 = vld [vmem:[#allocation6 + $0x8] sm:$0xf]
        %v708 = vld [vmem:[#allocation6 + $0xc] sm:$0xf]
        %v709 = vld [vmem:[#allocation6 + $0x10] sm:$0xf]
        %v710 = vld [vmem:[#allocation6 + $0x14] sm:$0xf]
        %v711 = vld [vmem:[#allocation6 + $0x18] sm:$0xf]
        %v712 = vld [vmem:[#allocation6 + $0x1c] sm:$0xf]
        %v713 = vld [vmem:[#allocation6 + $0x20] sm:$0xf]
        %v714 = vld [vmem:[#allocation6 + $0x24] sm:$0xf]
        %v715 = vld [vmem:[#allocation6 + $0x28] sm:$0xf]
        %v716 = vld [vmem:[#allocation6 + $0x2c] sm:$0xf]
        %v717 = vld [vmem:[#allocation6 + $0x30] sm:$0xf]
        %v718 = vld [vmem:[#allocation6 + $0x34] sm:$0xf]
        %v719 = vld [vmem:[#allocation6 + $0x38] sm:$0xf]
        %v720 = vld [vmem:[#allocation6 + $0x3c] sm:$0xf]
        %v721 = vld [vmem:[#allocation6 + $0x40] sm:$0xf]
        %v722 = vld [vmem:[#allocation6 + $0x44] sm:$0xf]
        %v723 = vld [vmem:[#allocation6 + $0x48] sm:$0xf]
        %v724 = vld [vmem:[#allocation6 + $0x4c] sm:$0xf]
        %v725 = vld [vmem:[#allocation6 + $0x50] sm:$0xf]
        %v726 = vld [vmem:[#allocation6 + $0x54] sm:$0xf]
        %v727 = vld [vmem:[#allocation6 + $0x58] sm:$0xf]
        %v728 = vld [vmem:[#allocation6 + $0x5c] sm:$0xf]
        %v729 = vld [vmem:[#allocation6 + $0x60] sm:$0xf]
        %v730 = vld [vmem:[#allocation6 + $0x64] sm:$0xf]
        %v731 = vld [vmem:[#allocation6 + $0x68] sm:$0xf]
        %v732 = vld [vmem:[#allocation6 + $0x6c] sm:$0xf]
        %v733 = vld [vmem:[#allocation6 + $0x70] sm:$0xf]
        %v734 = vld [vmem:[#allocation6 + $0x74] sm:$0xf]
        %v735 = vld [vmem:[#allocation6 + $0x78] sm:$0xf]
        %v736 = vld [vmem:[#allocation6 + $0x7c] sm:$0xf]
        %v737 = vld [vmem:[#allocation6 + $0x80] sm:$0xf]
        %v738 = vld [vmem:[#allocation6 + $0x84] sm:$0xf]
        %v739 = vld [vmem:[#allocation6 + $0x88] sm:$0xf]
        %v740 = vld [vmem:[#allocation6 + $0x8c] sm:$0xf]
        %v741 = vld [vmem:[#allocation6 + $0x90] sm:$0xf]
        %v742 = vld [vmem:[#allocation6 + $0x94] sm:$0xf]
        %v743 = vld [vmem:[#allocation6 + $0x98] sm:$0xf]
        %v744 = vld [vmem:[#allocation6 + $0x9c] sm:$0xf]
        %v745 = vld [vmem:[#allocation6 + $0xa0] sm:$0xf]
        %v746 = vld [vmem:[#allocation6 + $0xa4] sm:$0xf]
        %v747 = vld [vmem:[#allocation6 + $0xa8] sm:$0xf]
        %v748 = vld [vmem:[#allocation6 + $0xac] sm:$0xf]
        %v749 = vld [vmem:[#allocation6 + $0xb0] sm:$0xf]
        %v750 = vld [vmem:[#allocation6 + $0xb4] sm:$0xf]
        %v751 = vld [vmem:[#allocation6 + $0xb8] sm:$0xf]
        %v752 = vld [vmem:[#allocation6 + $0xbc] sm:$0xf]
        %v801 = vunpack.c.l.b16 %v705
        %v802 = vunpack.c.l.b16 %v706
        %v803 = vunpack.c.l.b16 %v707
        %v804 = vunpack.c.l.b16 %v708
        %v805 = vunpack.c.l.b16 %v709
        %v806 = vunpack.c.l.b16 %v710
        %v807 = vunpack.c.l.b16 %v711
        %v808 = vunpack.c.l.b16 %v712
        %v809 = vunpack.c.l.b16 %v713
        %v810 = vunpack.c.l.b16 %v714
        %v811 = vunpack.c.l.b16 %v715
        %v812 = vunpack.c.l.b16 %v716
        %v813 = vunpack.c.l.b16 %v717
        %v814 = vunpack.c.l.b16 %v718
        %v815 = vunpack.c.l.b16 %v719
        %v816 = vunpack.c.l.b16 %v720
        %v817 = vunpack.c.l.b16 %v721
        %v818 = vunpack.c.l.b16 %v722
        %v819 = vunpack.c.l.b16 %v723
        %v820 = vunpack.c.l.b16 %v724
        %v821 = vunpack.c.l.b16 %v725
        %v822 = vunpack.c.l.b16 %v726
        %v823 = vunpack.c.l.b16 %v727
        %v824 = vunpack.c.l.b16 %v728
        %v825 = vunpack.c.l.b16 %v729
        %v826 = vunpack.c.l.b16 %v730
        %v827 = vunpack.c.l.b16 %v731
        %v828 = vunpack.c.l.b16 %v732
        %v829 = vunpack.c.l.b16 %v733
        %v830 = vunpack.c.l.b16 %v734
        %v831 = vunpack.c.l.b16 %v735
        %v832 = vunpack.c.l.b16 %v736
        %v833 = vunpack.c.l.b16 %v737
        %v834 = vunpack.c.l.b16 %v738
        %v835 = vunpack.c.l.b16 %v739
        %v836 = vunpack.c.l.b16 %v740
        %v837 = vunpack.c.l.b16 %v741
        %v838 = vunpack.c.l.b16 %v742
        %v839 = vunpack.c.l.b16 %v743
        %v840 = vunpack.c.l.b16 %v744
        %v841 = vunpack.c.l.b16 %v745
        %v842 = vunpack.c.l.b16 %v746
        %v843 = vunpack.c.l.b16 %v747
        %v844 = vunpack.c.l.b16 %v748
        %v845 = vunpack.c.l.b16 %v749
        %v846 = vunpack.c.l.b16 %v750
        %v847 = vunpack.c.l.b16 %v751
        %v848 = vunpack.c.l.b16 %v752
        %v849 = vpack.c.b16 %v802, %v801
        %v850 = vpack.c.b16 %v804, %v803
        %v851 = vpack.c.b16 %v806, %v805
        %v852 = vpack.c.b16 %v808, %v807
        %v853 = vpack.c.b16 %v810, %v809
        %v854 = vpack.c.b16 %v812, %v811
        %v855 = vpack.c.b16 %v814, %v813
        %v856 = vpack.c.b16 %v816, %v815
        %v857 = vpack.c.b16 %v818, %v817
        %v858 = vpack.c.b16 %v820, %v819
        %v859 = vpack.c.b16 %v822, %v821
        %v860 = vpack.c.b16 %v824, %v823
        %v861 = vpack.c.b16 %v826, %v825
        %v862 = vpack.c.b16 %v828, %v827
        %v863 = vpack.c.b16 %v830, %v829
        %v864 = vpack.c.b16 %v832, %v831
        %v865 = vpack.c.b16 %v834, %v833
        %v866 = vpack.c.b16 %v836, %v835
        %v867 = vpack.c.b16 %v838, %v837
        %v868 = vpack.c.b16 %v840, %v839
        %v869 = vpack.c.b16 %v842, %v841
        %v870 = vpack.c.b16 %v844, %v843
        %v871 = vpack.c.b16 %v846, %v845
        %v872 = vpack.c.b16 %v848, %v847
        %897 = vmatprep.subr.bf16.mxu0 0
        %898 = vmatpush1.bf16.msra.mxu0 %v849
        %899 = vmatprep.subr.bf16.mxu0 0
        %900 = vmatpush1.bf16.msra.mxu0 %v850
        %901 = vmatprep.subr.bf16.mxu0 0
        %902 = vmatpush1.bf16.msra.mxu0 %v851
        %903 = vmatprep.subr.bf16.mxu0 0
        %904 = vmatpush1.bf16.msra.mxu0 %v852
        %905 = vmatprep.subr.bf16.mxu0 0
        %906 = vmatpush1.bf16.msra.mxu0 %v853
        %907 = vmatprep.subr.bf16.mxu0 0
        %908 = vmatpush1.bf16.msra.mxu0 %v854
        %909 = vmatprep.subr.bf16.mxu0 0
        %910 = vmatpush1.bf16.msra.mxu0 %v855
        %911 = vmatprep.subr.bf16.mxu0 0
        %912 = vmatpush1.bf16.msra.mxu0 %v856
        %913 = vmatprep.subr.bf16.mxu0 0
        %914 = vmatpush1.bf16.msra.mxu0 %v857
        %915 = vmatprep.subr.bf16.mxu0 0
        %916 = vmatpush1.bf16.msra.mxu0 %v858
        %917 = vmatprep.subr.bf16.mxu0 0
        %918 = vmatpush1.bf16.msra.mxu0 %v859
        %919 = vmatprep.subr.bf16.mxu0 0
        %920 = vmatpush1.bf16.msra.mxu0 %v860
        %921 = vmatprep.subr.bf16.mxu0 0
        %922 = vmatpush1.bf16.msra.mxu0 %v861
        %923 = vmatprep.subr.bf16.mxu0 0
        %924 = vmatpush1.bf16.msra.mxu0 %v862
        %925 = vmatprep.subr.bf16.mxu0 0
        %926 = vmatpush1.bf16.msra.mxu0 %v863
        %927 = vmatprep.subr.bf16.mxu0 0
        %928 = vmatpush1.bf16.msra.mxu0 %v864
        %929 = vmatprep.mubr.bf16.mxu0 %v443
        %930 = vmatmul.mubr.bf16.gmra.mrb[0].mxu0 %v351
        %v931 = vpop.f32.mrb[0].mxu0
        %v932 = vadd.f32 0.0, %v931
        %v933 = vpop.f32.mrb[0].mxu0
        %v934 = vpop.f32.mrb[0].mxu0
        %v935 = vadd.f32 0.0, %v934
        %v936 = vpop.f32.mrb[0].mxu0
        %937 = vmatprep.mubr.bf16.mxu0 %v455
        %938 = vmatmul.mubr.bf16.gmra.mrb[0].mxu0 %v352
        %v939 = vpop.f32.mrb[0].mxu0
        %v940 = vadd.f32 0.0, %v939
        %v941 = vpop.f32.mrb[0].mxu0
        %v942 = vpop.f32.mrb[0].mxu0
        %v943 = vadd.f32 0.0, %v942
        %v944 = vpop.f32.mrb[0].mxu0
        %945 = vmatprep.mubr.bf16.mxu0 %v467
        %946 = vmatmul.mubr.bf16.gmra.mrb[0].mxu0 %v353
        %v947 = vpop.f32.mrb[0].mxu0
        %v948 = vadd.f32 0.0, %v947
        %v949 = vpop.f32.mrb[0].mxu0
        %v950 = vpop.f32.mrb[0].mxu0
        %v951 = vadd.f32 0.0, %v950
        %v952 = vpop.f32.mrb[0].mxu0
        %953 = vmatprep.mubr.bf16.mxu0 %v479
        %954 = vmatmul.mubr.bf16.gmra.mrb[0].mxu0 %v354
        %v955 = vpop.f32.mrb[0].mxu0
        %v956 = vadd.f32 0.0, %v955
        %v957 = vpop.f32.mrb[0].mxu0
        %v958 = vpop.f32.mrb[0].mxu0
        %v959 = vadd.f32 0.0, %v958
        %v960 = vpop.f32.mrb[0].mxu0
        %961 = vmatprep.mubr.bf16.mxu0 %v491
        %962 = vmatmul.mubr.bf16.gmra.mrb[0].mxu0 %v355
        %v963 = vpop.f32.mrb[0].mxu0
        %v964 = vadd.f32 0.0, %v963
        %v965 = vpop.f32.mrb[0].mxu0
        %v966 = vpop.f32.mrb[0].mxu0
        %v967 = vadd.f32 0.0, %v966
        %v968 = vpop.f32.mrb[0].mxu0
        %969 = vmatprep.mubr.bf16.mxu0 %v503
        %970 = vmatmul.mubr.bf16.gmra.mrb[0].mxu0 %v356
        %v971 = vpop.f32.mrb[0].mxu0
        %v972 = vadd.f32 0.0, %v971
        %v973 = vpop.f32.mrb[0].mxu0
        %v974 = vpop.f32.mrb[0].mxu0
        %v975 = vadd.f32 0.0, %v974
        %v976 = vpop.f32.mrb[0].mxu0
        %977 = vmatprep.mubr.bf16.mxu0 %v515
        %978 = vmatmul.mubr.bf16.gmra.mrb[0].mxu0 %v357
        %v979 = vpop.f32.mrb[0].mxu0
        %v980 = vadd.f32 0.0, %v979
        %v981 = vpop.f32.mrb[0].mxu0
        %v982 = vpop.f32.mrb[0].mxu0
        %v983 = vadd.f32 0.0, %v982
        %v984 = vpop.f32.mrb[0].mxu0
        %985 = vmatprep.mubr.bf16.mxu0 %v527
        %986 = vmatmul.mubr.bf16.gmra.mrb[0].mxu0 %v358
        %v987 = vpop.f32.mrb[0].mxu0
        %v988 = vadd.f32 0.0, %v987
        %v989 = vpop.f32.mrb[0].mxu0
        %v990 = vpop.f32.mrb[0].mxu0
        %v991 = vadd.f32 0.0, %v990
        %v992 = vpop.f32.mrb[0].mxu0
        %993 = vmatprep.mubr.bf16.mxu0 %v539
        %994 = vmatmul.mubr.bf16.gmra.mrb[0].mxu0 %v359
        %v995 = vpop.f32.mrb[0].mxu0
        %v996 = vadd.f32 0.0, %v995
        %v997 = vpop.f32.mrb[0].mxu0
        %v998 = vpop.f32.mrb[0].mxu0
        %v999 = vadd.f32 0.0, %v998
        %v1000 = vpop.f32.mrb[0].mxu0
        %1001 = vmatprep.mubr.bf16.mxu0 %v551
        %1002 = vmatmul.mubr.bf16.gmra.mrb[0].mxu0 %v360
        %v1003 = vpop.f32.mrb[0].mxu0
        %v1004 = vadd.f32 0.0, %v1003
        %v1005 = vpop.f32.mrb[0].mxu0
        %v1006 = vpop.f32.mrb[0].mxu0
        %v1007 = vadd.f32 0.0, %v1006
        %v1008 = vpop.f32.mrb[0].mxu0
        %1009 = vmatprep.mubr.bf16.mxu0 %v563
        %1010 = vmatmul.mubr.bf16.gmra.mrb[0].mxu0 %v361
        %v1011 = vpop.f32.mrb[0].mxu0
        %v1012 = vadd.f32 0.0, %v1011
        %v1013 = vpop.f32.mrb[0].mxu0
        %v1014 = vpop.f32.mrb[0].mxu0
        %v1015 = vadd.f32 0.0, %v1014
        %v1016 = vpop.f32.mrb[0].mxu0
        %1017 = vmatprep.mubr.bf16.mxu0 %v575
        %1018 = vmatmul.mubr.bf16.gmra.mrb[0].mxu0 %v362
        %v1019 = vpop.f32.mrb[0].mxu0
        %v1020 = vadd.f32 0.0, %v1019
        %v1021 = vpop.f32.mrb[0].mxu0
        %v1022 = vpop.f32.mrb[0].mxu0
        %v1023 = vadd.f32 0.0, %v1022
        %v1024 = vpop.f32.mrb[0].mxu0
        %1025 = vmatprep.mubr.bf16.mxu0 %v587
        %1026 = vmatmul.mubr.bf16.gmra.mrb[0].mxu0 %v363
        %v1027 = vpop.f32.mrb[0].mxu0
        %v1028 = vadd.f32 0.0, %v1027
        %v1029 = vpop.f32.mrb[0].mxu0
        %v1030 = vpop.f32.mrb[0].mxu0
        %v1031 = vadd.f32 0.0, %v1030
        %v1032 = vpop.f32.mrb[0].mxu0
        %1033 = vmatprep.mubr.bf16.mxu0 %v599
        %1034 = vmatmul.mubr.bf16.gmra.mrb[0].mxu0 %v364
        %v1035 = vpop.f32.mrb[0].mxu0
        %v1036 = vadd.f32 0.0, %v1035
        %v1037 = vpop.f32.mrb[0].mxu0
        %v1038 = vpop.f32.mrb[0].mxu0
        %v1039 = vadd.f32 0.0, %v1038
        %v1040 = vpop.f32.mrb[0].mxu0
        %1041 = vmatprep.mubr.bf16.mxu0 %v611
        %1042 = vmatmul.mubr.bf16.gmra.mrb[0].mxu0 %v365
        %v1043 = vpop.f32.mrb[0].mxu0
        %v1044 = vadd.f32 0.0, %v1043
        %v1045 = vpop.f32.mrb[0].mxu0
        %v1046 = vpop.f32.mrb[0].mxu0
        %v1047 = vadd.f32 0.0, %v1046
        %v1048 = vpop.f32.mrb[0].mxu0
        %1049 = vmatprep.mubr.bf16.mxu0 %v623
        %1050 = vmatmul.mubr.bf16.gmra.mrb[0].mxu0 %v366
        %v1051 = vpop.f32.mrb[0].mxu0
        %v1052 = vadd.f32 0.0, %v1051
        %v1053 = vpop.f32.mrb[0].mxu0
        %v1054 = vpop.f32.mrb[0].mxu0
        %v1055 = vadd.f32 0.0, %v1054
        %v1056 = vpop.f32.mrb[0].mxu0
        %1057 = vdwg.mxu0
        %1058 = vmatprep.subr.bf16.mxu0 0
        %1059 = vmatpush1.bf16.msra.mxu0 %v865
        %1060 = vmatprep.subr.bf16.mxu0 0
        %1061 = vmatpush1.bf16.msra.mxu0 %v866
        %1062 = vmatprep.subr.bf16.mxu0 0
        %1063 = vmatpush1.bf16.msra.mxu0 %v867
        %1064 = vmatprep.subr.bf16.mxu0 0
        %1065 = vmatpush1.bf16.msra.mxu0 %v868
        %1066 = vmatprep.subr.bf16.mxu0 0
        %1067 = vmatpush1.bf16.msra.mxu0 %v869
        %1068 = vmatprep.subr.bf16.mxu0 0
        %1069 = vmatpush1.bf16.msra.mxu0 %v870
        %1070 = vmatprep.subr.bf16.mxu0 0
        %1071 = vmatpush1.bf16.msra.mxu0 %v871
        %1072 = vmatprep.subr.bf16.mxu0 0
        %1073 = vmatpush1.bf16.msra.mxu0 %v872
        %1074 = vmatprep.subr.bf16.mxu0 0
        %1075 = vmatpush1.bf16.msra.mxu0 0
        %1076 = vmatprep.subr.bf16.mxu0 0
        %1077 = vmatpush1.bf16.msra.mxu0 0
        %1078 = vmatprep.subr.bf16.mxu0 0
        %1079 = vmatpush1.bf16.msra.mxu0 0
        %1080 = vmatprep.subr.bf16.mxu0 0
        %1081 = vmatpush1.bf16.msra.mxu0 0
        %1082 = vmatprep.subr.bf16.mxu0 0
        %1083 = vmatpush1.bf16.msra.mxu0 0
        %1084 = vmatprep.subr.bf16.mxu0 0
        %1085 = vmatpush1.bf16.msra.mxu0 0
        %1086 = vmatprep.subr.bf16.mxu0 0
        %1087 = vmatpush1.bf16.msra.mxu0 0
        %1088 = vmatprep.subr.bf16.mxu0 0
        %1089 = vmatpush1.bf16.msra.mxu0 0
        %1090 = vmatprep.mubr.bf16.mxu0 0
        %1091 = vmatmul.mubr.bf16.gmra.mrb[0].mxu0 %v643
        %v1092 = vpop.f32.mrb[0].mxu0
        %v1093 = vadd.f32 %v932, %v1092
        %v1094 = vpop.f32.mrb[0].mxu0
        %v1095 = vpop.f32.mrb[0].mxu0
        %v1096 = vadd.f32 %v935, %v1095
        %v1097 = vpop.f32.mrb[0].mxu0
        %1098 = vmatprep.mubr.bf16.mxu0 0
        %1099 = vmatmul.mubr.bf16.gmra.mrb[0].mxu0 %v646
        %v1100 = vpop.f32.mrb[0].mxu0
        %v1101 = vadd.f32 %v940, %v1100
        %v1102 = vpop.f32.mrb[0].mxu0
        %v1103 = vpop.f32.mrb[0].mxu0
        %v1104 = vadd.f32 %v943, %v1103
        %v1105 = vpop.f32.mrb[0].mxu0
        %1106 = vmatprep.mubr.bf16.mxu0 0
        %1107 = vmatmul.mubr.bf16.gmra.mrb[0].mxu0 %v649
        %v1108 = vpop.f32.mrb[0].mxu0
        %v1109 = vadd.f32 %v948, %v1108
        %v1110 = vpop.f32.mrb[0].mxu0
        %v1111 = vpop.f32.mrb[0].mxu0
        %v1112 = vadd.f32 %v951, %v1111
        %v1113 = vpop.f32.mrb[0].mxu0
        %1114 = vmatprep.mubr.bf16.mxu0 0
        %1115 = vmatmul.mubr.bf16.gmra.mrb[0].mxu0 %v652
        %v1116 = vpop.f32.mrb[0].mxu0
        %v1117 = vadd.f32 %v956, %v1116
        %v1118 = vpop.f32.mrb[0].mxu0
        %v1119 = vpop.f32.mrb[0].mxu0
        %v1120 = vadd.f32 %v959, %v1119
        %v1121 = vpop.f32.mrb[0].mxu0
        %1122 = vmatprep.mubr.bf16.mxu0 0
        %1123 = vmatmul.mubr.bf16.gmra.mrb[0].mxu0 %v655
        %v1124 = vpop.f32.mrb[0].mxu0
        %v1125 = vadd.f32 %v964, %v1124
        %v1126 = vpop.f32.mrb[0].mxu0
        %v1127 = vpop.f32.mrb[0].mxu0
        %v1128 = vadd.f32 %v967, %v1127
        %v1129 = vpop.f32.mrb[0].mxu0
        %1130 = vmatprep.mubr.bf16.mxu0 0
        %1131 = vmatmul.mubr.bf16.gmra.mrb[0].mxu0 %v658
        %v1132 = vpop.f32.mrb[0].mxu0
        %v1133 = vadd.f32 %v972, %v1132
        %v1134 = vpop.f32.mrb[0].mxu0
        %v1135 = vpop.f32.mrb[0].mxu0
        %v1136 = vadd.f32 %v975, %v1135
        %v1137 = vpop.f32.mrb[0].mxu0
        %1138 = vmatprep.mubr.bf16.mxu0 0
        %1139 = vmatmul.mubr.bf16.gmra.mrb[0].mxu0 %v661
        %v1140 = vpop.f32.mrb[0].mxu0
        %v1141 = vadd.f32 %v980, %v1140
        %v1142 = vpop.f32.mrb[0].mxu0
        %v1143 = vpop.f32.mrb[0].mxu0
        %v1144 = vadd.f32 %v983, %v1143
        %v1145 = vpop.f32.mrb[0].mxu0
        %1146 = vmatprep.mubr.bf16.mxu0 0
        %1147 = vmatmul.mubr.bf16.gmra.mrb[0].mxu0 %v664
        %v1148 = vpop.f32.mrb[0].mxu0
        %v1149 = vadd.f32 %v988, %v1148
        %v1150 = vpop.f32.mrb[0].mxu0
        %v1151 = vpop.f32.mrb[0].mxu0
        %v1152 = vadd.f32 %v991, %v1151
        %v1153 = vpop.f32.mrb[0].mxu0
        %1154 = vmatprep.mubr.bf16.mxu0 0
        %1155 = vmatmul.mubr.bf16.gmra.mrb[0].mxu0 %v667
        %v1156 = vpop.f32.mrb[0].mxu0
        %v1157 = vadd.f32 %v996, %v1156
        %v1158 = vpop.f32.mrb[0].mxu0
        %v1159 = vpop.f32.mrb[0].mxu0
        %v1160 = vadd.f32 %v999, %v1159
        %v1161 = vpop.f32.mrb[0].mxu0
        %1162 = vmatprep.mubr.bf16.mxu0 0
        %1163 = vmatmul.mubr.bf16.gmra.mrb[0].mxu0 %v670
        %v1164 = vpop.f32.mrb[0].mxu0
        %v1165 = vadd.f32 %v1004, %v1164
        %v1166 = vpop.f32.mrb[0].mxu0
        %v1167 = vpop.f32.mrb[0].mxu0
        %v1168 = vadd.f32 %v1007, %v1167
        %v1169 = vpop.f32.mrb[0].mxu0
        %1170 = vmatprep.mubr.bf16.mxu0 0
        %1171 = vmatmul.mubr.bf16.gmra.mrb[0].mxu0 %v673
        %v1172 = vpop.f32.mrb[0].mxu0
        %v1173 = vadd.f32 %v1012, %v1172
        %v1174 = vpop.f32.mrb[0].mxu0
        %v1175 = vpop.f32.mrb[0].mxu0
        %v1176 = vadd.f32 %v1015, %v1175
        %v1177 = vpop.f32.mrb[0].mxu0
        %1178 = vmatprep.mubr.bf16.mxu0 0
        %1179 = vmatmul.mubr.bf16.gmra.mrb[0].mxu0 %v676
        %v1180 = vpop.f32.mrb[0].mxu0
        %v1181 = vadd.f32 %v1020, %v1180
        %v1182 = vpop.f32.mrb[0].mxu0
        %v1183 = vpop.f32.mrb[0].mxu0
        %v1184 = vadd.f32 %v1023, %v1183
        %v1185 = vpop.f32.mrb[0].mxu0
        %1186 = vmatprep.mubr.bf16.mxu0 0
        %1187 = vmatmul.mubr.bf16.gmra.mrb[0].mxu0 %v679
        %v1188 = vpop.f32.mrb[0].mxu0
        %v1189 = vadd.f32 %v1028, %v1188
        %v1190 = vpop.f32.mrb[0].mxu0
        %v1191 = vpop.f32.mrb[0].mxu0
        %v1192 = vadd.f32 %v1031, %v1191
        %v1193 = vpop.f32.mrb[0].mxu0
        %1194 = vmatprep.mubr.bf16.mxu0 0
        %1195 = vmatmul.mubr.bf16.gmra.mrb[0].mxu0 %v682
        %v1196 = vpop.f32.mrb[0].mxu0
        %v1197 = vadd.f32 %v1036, %v1196
        %v1198 = vpop.f32.mrb[0].mxu0
        %v1199 = vpop.f32.mrb[0].mxu0
        %v1200 = vadd.f32 %v1039, %v1199
        %v1201 = vpop.f32.mrb[0].mxu0
        %1202 = vmatprep.mubr.bf16.mxu0 0
        %1203 = vmatmul.mubr.bf16.gmra.mrb[0].mxu0 %v685
        %v1204 = vpop.f32.mrb[0].mxu0
        %v1205 = vadd.f32 %v1044, %v1204
        %v1206 = vpop.f32.mrb[0].mxu0
        %v1207 = vpop.f32.mrb[0].mxu0
        %v1208 = vadd.f32 %v1047, %v1207
        %v1209 = vpop.f32.mrb[0].mxu0
        %1210 = vmatprep.mubr.bf16.mxu0 0
        %1211 = vmatmul.mubr.bf16.gmra.mrb[0].mxu0 %v688
        %v1212 = vpop.f32.mrb[0].mxu0
        %v1213 = vadd.f32 %v1052, %v1212
        %v1214 = vpop.f32.mrb[0].mxu0
        %v1215 = vpop.f32.mrb[0].mxu0
        %v1216 = vadd.f32 %v1055, %v1215
        %v1217 = vpop.f32.mrb[0].mxu0
        %1218 = vdwg.mxu0
        %1219 = vst [vmem:[#allocation2] sm:$0xff] %v1093
        %1220 = vst [vmem:[#allocation2 + $0x8] sm:$0xff] %v1096
        %1221 = vst [vmem:[#allocation2 + $0x10] sm:$0xff] %v1101
        %1222 = vst [vmem:[#allocation2 + $0x18] sm:$0xff] %v1104
        %1223 = vst [vmem:[#allocation2 + $0x20] sm:$0xff] %v1109
        %1224 = vst [vmem:[#allocation2 + $0x28] sm:$0xff] %v1112
        %1225 = vst [vmem:[#allocation2 + $0x30] sm:$0xff] %v1117
        %1226 = vst [vmem:[#allocation2 + $0x38] sm:$0xff] %v1120
        %1227 = vst [vmem:[#allocation2 + $0x40] sm:$0xff] %v1125
        %1228 = vst [vmem:[#allocation2 + $0x48] sm:$0xff] %v1128
        %1229 = vst [vmem:[#allocation2 + $0x50] sm:$0xff] %v1133
        %1230 = vst [vmem:[#allocation2 + $0x58] sm:$0xff] %v1136
        %1231 = vst [vmem:[#allocation2 + $0x60] sm:$0xff] %v1141
        %1232 = vst [vmem:[#allocation2 + $0x68] sm:$0xff] %v1144
        %1233 = vst [vmem:[#allocation2 + $0x70] sm:$0xff] %v1149
        %1234 = vst [vmem:[#allocation2 + $0x78] sm:$0xff] %v1152
        %1235 = vst [vmem:[#allocation2 + $0x80] sm:$0xff] %v1157
        %1236 = vst [vmem:[#allocation2 + $0x88] sm:$0xff] %v1160
        %1237 = vst [vmem:[#allocation2 + $0x90] sm:$0xff] %v1165
        %1238 = vst [vmem:[#allocation2 + $0x98] sm:$0xff] %v1168
        %1239 = vst [vmem:[#allocation2 + $0xa0] sm:$0xff] %v1173
        %1240 = vst [vmem:[#allocation2 + $0xa8] sm:$0xff] %v1176
        %1241 = vst [vmem:[#allocation2 + $0xb0] sm:$0xff] %v1181
        %1242 = vst [vmem:[#allocation2 + $0xb8] sm:$0xff] %v1184
        %1243 = vst [vmem:[#allocation2 + $0xc0] sm:$0xff] %v1189
        %1244 = vst [vmem:[#allocation2 + $0xc8] sm:$0xff] %v1192
        %1245 = vst [vmem:[#allocation2 + $0xd0] sm:$0xff] %v1197
        %1246 = vst [vmem:[#allocation2 + $0xd8] sm:$0xff] %v1200
        %1247 = vst [vmem:[#allocation2 + $0xe0] sm:$0xff] %v1205
        %1248 = vst [vmem:[#allocation2 + $0xe8] sm:$0xff] %v1208
        %1249 = vst [vmem:[#allocation2 + $0xf0] sm:$0xff] %v1213
        %1250 = vst [vmem:[#allocation2 + $0xf8] sm:$0xff] %v1216
        %s1251 = scalar_lea.vmem %s206, 12 [#allocation3]
        %v1252 = vld [vmem:[%s1251] sm:$0xf]
        %v1253 = vld [vmem:[%s1251 + $0x4] sm:$0xf]
        %v1254 = vld [vmem:[%s1251 + $0x8] sm:$0x1]
        %v1255 = vld [vmem:[%s1251 + $0xc] sm:$0xf]
        %v1256 = vld [vmem:[%s1251 + $0x10] sm:$0xf]
        %v1257 = vld [vmem:[%s1251 + $0x14] sm:$0x1]
        %v1258 = vld [vmem:[%s1251 + $0x18] sm:$0xf]
        %v1259 = vld [vmem:[%s1251 + $0x1c] sm:$0xf]
        %v1260 = vld [vmem:[%s1251 + $0x20] sm:$0x1]
        %v1261 = vld [vmem:[%s1251 + $0x24] sm:$0xf]
        %v1262 = vld [vmem:[%s1251 + $0x28] sm:$0xf]
        %v1263 = vld [vmem:[%s1251 + $0x2c] sm:$0x1]
        %v1264 = vld [vmem:[%s1251 + $0x30] sm:$0xf]
        %v1265 = vld [vmem:[%s1251 + $0x34] sm:$0xf]
        %v1266 = vld [vmem:[%s1251 + $0x38] sm:$0x1]
        %v1267 = vld [vmem:[%s1251 + $0x3c] sm:$0xf]
        %v1268 = vld [vmem:[%s1251 + $0x40] sm:$0xf]
        %v1269 = vld [vmem:[%s1251 + $0x44] sm:$0x1]
        %v1270 = vld [vmem:[%s1251 + $0x48] sm:$0xf]
        %v1271 = vld [vmem:[%s1251 + $0x4c] sm:$0xf]
        %v1272 = vld [vmem:[%s1251 + $0x50] sm:$0x1]
        %v1273 = vld [vmem:[%s1251 + $0x54] sm:$0xf]
        %v1274 = vld [vmem:[%s1251 + $0x58] sm:$0xf]
        %v1275 = vld [vmem:[%s1251 + $0x5c] sm:$0x1]
        %v1276 = vld [vmem:[%s1251 + $0x60] sm:$0xf]
        %v1277 = vld [vmem:[%s1251 + $0x64] sm:$0xf]
        %v1278 = vld [vmem:[%s1251 + $0x68] sm:$0x1]
        %v1279 = vld [vmem:[%s1251 + $0x6c] sm:$0xf]
        %v1280 = vld [vmem:[%s1251 + $0x70] sm:$0xf]
        %v1281 = vld [vmem:[%s1251 + $0x74] sm:$0x1]
        %v1282 = vld [vmem:[%s1251 + $0x78] sm:$0xf]
        %v1283 = vld [vmem:[%s1251 + $0x7c] sm:$0xf]
        %v1284 = vld [vmem:[%s1251 + $0x80] sm:$0x1]
        %v1285 = vld [vmem:[%s1251 + $0x84] sm:$0xf]
        %v1286 = vld [vmem:[%s1251 + $0x88] sm:$0xf]
        %v1287 = vld [vmem:[%s1251 + $0x8c] sm:$0x1]
        %v1288 = vld [vmem:[%s1251 + $0x90] sm:$0xf]
        %v1289 = vld [vmem:[%s1251 + $0x94] sm:$0xf]
        %v1290 = vld [vmem:[%s1251 + $0x98] sm:$0x1]
        %v1291 = vld [vmem:[%s1251 + $0x9c] sm:$0xf]
        %v1292 = vld [vmem:[%s1251 + $0xa0] sm:$0xf]
        %v1293 = vld [vmem:[%s1251 + $0xa4] sm:$0x1]
        %v1294 = vld [vmem:[%s1251 + $0xa8] sm:$0xf]
        %v1295 = vld [vmem:[%s1251 + $0xac] sm:$0xf]
        %v1296 = vld [vmem:[%s1251 + $0xb0] sm:$0x1]
        %v1297 = vld [vmem:[%s1251 + $0xb4] sm:$0xf]
        %v1298 = vld [vmem:[%s1251 + $0xb8] sm:$0xf]
        %v1299 = vld [vmem:[%s1251 + $0xbc] sm:$0x1]
        %v1332 = vunpack.c.l.b16 %v1252
        %v1333 = vunpack.c.l.b16 %v1253
        %v1334 = vunpack.c.l.b16 %v1255
        %v1335 = vunpack.c.l.b16 %v1256
        %v1336 = vunpack.c.l.b16 %v1258
        %v1337 = vunpack.c.l.b16 %v1259
        %v1338 = vunpack.c.l.b16 %v1261
        %v1339 = vunpack.c.l.b16 %v1262
        %v1340 = vunpack.c.l.b16 %v1264
        %v1341 = vunpack.c.l.b16 %v1265
        %v1342 = vunpack.c.l.b16 %v1267
        %v1343 = vunpack.c.l.b16 %v1268
        %v1344 = vunpack.c.l.b16 %v1270
        %v1345 = vunpack.c.l.b16 %v1271
        %v1346 = vunpack.c.l.b16 %v1273
        %v1347 = vunpack.c.l.b16 %v1274
        %v1348 = vunpack.c.l.b16 %v1276
        %v1349 = vunpack.c.l.b16 %v1277
        %v1350 = vunpack.c.l.b16 %v1279
        %v1351 = vunpack.c.l.b16 %v1280
        %v1352 = vunpack.c.l.b16 %v1282
        %v1353 = vunpack.c.l.b16 %v1283
        %v1354 = vunpack.c.l.b16 %v1285
        %v1355 = vunpack.c.l.b16 %v1286
        %v1356 = vunpack.c.l.b16 %v1288
        %v1357 = vunpack.c.l.b16 %v1289
        %v1358 = vunpack.c.l.b16 %v1291
        %v1359 = vunpack.c.l.b16 %v1292
        %v1360 = vunpack.c.l.b16 %v1294
        %v1361 = vunpack.c.l.b16 %v1295
        %v1362 = vunpack.c.l.b16 %v1297
        %v1363 = vunpack.c.l.b16 %v1298
        %v1364 = vpack.c.b16 %v1333, %v1332
        %v1365 = vpack.c.b16 %v1335, %v1334
        %v1366 = vpack.c.b16 %v1337, %v1336
        %v1367 = vpack.c.b16 %v1339, %v1338
        %v1368 = vpack.c.b16 %v1341, %v1340
        %v1369 = vpack.c.b16 %v1343, %v1342
        %v1370 = vpack.c.b16 %v1345, %v1344
        %v1371 = vpack.c.b16 %v1347, %v1346
        %v1372 = vpack.c.b16 %v1349, %v1348
        %v1373 = vpack.c.b16 %v1351, %v1350
        %v1374 = vpack.c.b16 %v1353, %v1352
        %v1375 = vpack.c.b16 %v1355, %v1354
        %v1376 = vpack.c.b16 %v1357, %v1356
        %v1377 = vpack.c.b16 %v1359, %v1358
        %v1378 = vpack.c.b16 %v1361, %v1360
        %v1379 = vpack.c.b16 %v1363, %v1362
        %v1412 = vunpack.c.l.b16 %v1254
        %v1413 = vunpack.c.l.b16 %v1257
        %v1414 = vunpack.c.l.b16 %v1260
        %v1415 = vunpack.c.l.b16 %v1263
        %v1416 = vunpack.c.l.b16 %v1266
        %v1417 = vunpack.c.l.b16 %v1269
        %v1418 = vunpack.c.l.b16 %v1272
        %v1419 = vunpack.c.l.b16 %v1275
        %v1420 = vunpack.c.l.b16 %v1278
        %v1421 = vunpack.c.l.b16 %v1281
        %v1422 = vunpack.c.l.b16 %v1284
        %v1423 = vunpack.c.l.b16 %v1287
        %v1424 = vunpack.c.l.b16 %v1290
        %v1425 = vunpack.c.l.b16 %v1293
        %v1426 = vunpack.c.l.b16 %v1296
        %v1427 = vunpack.c.l.b16 %v1299
        %v1428 = vpack.c.b16 %v1412, %v1412
        %v1429 = vpack.c.b16 %v1413, %v1413
        %v1430 = vpack.c.b16 %v1414, %v1414
        %v1431 = vpack.c.b16 %v1415, %v1415
        %v1432 = vpack.c.b16 %v1416, %v1416
        %v1433 = vpack.c.b16 %v1417, %v1417
        %v1434 = vpack.c.b16 %v1418, %v1418
        %v1435 = vpack.c.b16 %v1419, %v1419
        %v1436 = vpack.c.b16 %v1420, %v1420
        %v1437 = vpack.c.b16 %v1421, %v1421
        %v1438 = vpack.c.b16 %v1422, %v1422
        %v1439 = vpack.c.b16 %v1423, %v1423
        %v1440 = vpack.c.b16 %v1424, %v1424
        %v1441 = vpack.c.b16 %v1425, %v1425
        %v1442 = vpack.c.b16 %v1426, %v1426
        %v1443 = vpack.c.b16 %v1427, %v1427
        %v1445 = vshrl.u32 %v1364, 16
        %v1447 = vshll.u32 %v1364, 16
        %v1449 = vrot.slane %v1447, 1
        %v1450 = vor.u32 %v1445, %v1449
        %v1452 = vshll.u32 %v1428, 16
        %v1454 = vrot.slane %v1452, 1
        %v1455 = vsel %vm431, %v1450, %v1454
        %v1457 = vshrl.u32 %v1365, 16
        %v1459 = vshll.u32 %v1365, 16
        %v1461 = vrot.slane %v1459, 1
        %v1462 = vor.u32 %v1457, %v1461
        %v1464 = vshll.u32 %v1429, 16
        %v1466 = vrot.slane %v1464, 1
        %v1467 = vsel %vm431, %v1462, %v1466
        %v1469 = vshrl.u32 %v1366, 16
        %v1471 = vshll.u32 %v1366, 16
        %v1473 = vrot.slane %v1471, 1
        %v1474 = vor.u32 %v1469, %v1473
        %v1476 = vshll.u32 %v1430, 16
        %v1478 = vrot.slane %v1476, 1
        %v1479 = vsel %vm431, %v1474, %v1478
        %v1481 = vshrl.u32 %v1367, 16
        %v1483 = vshll.u32 %v1367, 16
        %v1485 = vrot.slane %v1483, 1
        %v1486 = vor.u32 %v1481, %v1485
        %v1488 = vshll.u32 %v1431, 16
        %v1490 = vrot.slane %v1488, 1
        %v1491 = vsel %vm431, %v1486, %v1490
        %v1493 = vshrl.u32 %v1368, 16
        %v1495 = vshll.u32 %v1368, 16
        %v1497 = vrot.slane %v1495, 1
        %v1498 = vor.u32 %v1493, %v1497
        %v1500 = vshll.u32 %v1432, 16
        %v1502 = vrot.slane %v1500, 1
        %v1503 = vsel %vm431, %v1498, %v1502
        %v1505 = vshrl.u32 %v1369, 16
        %v1507 = vshll.u32 %v1369, 16
        %v1509 = vrot.slane %v1507, 1
        %v1510 = vor.u32 %v1505, %v1509
        %v1512 = vshll.u32 %v1433, 16
        %v1514 = vrot.slane %v1512, 1
        %v1515 = vsel %vm431, %v1510, %v1514
        %v1517 = vshrl.u32 %v1370, 16
        %v1519 = vshll.u32 %v1370, 16
        %v1521 = vrot.slane %v1519, 1
        %v1522 = vor.u32 %v1517, %v1521
        %v1524 = vshll.u32 %v1434, 16
        %v1526 = vrot.slane %v1524, 1
        %v1527 = vsel %vm431, %v1522, %v1526
        %v1529 = vshrl.u32 %v1371, 16
        %v1531 = vshll.u32 %v1371, 16
        %v1533 = vrot.slane %v1531, 1
        %v1534 = vor.u32 %v1529, %v1533
        %v1536 = vshll.u32 %v1435, 16
        %v1538 = vrot.slane %v1536, 1
        %v1539 = vsel %vm431, %v1534, %v1538
        %v1541 = vshrl.u32 %v1372, 16
        %v1543 = vshll.u32 %v1372, 16
        %v1545 = vrot.slane %v1543, 1
        %v1546 = vor.u32 %v1541, %v1545
        %v1548 = vshll.u32 %v1436, 16
        %v1550 = vrot.slane %v1548, 1
        %v1551 = vsel %vm431, %v1546, %v1550
        %v1553 = vshrl.u32 %v1373, 16
        %v1555 = vshll.u32 %v1373, 16
        %v1557 = vrot.slane %v1555, 1
        %v1558 = vor.u32 %v1553, %v1557
        %v1560 = vshll.u32 %v1437, 16
        %v1562 = vrot.slane %v1560, 1
        %v1563 = vsel %vm431, %v1558, %v1562
        %v1565 = vshrl.u32 %v1374, 16
        %v1567 = vshll.u32 %v1374, 16
        %v1569 = vrot.slane %v1567, 1
        %v1570 = vor.u32 %v1565, %v1569
        %v1572 = vshll.u32 %v1438, 16
        %v1574 = vrot.slane %v1572, 1
        %v1575 = vsel %vm431, %v1570, %v1574
        %v1577 = vshrl.u32 %v1375, 16
        %v1579 = vshll.u32 %v1375, 16
        %v1581 = vrot.slane %v1579, 1
        %v1582 = vor.u32 %v1577, %v1581
        %v1584 = vshll.u32 %v1439, 16
        %v1586 = vrot.slane %v1584, 1
        %v1587 = vsel %vm431, %v1582, %v1586
        %v1589 = vshrl.u32 %v1376, 16
        %v1591 = vshll.u32 %v1376, 16
        %v1593 = vrot.slane %v1591, 1
        %v1594 = vor.u32 %v1589, %v1593
        %v1596 = vshll.u32 %v1440, 16
        %v1598 = vrot.slane %v1596, 1
        %v1599 = vsel %vm431, %v1594, %v1598
        %v1601 = vshrl.u32 %v1377, 16
        %v1603 = vshll.u32 %v1377, 16
        %v1605 = vrot.slane %v1603, 1
        %v1606 = vor.u32 %v1601, %v1605
        %v1608 = vshll.u32 %v1441, 16
        %v1610 = vrot.slane %v1608, 1
        %v1611 = vsel %vm431, %v1606, %v1610
        %v1613 = vshrl.u32 %v1378, 16
        %v1615 = vshll.u32 %v1378, 16
        %v1617 = vrot.slane %v1615, 1
        %v1618 = vor.u32 %v1613, %v1617
        %v1620 = vshll.u32 %v1442, 16
        %v1622 = vrot.slane %v1620, 1
        %v1623 = vsel %vm431, %v1618, %v1622
        %v1625 = vshrl.u32 %v1379, 16
        %v1627 = vshll.u32 %v1379, 16
        %v1629 = vrot.slane %v1627, 1
        %v1630 = vor.u32 %v1625, %v1629
        %v1632 = vshll.u32 %v1443, 16
        %v1634 = vrot.slane %v1632, 1
        %v1635 = vsel %vm431, %v1630, %v1634
        %v1652 = vrot.slane %v1364, 1
        %v1653 = vrot.slane %v1428, 1
        %v1654 = vsel %vm640, %v1652, %v1653
        %v1655 = vrot.slane %v1365, 1
        %v1656 = vrot.slane %v1429, 1
        %v1657 = vsel %vm640, %v1655, %v1656
        %v1658 = vrot.slane %v1366, 1
        %v1659 = vrot.slane %v1430, 1
        %v1660 = vsel %vm640, %v1658, %v1659
        %v1661 = vrot.slane %v1367, 1
        %v1662 = vrot.slane %v1431, 1
        %v1663 = vsel %vm640, %v1661, %v1662
        %v1664 = vrot.slane %v1368, 1
        %v1665 = vrot.slane %v1432, 1
        %v1666 = vsel %vm640, %v1664, %v1665
        %v1667 = vrot.slane %v1369, 1
        %v1668 = vrot.slane %v1433, 1
        %v1669 = vsel %vm640, %v1667, %v1668
        %v1670 = vrot.slane %v1370, 1
        %v1671 = vrot.slane %v1434, 1
        %v1672 = vsel %vm640, %v1670, %v1671
        %v1673 = vrot.slane %v1371, 1
        %v1674 = vrot.slane %v1435, 1
        %v1675 = vsel %vm640, %v1673, %v1674
        %v1676 = vrot.slane %v1372, 1
        %v1677 = vrot.slane %v1436, 1
        %v1678 = vsel %vm640, %v1676, %v1677
        %v1679 = vrot.slane %v1373, 1
        %v1680 = vrot.slane %v1437, 1
        %v1681 = vsel %vm640, %v1679, %v1680
        %v1682 = vrot.slane %v1374, 1
        %v1683 = vrot.slane %v1438, 1
        %v1684 = vsel %vm640, %v1682, %v1683
        %v1685 = vrot.slane %v1375, 1
        %v1686 = vrot.slane %v1439, 1
        %v1687 = vsel %vm640, %v1685, %v1686
        %v1688 = vrot.slane %v1376, 1
        %v1689 = vrot.slane %v1440, 1
        %v1690 = vsel %vm640, %v1688, %v1689
        %v1691 = vrot.slane %v1377, 1
        %v1692 = vrot.slane %v1441, 1
        %v1693 = vsel %vm640, %v1691, %v1692
        %v1694 = vrot.slane %v1378, 1
        %v1695 = vrot.slane %v1442, 1
        %v1696 = vsel %vm640, %v1694, %v1695
        %v1697 = vrot.slane %v1379, 1
        %v1698 = vrot.slane %v1443, 1
        %v1699 = vsel %vm640, %v1697, %v1698
        %s1716 = scalar_lea.vmem [#allocation6], 192
        %v1717 = vld [vmem:[%s1716] sm:$0xf]
        %v1718 = vld [vmem:[%s1716 + $0x4] sm:$0xf]
        %v1719 = vld [vmem:[%s1716 + $0x8] sm:$0xf]
        %v1720 = vld [vmem:[%s1716 + $0xc] sm:$0xf]
        %v1721 = vld [vmem:[%s1716 + $0x10] sm:$0xf]
        %v1722 = vld [vmem:[%s1716 + $0x14] sm:$0xf]
        %v1723 = vld [vmem:[%s1716 + $0x18] sm:$0xf]
        %v1724 = vld [vmem:[%s1716 + $0x1c] sm:$0xf]
        %v1725 = vld [vmem:[%s1716 + $0x20] sm:$0xf]
        %v1726 = vld [vmem:[%s1716 + $0x24] sm:$0xf]
        %v1727 = vld [vmem:[%s1716 + $0x28] sm:$0xf]
        %v1728 = vld [vmem:[%s1716 + $0x2c] sm:$0xf]
        %v1729 = vld [vmem:[%s1716 + $0x30] sm:$0xf]
        %v1730 = vld [vmem:[%s1716 + $0x34] sm:$0xf]
        %v1731 = vld [vmem:[%s1716 + $0x38] sm:$0xf]
        %v1732 = vld [vmem:[%s1716 + $0x3c] sm:$0xf]
        %v1733 = vld [vmem:[%s1716 + $0x40] sm:$0xf]
        %v1734 = vld [vmem:[%s1716 + $0x44] sm:$0xf]
        %v1735 = vld [vmem:[%s1716 + $0x48] sm:$0xf]
        %v1736 = vld [vmem:[%s1716 + $0x4c] sm:$0xf]
        %v1737 = vld [vmem:[%s1716 + $0x50] sm:$0xf]
        %v1738 = vld [vmem:[%s1716 + $0x54] sm:$0xf]
        %v1739 = vld [vmem:[%s1716 + $0x58] sm:$0xf]
        %v1740 = vld [vmem:[%s1716 + $0x5c] sm:$0xf]
        %v1741 = vld [vmem:[%s1716 + $0x60] sm:$0xf]
        %v1742 = vld [vmem:[%s1716 + $0x64] sm:$0xf]
        %v1743 = vld [vmem:[%s1716 + $0x68] sm:$0xf]
        %v1744 = vld [vmem:[%s1716 + $0x6c] sm:$0xf]
        %v1745 = vld [vmem:[%s1716 + $0x70] sm:$0xf]
        %v1746 = vld [vmem:[%s1716 + $0x74] sm:$0xf]
        %v1747 = vld [vmem:[%s1716 + $0x78] sm:$0xf]
        %v1748 = vld [vmem:[%s1716 + $0x7c] sm:$0xf]
        %v1749 = vld [vmem:[%s1716 + $0x80] sm:$0xf]
        %v1750 = vld [vmem:[%s1716 + $0x84] sm:$0xf]
        %v1751 = vld [vmem:[%s1716 + $0x88] sm:$0xf]
        %v1752 = vld [vmem:[%s1716 + $0x8c] sm:$0xf]
        %v1753 = vld [vmem:[%s1716 + $0x90] sm:$0xf]
        %v1754 = vld [vmem:[%s1716 + $0x94] sm:$0xf]
        %v1755 = vld [vmem:[%s1716 + $0x98] sm:$0xf]
        %v1756 = vld [vmem:[%s1716 + $0x9c] sm:$0xf]
        %v1757 = vld [vmem:[%s1716 + $0xa0] sm:$0xf]
        %v1758 = vld [vmem:[%s1716 + $0xa4] sm:$0xf]
        %v1759 = vld [vmem:[%s1716 + $0xa8] sm:$0xf]
        %v1760 = vld [vmem:[%s1716 + $0xac] sm:$0xf]
        %v1761 = vld [vmem:[%s1716 + $0xb0] sm:$0xf]
        %v1762 = vld [vmem:[%s1716 + $0xb4] sm:$0xf]
        %v1763 = vld [vmem:[%s1716 + $0xb8] sm:$0xf]
        %v1764 = vld [vmem:[%s1716 + $0xbc] sm:$0xf]
        %v1813 = vunpack.c.l.b16 %v1717
        %v1814 = vunpack.c.l.b16 %v1718
        %v1815 = vunpack.c.l.b16 %v1719
        %v1816 = vunpack.c.l.b16 %v1720
        %v1817 = vunpack.c.l.b16 %v1721
        %v1818 = vunpack.c.l.b16 %v1722
        %v1819 = vunpack.c.l.b16 %v1723
        %v1820 = vunpack.c.l.b16 %v1724
        %v1821 = vunpack.c.l.b16 %v1725
        %v1822 = vunpack.c.l.b16 %v1726
        %v1823 = vunpack.c.l.b16 %v1727
        %v1824 = vunpack.c.l.b16 %v1728
        %v1825 = vunpack.c.l.b16 %v1729
        %v1826 = vunpack.c.l.b16 %v1730
        %v1827 = vunpack.c.l.b16 %v1731
        %v1828 = vunpack.c.l.b16 %v1732
        %v1829 = vunpack.c.l.b16 %v1733
        %v1830 = vunpack.c.l.b16 %v1734
        %v1831 = vunpack.c.l.b16 %v1735
        %v1832 = vunpack.c.l.b16 %v1736
        %v1833 = vunpack.c.l.b16 %v1737
        %v1834 = vunpack.c.l.b16 %v1738
        %v1835 = vunpack.c.l.b16 %v1739
        %v1836 = vunpack.c.l.b16 %v1740
        %v1837 = vunpack.c.l.b16 %v1741
        %v1838 = vunpack.c.l.b16 %v1742
        %v1839 = vunpack.c.l.b16 %v1743
        %v1840 = vunpack.c.l.b16 %v1744
        %v1841 = vunpack.c.l.b16 %v1745
        %v1842 = vunpack.c.l.b16 %v1746
        %v1843 = vunpack.c.l.b16 %v1747
        %v1844 = vunpack.c.l.b16 %v1748
        %v1845 = vunpack.c.l.b16 %v1749
        %v1846 = vunpack.c.l.b16 %v1750
        %v1847 = vunpack.c.l.b16 %v1751
        %v1848 = vunpack.c.l.b16 %v1752
        %v1849 = vunpack.c.l.b16 %v1753
        %v1850 = vunpack.c.l.b16 %v1754
        %v1851 = vunpack.c.l.b16 %v1755
        %v1852 = vunpack.c.l.b16 %v1756
        %v1853 = vunpack.c.l.b16 %v1757
        %v1854 = vunpack.c.l.b16 %v1758
        %v1855 = vunpack.c.l.b16 %v1759
        %v1856 = vunpack.c.l.b16 %v1760
        %v1857 = vunpack.c.l.b16 %v1761
        %v1858 = vunpack.c.l.b16 %v1762
        %v1859 = vunpack.c.l.b16 %v1763
        %v1860 = vunpack.c.l.b16 %v1764
        %v1861 = vpack.c.b16 %v1814, %v1813
        %v1862 = vpack.c.b16 %v1816, %v1815
        %v1863 = vpack.c.b16 %v1818, %v1817
        %v1864 = vpack.c.b16 %v1820, %v1819
        %v1865 = vpack.c.b16 %v1822, %v1821
        %v1866 = vpack.c.b16 %v1824, %v1823
        %v1867 = vpack.c.b16 %v1826, %v1825
        %v1868 = vpack.c.b16 %v1828, %v1827
        %v1869 = vpack.c.b16 %v1830, %v1829
        %v1870 = vpack.c.b16 %v1832, %v1831
        %v1871 = vpack.c.b16 %v1834, %v1833
        %v1872 = vpack.c.b16 %v1836, %v1835
        %v1873 = vpack.c.b16 %v1838, %v1837
        %v1874 = vpack.c.b16 %v1840, %v1839
        %v1875 = vpack.c.b16 %v1842, %v1841
        %v1876 = vpack.c.b16 %v1844, %v1843
        %v1877 = vpack.c.b16 %v1846, %v1845
        %v1878 = vpack.c.b16 %v1848, %v1847
        %v1879 = vpack.c.b16 %v1850, %v1849
        %v1880 = vpack.c.b16 %v1852, %v1851
        %v1881 = vpack.c.b16 %v1854, %v1853
        %v1882 = vpack.c.b16 %v1856, %v1855
        %v1883 = vpack.c.b16 %v1858, %v1857
        %v1884 = vpack.c.b16 %v1860, %v1859
        %1909 = vmatprep.subr.bf16.mxu0 0
        %1910 = vmatpush1.bf16.msra.mxu0 %v1861
        %1911 = vmatprep.subr.bf16.mxu0 0
        %1912 = vmatpush1.bf16.msra.mxu0 %v1862
        %1913 = vmatprep.subr.bf16.mxu0 0
        %1914 = vmatpush1.bf16.msra.mxu0 %v1863
        %1915 = vmatprep.subr.bf16.mxu0 0
        %1916 = vmatpush1.bf16.msra.mxu0 %v1864
        %1917 = vmatprep.subr.bf16.mxu0 0
        %1918 = vmatpush1.bf16.msra.mxu0 %v1865
        %1919 = vmatprep.subr.bf16.mxu0 0
        %1920 = vmatpush1.bf16.msra.mxu0 %v1866
        %1921 = vmatprep.subr.bf16.mxu0 0
        %1922 = vmatpush1.bf16.msra.mxu0 %v1867
        %1923 = vmatprep.subr.bf16.mxu0 0
        %1924 = vmatpush1.bf16.msra.mxu0 %v1868
        %1925 = vmatprep.subr.bf16.mxu0 0
        %1926 = vmatpush1.bf16.msra.mxu0 %v1869
        %1927 = vmatprep.subr.bf16.mxu0 0
        %1928 = vmatpush1.bf16.msra.mxu0 %v1870
        %1929 = vmatprep.subr.bf16.mxu0 0
        %1930 = vmatpush1.bf16.msra.mxu0 %v1871
        %1931 = vmatprep.subr.bf16.mxu0 0
        %1932 = vmatpush1.bf16.msra.mxu0 %v1872
        %1933 = vmatprep.subr.bf16.mxu0 0
        %1934 = vmatpush1.bf16.msra.mxu0 %v1873
        %1935 = vmatprep.subr.bf16.mxu0 0
        %1936 = vmatpush1.bf16.msra.mxu0 %v1874
        %1937 = vmatprep.subr.bf16.mxu0 0
        %1938 = vmatpush1.bf16.msra.mxu0 %v1875
        %1939 = vmatprep.subr.bf16.mxu0 0
        %1940 = vmatpush1.bf16.msra.mxu0 %v1876
        %1941 = vmatprep.mubr.bf16.mxu0 %v1455
        %1942 = vmatmul.mubr.bf16.gmra.mrb[0].mxu0 %v1364
        %v1943 = vpop.f32.mrb[0].mxu0
        %v1944 = vadd.f32 0.0, %v1943
        %v1945 = vpop.f32.mrb[0].mxu0
        %v1946 = vpop.f32.mrb[0].mxu0
        %v1947 = vadd.f32 0.0, %v1946
        %v1948 = vpop.f32.mrb[0].mxu0
        %1949 = vmatprep.mubr.bf16.mxu0 %v1467
        %1950 = vmatmul.mubr.bf16.gmra.mrb[0].mxu0 %v1365
        %v1951 = vpop.f32.mrb[0].mxu0
        %v1952 = vadd.f32 0.0, %v1951
        %v1953 = vpop.f32.mrb[0].mxu0
        %v1954 = vpop.f32.mrb[0].mxu0
        %v1955 = vadd.f32 0.0, %v1954
        %v1956 = vpop.f32.mrb[0].mxu0
        %1957 = vmatprep.mubr.bf16.mxu0 %v1479
        %1958 = vmatmul.mubr.bf16.gmra.mrb[0].mxu0 %v1366
        %v1959 = vpop.f32.mrb[0].mxu0
        %v1960 = vadd.f32 0.0, %v1959
        %v1961 = vpop.f32.mrb[0].mxu0
        %v1962 = vpop.f32.mrb[0].mxu0
        %v1963 = vadd.f32 0.0, %v1962
        %v1964 = vpop.f32.mrb[0].mxu0
        %1965 = vmatprep.mubr.bf16.mxu0 %v1491
        %1966 = vmatmul.mubr.bf16.gmra.mrb[0].mxu0 %v1367
        %v1967 = vpop.f32.mrb[0].mxu0
        %v1968 = vadd.f32 0.0, %v1967
        %v1969 = vpop.f32.mrb[0].mxu0
        %v1970 = vpop.f32.mrb[0].mxu0
        %v1971 = vadd.f32 0.0, %v1970
        %v1972 = vpop.f32.mrb[0].mxu0
        %1973 = vmatprep.mubr.bf16.mxu0 %v1503
        %1974 = vmatmul.mubr.bf16.gmra.mrb[0].mxu0 %v1368
        %v1975 = vpop.f32.mrb[0].mxu0
        %v1976 = vadd.f32 0.0, %v1975
        %v1977 = vpop.f32.mrb[0].mxu0
        %v1978 = vpop.f32.mrb[0].mxu0
        %v1979 = vadd.f32 0.0, %v1978
        %v1980 = vpop.f32.mrb[0].mxu0
        %1981 = vmatprep.mubr.bf16.mxu0 %v1515
        %1982 = vmatmul.mubr.bf16.gmra.mrb[0].mxu0 %v1369
        %v1983 = vpop.f32.mrb[0].mxu0
        %v1984 = vadd.f32 0.0, %v1983
        %v1985 = vpop.f32.mrb[0].mxu0
        %v1986 = vpop.f32.mrb[0].mxu0
        %v1987 = vadd.f32 0.0, %v1986
        %v1988 = vpop.f32.mrb[0].mxu0
        %1989 = vmatprep.mubr.bf16.mxu0 %v1527
        %1990 = vmatmul.mubr.bf16.gmra.mrb[0].mxu0 %v1370
        %v1991 = vpop.f32.mrb[0].mxu0
        %v1992 = vadd.f32 0.0, %v1991
        %v1993 = vpop.f32.mrb[0].mxu0
        %v1994 = vpop.f32.mrb[0].mxu0
        %v1995 = vadd.f32 0.0, %v1994
        %v1996 = vpop.f32.mrb[0].mxu0
        %1997 = vmatprep.mubr.bf16.mxu0 %v1539
        %1998 = vmatmul.mubr.bf16.gmra.mrb[0].mxu0 %v1371
        %v1999 = vpop.f32.mrb[0].mxu0
        %v2000 = vadd.f32 0.0, %v1999
        %v2001 = vpop.f32.mrb[0].mxu0
        %v2002 = vpop.f32.mrb[0].mxu0
        %v2003 = vadd.f32 0.0, %v2002
        %v2004 = vpop.f32.mrb[0].mxu0
        %2005 = vmatprep.mubr.bf16.mxu0 %v1551
        %2006 = vmatmul.mubr.bf16.gmra.mrb[0].mxu0 %v1372
        %v2007 = vpop.f32.mrb[0].mxu0
        %v2008 = vadd.f32 0.0, %v2007
        %v2009 = vpop.f32.mrb[0].mxu0
        %v2010 = vpop.f32.mrb[0].mxu0
        %v2011 = vadd.f32 0.0, %v2010
        %v2012 = vpop.f32.mrb[0].mxu0
        %2013 = vmatprep.mubr.bf16.mxu0 %v1563
        %2014 = vmatmul.mubr.bf16.gmra.mrb[0].mxu0 %v1373
        %v2015 = vpop.f32.mrb[0].mxu0
        %v2016 = vadd.f32 0.0, %v2015
        %v2017 = vpop.f32.mrb[0].mxu0
        %v2018 = vpop.f32.mrb[0].mxu0
        %v2019 = vadd.f32 0.0, %v2018
        %v2020 = vpop.f32.mrb[0].mxu0
        %2021 = vmatprep.mubr.bf16.mxu0 %v1575
        %2022 = vmatmul.mubr.bf16.gmra.mrb[0].mxu0 %v1374
        %v2023 = vpop.f32.mrb[0].mxu0
        %v2024 = vadd.f32 0.0, %v2023
        %v2025 = vpop.f32.mrb[0].mxu0
        %v2026 = vpop.f32.mrb[0].mxu0
        %v2027 = vadd.f32 0.0, %v2026
        %v2028 = vpop.f32.mrb[0].mxu0
        %2029 = vmatprep.mubr.bf16.mxu0 %v1587
        %2030 = vmatmul.mubr.bf16.gmra.mrb[0].mxu0 %v1375
        %v2031 = vpop.f32.mrb[0].mxu0
        %v2032 = vadd.f32 0.0, %v2031
        %v2033 = vpop.f32.mrb[0].mxu0
        %v2034 = vpop.f32.mrb[0].mxu0
        %v2035 = vadd.f32 0.0, %v2034
        %v2036 = vpop.f32.mrb[0].mxu0
        %2037 = vmatprep.mubr.bf16.mxu0 %v1599
        %2038 = vmatmul.mubr.bf16.gmra.mrb[0].mxu0 %v1376
        %v2039 = vpop.f32.mrb[0].mxu0
        %v2040 = vadd.f32 0.0, %v2039
        %v2041 = vpop.f32.mrb[0].mxu0
        %v2042 = vpop.f32.mrb[0].mxu0
        %v2043 = vadd.f32 0.0, %v2042
        %v2044 = vpop.f32.mrb[0].mxu0
        %2045 = vmatprep.mubr.bf16.mxu0 %v1611
        %2046 = vmatmul.mubr.bf16.gmra.mrb[0].mxu0 %v1377
        %v2047 = vpop.f32.mrb[0].mxu0
        %v2048 = vadd.f32 0.0, %v2047
        %v2049 = vpop.f32.mrb[0].mxu0
        %v2050 = vpop.f32.mrb[0].mxu0
        %v2051 = vadd.f32 0.0, %v2050
        %v2052 = vpop.f32.mrb[0].mxu0
        %2053 = vmatprep.mubr.bf16.mxu0 %v1623
        %2054 = vmatmul.mubr.bf16.gmra.mrb[0].mxu0 %v1378
        %v2055 = vpop.f32.mrb[0].mxu0
        %v2056 = vadd.f32 0.0, %v2055
        %v2057 = vpop.f32.mrb[0].mxu0
        %v2058 = vpop.f32.mrb[0].mxu0
        %v2059 = vadd.f32 0.0, %v2058
        %v2060 = vpop.f32.mrb[0].mxu0
        %2061 = vmatprep.mubr.bf16.mxu0 %v1635
        %2062 = vmatmul.mubr.bf16.gmra.mrb[0].mxu0 %v1379
        %v2063 = vpop.f32.mrb[0].mxu0
        %v2064 = vadd.f32 0.0, %v2063
        %v2065 = vpop.f32.mrb[0].mxu0
        %v2066 = vpop.f32.mrb[0].mxu0
        %v2067 = vadd.f32 0.0, %v2066
        %v2068 = vpop.f32.mrb[0].mxu0
        %2069 = vdwg.mxu0
        %2070 = vmatprep.subr.bf16.mxu0 0
        %2071 = vmatpush1.bf16.msra.mxu0 %v1877
        %2072 = vmatprep.subr.bf16.mxu0 0
        %2073 = vmatpush1.bf16.msra.mxu0 %v1878
        %2074 = vmatprep.subr.bf16.mxu0 0
        %2075 = vmatpush1.bf16.msra.mxu0 %v1879
        %2076 = vmatprep.subr.bf16.mxu0 0
        %2077 = vmatpush1.bf16.msra.mxu0 %v1880
        %2078 = vmatprep.subr.bf16.mxu0 0
        %2079 = vmatpush1.bf16.msra.mxu0 %v1881
        %2080 = vmatprep.subr.bf16.mxu0 0
        %2081 = vmatpush1.bf16.msra.mxu0 %v1882
        %2082 = vmatprep.subr.bf16.mxu0 0
        %2083 = vmatpush1.bf16.msra.mxu0 %v1883
        %2084 = vmatprep.subr.bf16.mxu0 0
        %2085 = vmatpush1.bf16.msra.mxu0 %v1884
        %2086 = vmatprep.subr.bf16.mxu0 0
        %2087 = vmatpush1.bf16.msra.mxu0 0
        %2088 = vmatprep.subr.bf16.mxu0 0
        %2089 = vmatpush1.bf16.msra.mxu0 0
        %2090 = vmatprep.subr.bf16.mxu0 0
        %2091 = vmatpush1.bf16.msra.mxu0 0
        %2092 = vmatprep.subr.bf16.mxu0 0
        %2093 = vmatpush1.bf16.msra.mxu0 0
        %2094 = vmatprep.subr.bf16.mxu0 0
        %2095 = vmatpush1.bf16.msra.mxu0 0
        %2096 = vmatprep.subr.bf16.mxu0 0
        %2097 = vmatpush1.bf16.msra.mxu0 0
        %2098 = vmatprep.subr.bf16.mxu0 0
        %2099 = vmatpush1.bf16.msra.mxu0 0
        %2100 = vmatprep.subr.bf16.mxu0 0
        %2101 = vmatpush1.bf16.msra.mxu0 0
        %2102 = vmatprep.mubr.bf16.mxu0 0
        %2103 = vmatmul.mubr.bf16.gmra.mrb[0].mxu0 %v1654
        %v2104 = vpop.f32.mrb[0].mxu0
        %v2105 = vadd.f32 %v1944, %v2104
        %v2106 = vpop.f32.mrb[0].mxu0
        %v2107 = vpop.f32.mrb[0].mxu0
        %v2108 = vadd.f32 %v1947, %v2107
        %v2109 = vpop.f32.mrb[0].mxu0
        %2110 = vmatprep.mubr.bf16.mxu0 0
        %2111 = vmatmul.mubr.bf16.gmra.mrb[0].mxu0 %v1657
        %v2112 = vpop.f32.mrb[0].mxu0
        %v2113 = vadd.f32 %v1952, %v2112
        %v2114 = vpop.f32.mrb[0].mxu0
        %v2115 = vpop.f32.mrb[0].mxu0
        %v2116 = vadd.f32 %v1955, %v2115
        %v2117 = vpop.f32.mrb[0].mxu0
        %2118 = vmatprep.mubr.bf16.mxu0 0
        %2119 = vmatmul.mubr.bf16.gmra.mrb[0].mxu0 %v1660
        %v2120 = vpop.f32.mrb[0].mxu0
        %v2121 = vadd.f32 %v1960, %v2120
        %v2122 = vpop.f32.mrb[0].mxu0
        %v2123 = vpop.f32.mrb[0].mxu0
        %v2124 = vadd.f32 %v1963, %v2123
        %v2125 = vpop.f32.mrb[0].mxu0
        %2126 = vmatprep.mubr.bf16.mxu0 0
        %2127 = vmatmul.mubr.bf16.gmra.mrb[0].mxu0 %v1663
        %v2128 = vpop.f32.mrb[0].mxu0
        %v2129 = vadd.f32 %v1968, %v2128
        %v2130 = vpop.f32.mrb[0].mxu0
        %v2131 = vpop.f32.mrb[0].mxu0
        %v2132 = vadd.f32 %v1971, %v2131
        %v2133 = vpop.f32.mrb[0].mxu0
        %2134 = vmatprep.mubr.bf16.mxu0 0
        %2135 = vmatmul.mubr.bf16.gmra.mrb[0].mxu0 %v1666
        %v2136 = vpop.f32.mrb[0].mxu0
        %v2137 = vadd.f32 %v1976, %v2136
        %v2138 = vpop.f32.mrb[0].mxu0
        %v2139 = vpop.f32.mrb[0].mxu0
        %v2140 = vadd.f32 %v1979, %v2139
        %v2141 = vpop.f32.mrb[0].mxu0
        %2142 = vmatprep.mubr.bf16.mxu0 0
        %2143 = vmatmul.mubr.bf16.gmra.mrb[0].mxu0 %v1669
        %v2144 = vpop.f32.mrb[0].mxu0
        %v2145 = vadd.f32 %v1984, %v2144
        %v2146 = vpop.f32.mrb[0].mxu0
        %v2147 = vpop.f32.mrb[0].mxu0
        %v2148 = vadd.f32 %v1987, %v2147
        %v2149 = vpop.f32.mrb[0].mxu0
        %2150 = vmatprep.mubr.bf16.mxu0 0
        %2151 = vmatmul.mubr.bf16.gmra.mrb[0].mxu0 %v1672
        %v2152 = vpop.f32.mrb[0].mxu0
        %v2153 = vadd.f32 %v1992, %v2152
        %v2154 = vpop.f32.mrb[0].mxu0
        %v2155 = vpop.f32.mrb[0].mxu0
        %v2156 = vadd.f32 %v1995, %v2155
        %v2157 = vpop.f32.mrb[0].mxu0
        %2158 = vmatprep.mubr.bf16.mxu0 0
        %2159 = vmatmul.mubr.bf16.gmra.mrb[0].mxu0 %v1675
        %v2160 = vpop.f32.mrb[0].mxu0
        %v2161 = vadd.f32 %v2000, %v2160
        %v2162 = vpop.f32.mrb[0].mxu0
        %v2163 = vpop.f32.mrb[0].mxu0
        %v2164 = vadd.f32 %v2003, %v2163
        %v2165 = vpop.f32.mrb[0].mxu0
        %2166 = vmatprep.mubr.bf16.mxu0 0
        %2167 = vmatmul.mubr.bf16.gmra.mrb[0].mxu0 %v1678
        %v2168 = vpop.f32.mrb[0].mxu0
        %v2169 = vadd.f32 %v2008, %v2168
        %v2170 = vpop.f32.mrb[0].mxu0
        %v2171 = vpop.f32.mrb[0].mxu0
        %v2172 = vadd.f32 %v2011, %v2171
        %v2173 = vpop.f32.mrb[0].mxu0
        %2174 = vmatprep.mubr.bf16.mxu0 0
        %2175 = vmatmul.mubr.bf16.gmra.mrb[0].mxu0 %v1681
        %v2176 = vpop.f32.mrb[0].mxu0
        %v2177 = vadd.f32 %v2016, %v2176
        %v2178 = vpop.f32.mrb[0].mxu0
        %v2179 = vpop.f32.mrb[0].mxu0
        %v2180 = vadd.f32 %v2019, %v2179
        %v2181 = vpop.f32.mrb[0].mxu0
        %2182 = vmatprep.mubr.bf16.mxu0 0
        %2183 = vmatmul.mubr.bf16.gmra.mrb[0].mxu0 %v1684
        %v2184 = vpop.f32.mrb[0].mxu0
        %v2185 = vadd.f32 %v2024, %v2184
        %v2186 = vpop.f32.mrb[0].mxu0
        %v2187 = vpop.f32.mrb[0].mxu0
        %v2188 = vadd.f32 %v2027, %v2187
        %v2189 = vpop.f32.mrb[0].mxu0
        %2190 = vmatprep.mubr.bf16.mxu0 0
        %2191 = vmatmul.mubr.bf16.gmra.mrb[0].mxu0 %v1687
        %v2192 = vpop.f32.mrb[0].mxu0
        %v2193 = vadd.f32 %v2032, %v2192
        %v2194 = vpop.f32.mrb[0].mxu0
        %v2195 = vpop.f32.mrb[0].mxu0
        %v2196 = vadd.f32 %v2035, %v2195
        %v2197 = vpop.f32.mrb[0].mxu0
        %2198 = vmatprep.mubr.bf16.mxu0 0
        %2199 = vmatmul.mubr.bf16.gmra.mrb[0].mxu0 %v1690
        %v2200 = vpop.f32.mrb[0].mxu0
        %v2201 = vadd.f32 %v2040, %v2200
        %v2202 = vpop.f32.mrb[0].mxu0
        %v2203 = vpop.f32.mrb[0].mxu0
        %v2204 = vadd.f32 %v2043, %v2203
        %v2205 = vpop.f32.mrb[0].mxu0
        %2206 = vmatprep.mubr.bf16.mxu0 0
        %2207 = vmatmul.mubr.bf16.gmra.mrb[0].mxu0 %v1693
        %v2208 = vpop.f32.mrb[0].mxu0
        %v2209 = vadd.f32 %v2048, %v2208
        %v2210 = vpop.f32.mrb[0].mxu0
        %v2211 = vpop.f32.mrb[0].mxu0
        %v2212 = vadd.f32 %v2051, %v2211
        %v2213 = vpop.f32.mrb[0].mxu0
        %2214 = vmatprep.mubr.bf16.mxu0 0
        %2215 = vmatmul.mubr.bf16.gmra.mrb[0].mxu0 %v1696
        %v2216 = vpop.f32.mrb[0].mxu0
        %v2217 = vadd.f32 %v2056, %v2216
        %v2218 = vpop.f32.mrb[0].mxu0
        %v2219 = vpop.f32.mrb[0].mxu0
        %v2220 = vadd.f32 %v2059, %v2219
        %v2221 = vpop.f32.mrb[0].mxu0
        %2222 = vmatprep.mubr.bf16.mxu0 0
        %2223 = vmatmul.mubr.bf16.gmra.mrb[0].mxu0 %v1699
        %v2224 = vpop.f32.mrb[0].mxu0
        %v2225 = vadd.f32 %v2064, %v2224
        %v2226 = vpop.f32.mrb[0].mxu0
        %v2227 = vpop.f32.mrb[0].mxu0
        %v2228 = vadd.f32 %v2067, %v2227
        %v2229 = vpop.f32.mrb[0].mxu0
        %2230 = vdwg.mxu0
        %v2231 = vld [vmem:[#allocation2] sm:$0xff]
        %v2232 = vld [vmem:[#allocation2 + $0x8] sm:$0xff]
        %v2233 = vld [vmem:[#allocation2 + $0x10] sm:$0xff]
        %v2234 = vld [vmem:[#allocation2 + $0x18] sm:$0xff]
        %v2235 = vld [vmem:[#allocation2 + $0x20] sm:$0xff]
        %v2236 = vld [vmem:[#allocation2 + $0x28] sm:$0xff]
        %v2237 = vld [vmem:[#allocation2 + $0x30] sm:$0xff]
        %v2238 = vld [vmem:[#allocation2 + $0x38] sm:$0xff]
        %v2239 = vld [vmem:[#allocation2 + $0x40] sm:$0xff]
        %v2240 = vld [vmem:[#allocation2 + $0x48] sm:$0xff]
        %v2241 = vld [vmem:[#allocation2 + $0x50] sm:$0xff]
        %v2242 = vld [vmem:[#allocation2 + $0x58] sm:$0xff]
        %v2243 = vld [vmem:[#allocation2 + $0x60] sm:$0xff]
        %v2244 = vld [vmem:[#allocation2 + $0x68] sm:$0xff]
        %v2245 = vld [vmem:[#allocation2 + $0x70] sm:$0xff]
        %v2246 = vld [vmem:[#allocation2 + $0x78] sm:$0xff]
        %v2247 = vld [vmem:[#allocation2 + $0x80] sm:$0xff]
        %v2248 = vld [vmem:[#allocation2 + $0x88] sm:$0xff]
        %v2249 = vld [vmem:[#allocation2 + $0x90] sm:$0xff]
        %v2250 = vld [vmem:[#allocation2 + $0x98] sm:$0xff]
        %v2251 = vld [vmem:[#allocation2 + $0xa0] sm:$0xff]
        %v2252 = vld [vmem:[#allocation2 + $0xa8] sm:$0xff]
        %v2253 = vld [vmem:[#allocation2 + $0xb0] sm:$0xff]
        %v2254 = vld [vmem:[#allocation2 + $0xb8] sm:$0xff]
        %v2255 = vld [vmem:[#allocation2 + $0xc0] sm:$0xff]
        %v2256 = vld [vmem:[#allocation2 + $0xc8] sm:$0xff]
        %v2257 = vld [vmem:[#allocation2 + $0xd0] sm:$0xff]
        %v2258 = vld [vmem:[#allocation2 + $0xd8] sm:$0xff]
        %v2259 = vld [vmem:[#allocation2 + $0xe0] sm:$0xff]
        %v2260 = vld [vmem:[#allocation2 + $0xe8] sm:$0xff]
        %v2261 = vld [vmem:[#allocation2 + $0xf0] sm:$0xff]
        %v2262 = vld [vmem:[#allocation2 + $0xf8] sm:$0xff]
        %v2263 = vadd.f32 %v2231, %v2105
        %v2264 = vadd.f32 %v2232, %v2108
        %v2265 = vadd.f32 %v2233, %v2113
        %v2266 = vadd.f32 %v2234, %v2116
        %v2267 = vadd.f32 %v2235, %v2121
        %v2268 = vadd.f32 %v2236, %v2124
        %v2269 = vadd.f32 %v2237, %v2129
        %v2270 = vadd.f32 %v2238, %v2132
        %v2271 = vadd.f32 %v2239, %v2137
        %v2272 = vadd.f32 %v2240, %v2140
        %v2273 = vadd.f32 %v2241, %v2145
        %v2274 = vadd.f32 %v2242, %v2148
        %v2275 = vadd.f32 %v2243, %v2153
        %v2276 = vadd.f32 %v2244, %v2156
        %v2277 = vadd.f32 %v2245, %v2161
        %v2278 = vadd.f32 %v2246, %v2164
        %v2279 = vadd.f32 %v2247, %v2169
        %v2280 = vadd.f32 %v2248, %v2172
        %v2281 = vadd.f32 %v2249, %v2177
        %v2282 = vadd.f32 %v2250, %v2180
        %v2283 = vadd.f32 %v2251, %v2185
        %v2284 = vadd.f32 %v2252, %v2188
        %v2285 = vadd.f32 %v2253, %v2193
        %v2286 = vadd.f32 %v2254, %v2196
        %v2287 = vadd.f32 %v2255, %v2201
        %v2288 = vadd.f32 %v2256, %v2204
        %v2289 = vadd.f32 %v2257, %v2209
        %v2290 = vadd.f32 %v2258, %v2212
        %v2291 = vadd.f32 %v2259, %v2217
        %v2292 = vadd.f32 %v2260, %v2220
        %v2293 = vadd.f32 %v2261, %v2225
        %v2294 = vadd.f32 %v2262, %v2228
        %2295 = vst [vmem:[#allocation2] sm:$0xff] %v2263
        %2296 = vst [vmem:[#allocation2 + $0x8] sm:$0xff] %v2264
        %2297 = vst [vmem:[#allocation2 + $0x10] sm:$0xff] %v2265
        %2298 = vst [vmem:[#allocation2 + $0x18] sm:$0xff] %v2266
        %2299 = vst [vmem:[#allocation2 + $0x20] sm:$0xff] %v2267
        %2300 = vst [vmem:[#allocation2 + $0x28] sm:$0xff] %v2268
        %2301 = vst [vmem:[#allocation2 + $0x30] sm:$0xff] %v2269
        %2302 = vst [vmem:[#allocation2 + $0x38] sm:$0xff] %v2270
        %2303 = vst [vmem:[#allocation2 + $0x40] sm:$0xff] %v2271
        %2304 = vst [vmem:[#allocation2 + $0x48] sm:$0xff] %v2272
        %2305 = vst [vmem:[#allocation2 + $0x50] sm:$0xff] %v2273
        %2306 = vst [vmem:[#allocation2 + $0x58] sm:$0xff] %v2274
        %2307 = vst [vmem:[#allocation2 + $0x60] sm:$0xff] %v2275
        %2308 = vst [vmem:[#allocation2 + $0x68] sm:$0xff] %v2276
        %2309 = vst [vmem:[#allocation2 + $0x70] sm:$0xff] %v2277
        %2310 = vst [vmem:[#allocation2 + $0x78] sm:$0xff] %v2278
        %2311 = vst [vmem:[#allocation2 + $0x80] sm:$0xff] %v2279
        %2312 = vst [vmem:[#allocation2 + $0x88] sm:$0xff] %v2280
        %2313 = vst [vmem:[#allocation2 + $0x90] sm:$0xff] %v2281
        %2314 = vst [vmem:[#allocation2 + $0x98] sm:$0xff] %v2282
        %2315 = vst [vmem:[#allocation2 + $0xa0] sm:$0xff] %v2283
        %2316 = vst [vmem:[#allocation2 + $0xa8] sm:$0xff] %v2284
        %2317 = vst [vmem:[#allocation2 + $0xb0] sm:$0xff] %v2285
        %2318 = vst [vmem:[#allocation2 + $0xb8] sm:$0xff] %v2286
        %2319 = vst [vmem:[#allocation2 + $0xc0] sm:$0xff] %v2287
        %2320 = vst [vmem:[#allocation2 + $0xc8] sm:$0xff] %v2288
        %2321 = vst [vmem:[#allocation2 + $0xd0] sm:$0xff] %v2289
        %2322 = vst [vmem:[#allocation2 + $0xd8] sm:$0xff] %v2290
        %2323 = vst [vmem:[#allocation2 + $0xe0] sm:$0xff] %v2291
        %2324 = vst [vmem:[#allocation2 + $0xe8] sm:$0xff] %v2292
        %2325 = vst [vmem:[#allocation2 + $0xf0] sm:$0xff] %v2293
        %2326 = vst [vmem:[#allocation2 + $0xf8] sm:$0xff] %v2294
        %s2327 = scalar_lea.vmem %s206, 24 [#allocation3]
        %v2328 = vld [vmem:[%s2327] sm:$0xf]
        %v2329 = vld [vmem:[%s2327 + $0x4] sm:$0xf]
        %v2330 = vld [vmem:[%s2327 + $0x8] sm:$0x1]
        %v2331 = vld [vmem:[%s2327 + $0xc] sm:$0xf]
        %v2332 = vld [vmem:[%s2327 + $0x10] sm:$0xf]
        %v2333 = vld [vmem:[%s2327 + $0x14] sm:$0x1]
        %v2334 = vld [vmem:[%s2327 + $0x18] sm:$0xf]
        %v2335 = vld [vmem:[%s2327 + $0x1c] sm:$0xf]
        %v2336 = vld [vmem:[%s2327 + $0x20] sm:$0x1]
        %v2337 = vld [vmem:[%s2327 + $0x24] sm:$0xf]
        %v2338 = vld [vmem:[%s2327 + $0x28] sm:$0xf]
        %v2339 = vld [vmem:[%s2327 + $0x2c] sm:$0x1]
        %v2340 = vld [vmem:[%s2327 + $0x30] sm:$0xf]
        %v2341 = vld [vmem:[%s2327 + $0x34] sm:$0xf]
        %v2342 = vld [vmem:[%s2327 + $0x38] sm:$0x1]
        %v2343 = vld [vmem:[%s2327 + $0x3c] sm:$0xf]
        %v2344 = vld [vmem:[%s2327 + $0x40] sm:$0xf]
        %v2345 = vld [vmem:[%s2327 + $0x44] sm:$0x1]
        %v2346 = vld [vmem:[%s2327 + $0x48] sm:$0xf]
        %v2347 = vld [vmem:[%s2327 + $0x4c] sm:$0xf]
        %v2348 = vld [vmem:[%s2327 + $0x50] sm:$0x1]
        %v2349 = vld [vmem:[%s2327 + $0x54] sm:$0xf]
        %v2350 = vld [vmem:[%s2327 + $0x58] sm:$0xf]
        %v2351 = vld [vmem:[%s2327 + $0x5c] sm:$0x1]
        %v2352 = vld [vmem:[%s2327 + $0x60] sm:$0xf]
        %v2353 = vld [vmem:[%s2327 + $0x64] sm:$0xf]
        %v2354 = vld [vmem:[%s2327 + $0x68] sm:$0x1]
        %v2355 = vld [vmem:[%s2327 + $0x6c] sm:$0xf]
        %v2356 = vld [vmem:[%s2327 + $0x70] sm:$0xf]
        %v2357 = vld [vmem:[%s2327 + $0x74] sm:$0x1]
        %v2358 = vld [vmem:[%s2327 + $0x78] sm:$0xf]
        %v2359 = vld [vmem:[%s2327 + $0x7c] sm:$0xf]
        %v2360 = vld [vmem:[%s2327 + $0x80] sm:$0x1]
        %v2361 = vld [vmem:[%s2327 + $0x84] sm:$0xf]
        %v2362 = vld [vmem:[%s2327 + $0x88] sm:$0xf]
        %v2363 = vld [vmem:[%s2327 + $0x8c] sm:$0x1]
        %v2364 = vld [vmem:[%s2327 + $0x90] sm:$0xf]
        %v2365 = vld [vmem:[%s2327 + $0x94] sm:$0xf]
        %v2366 = vld [vmem:[%s2327 + $0x98] sm:$0x1]
        %v2367 = vld [vmem:[%s2327 + $0x9c] sm:$0xf]
        %v2368 = vld [vmem:[%s2327 + $0xa0] sm:$0xf]
        %v2369 = vld [vmem:[%s2327 + $0xa4] sm:$0x1]
        %v2370 = vld [vmem:[%s2327 + $0xa8] sm:$0xf]
        %v2371 = vld [vmem:[%s2327 + $0xac] sm:$0xf]
        %v2372 = vld [vmem:[%s2327 + $0xb0] sm:$0x1]
        %v2373 = vld [vmem:[%s2327 + $0xb4] sm:$0xf]
        %v2374 = vld [vmem:[%s2327 + $0xb8] sm:$0xf]
        %v2375 = vld [vmem:[%s2327 + $0xbc] sm:$0x1]
        %v2408 = vunpack.c.l.b16 %v2328
        %v2409 = vunpack.c.l.b16 %v2329
        %v2410 = vunpack.c.l.b16 %v2331
        %v2411 = vunpack.c.l.b16 %v2332
        %v2412 = vunpack.c.l.b16 %v2334
        %v2413 = vunpack.c.l.b16 %v2335
        %v2414 = vunpack.c.l.b16 %v2337
        %v2415 = vunpack.c.l.b16 %v2338
        %v2416 = vunpack.c.l.b16 %v2340
        %v2417 = vunpack.c.l.b16 %v2341
        %v2418 = vunpack.c.l.b16 %v2343
        %v2419 = vunpack.c.l.b16 %v2344
        %v2420 = vunpack.c.l.b16 %v2346
        %v2421 = vunpack.c.l.b16 %v2347
        %v2422 = vunpack.c.l.b16 %v2349
        %v2423 = vunpack.c.l.b16 %v2350
        %v2424 = vunpack.c.l.b16 %v2352
        %v2425 = vunpack.c.l.b16 %v2353
        %v2426 = vunpack.c.l.b16 %v2355
        %v2427 = vunpack.c.l.b16 %v2356
        %v2428 = vunpack.c.l.b16 %v2358
        %v2429 = vunpack.c.l.b16 %v2359
        %v2430 = vunpack.c.l.b16 %v2361
        %v2431 = vunpack.c.l.b16 %v2362
        %v2432 = vunpack.c.l.b16 %v2364
        %v2433 = vunpack.c.l.b16 %v2365
        %v2434 = vunpack.c.l.b16 %v2367
        %v2435 = vunpack.c.l.b16 %v2368
        %v2436 = vunpack.c.l.b16 %v2370
        %v2437 = vunpack.c.l.b16 %v2371
        %v2438 = vunpack.c.l.b16 %v2373
        %v2439 = vunpack.c.l.b16 %v2374
        %v2440 = vpack.c.b16 %v2409, %v2408
        %v2441 = vpack.c.b16 %v2411, %v2410
        %v2442 = vpack.c.b16 %v2413, %v2412
        %v2443 = vpack.c.b16 %v2415, %v2414
        %v2444 = vpack.c.b16 %v2417, %v2416
        %v2445 = vpack.c.b16 %v2419, %v2418
        %v2446 = vpack.c.b16 %v2421, %v2420
        %v2447 = vpack.c.b16 %v2423, %v2422
        %v2448 = vpack.c.b16 %v2425, %v2424
        %v2449 = vpack.c.b16 %v2427, %v2426
        %v2450 = vpack.c.b16 %v2429, %v2428
        %v2451 = vpack.c.b16 %v2431, %v2430
        %v2452 = vpack.c.b16 %v2433, %v2432
        %v2453 = vpack.c.b16 %v2435, %v2434
        %v2454 = vpack.c.b16 %v2437, %v2436
        %v2455 = vpack.c.b16 %v2439, %v2438
        %v2488 = vunpack.c.l.b16 %v2330
        %v2489 = vunpack.c.l.b16 %v2333
        %v2490 = vunpack.c.l.b16 %v2336
        %v2491 = vunpack.c.l.b16 %v2339
        %v2492 = vunpack.c.l.b16 %v2342
        %v2493 = vunpack.c.l.b16 %v2345
        %v2494 = vunpack.c.l.b16 %v2348
        %v2495 = vunpack.c.l.b16 %v2351
        %v2496 = vunpack.c.l.b16 %v2354
        %v2497 = vunpack.c.l.b16 %v2357
        %v2498 = vunpack.c.l.b16 %v2360
        %v2499 = vunpack.c.l.b16 %v2363
        %v2500 = vunpack.c.l.b16 %v2366
        %v2501 = vunpack.c.l.b16 %v2369
        %v2502 = vunpack.c.l.b16 %v2372
        %v2503 = vunpack.c.l.b16 %v2375
        %v2504 = vpack.c.b16 %v2488, %v2488
        %v2505 = vpack.c.b16 %v2489, %v2489
        %v2506 = vpack.c.b16 %v2490, %v2490
        %v2507 = vpack.c.b16 %v2491, %v2491
        %v2508 = vpack.c.b16 %v2492, %v2492
        %v2509 = vpack.c.b16 %v2493, %v2493
        %v2510 = vpack.c.b16 %v2494, %v2494
        %v2511 = vpack.c.b16 %v2495, %v2495
        %v2512 = vpack.c.b16 %v2496, %v2496
        %v2513 = vpack.c.b16 %v2497, %v2497
        %v2514 = vpack.c.b16 %v2498, %v2498
        %v2515 = vpack.c.b16 %v2499, %v2499
        %v2516 = vpack.c.b16 %v2500, %v2500
        %v2517 = vpack.c.b16 %v2501, %v2501
        %v2518 = vpack.c.b16 %v2502, %v2502
        %v2519 = vpack.c.b16 %v2503, %v2503
        %v2521 = vshrl.u32 %v2440, 16
        %v2523 = vshll.u32 %v2440, 16
        %v2525 = vrot.slane %v2523, 1
        %v2526 = vor.u32 %v2521, %v2525
        %v2528 = vshll.u32 %v2504, 16
        %v2530 = vrot.slane %v2528, 1
        %v2531 = vsel %vm431, %v2526, %v2530
        %v2533 = vshrl.u32 %v2441, 16
        %v2535 = vshll.u32 %v2441, 16
        %v2537 = vrot.slane %v2535, 1
        %v2538 = vor.u32 %v2533, %v2537
        %v2540 = vshll.u32 %v2505, 16
        %v2542 = vrot.slane %v2540, 1
        %v2543 = vsel %vm431, %v2538, %v2542
        %v2545 = vshrl.u32 %v2442, 16
        %v2547 = vshll.u32 %v2442, 16
        %v2549 = vrot.slane %v2547, 1
        %v2550 = vor.u32 %v2545, %v2549
        %v2552 = vshll.u32 %v2506, 16
        %v2554 = vrot.slane %v2552, 1
        %v2555 = vsel %vm431, %v2550, %v2554
        %v2557 = vshrl.u32 %v2443, 16
        %v2559 = vshll.u32 %v2443, 16
        %v2561 = vrot.slane %v2559, 1
        %v2562 = vor.u32 %v2557, %v2561
        %v2564 = vshll.u32 %v2507, 16
        %v2566 = vrot.slane %v2564, 1
        %v2567 = vsel %vm431, %v2562, %v2566
        %v2569 = vshrl.u32 %v2444, 16
        %v2571 = vshll.u32 %v2444, 16
        %v2573 = vrot.slane %v2571, 1
        %v2574 = vor.u32 %v2569, %v2573
        %v2576 = vshll.u32 %v2508, 16
        %v2578 = vrot.slane %v2576, 1
        %v2579 = vsel %vm431, %v2574, %v2578
        %v2581 = vshrl.u32 %v2445, 16
        %v2583 = vshll.u32 %v2445, 16
        %v2585 = vrot.slane %v2583, 1
        %v2586 = vor.u32 %v2581, %v2585
        %v2588 = vshll.u32 %v2509, 16
        %v2590 = vrot.slane %v2588, 1
        %v2591 = vsel %vm431, %v2586, %v2590
        %v2593 = vshrl.u32 %v2446, 16
        %v2595 = vshll.u32 %v2446, 16
        %v2597 = vrot.slane %v2595, 1
        %v2598 = vor.u32 %v2593, %v2597
        %v2600 = vshll.u32 %v2510, 16
        %v2602 = vrot.slane %v2600, 1
        %v2603 = vsel %vm431, %v2598, %v2602
        %v2605 = vshrl.u32 %v2447, 16
        %v2607 = vshll.u32 %v2447, 16
        %v2609 = vrot.slane %v2607, 1
        %v2610 = vor.u32 %v2605, %v2609
        %v2612 = vshll.u32 %v2511, 16
        %v2614 = vrot.slane %v2612, 1
        %v2615 = vsel %vm431, %v2610, %v2614
        %v2617 = vshrl.u32 %v2448, 16
        %v2619 = vshll.u32 %v2448, 16
        %v2621 = vrot.slane %v2619, 1
        %v2622 = vor.u32 %v2617, %v2621
        %v2624 = vshll.u32 %v2512, 16
        %v2626 = vrot.slane %v2624, 1
        %v2627 = vsel %vm431, %v2622, %v2626
        %v2629 = vshrl.u32 %v2449, 16
        %v2631 = vshll.u32 %v2449, 16
        %v2633 = vrot.slane %v2631, 1
        %v2634 = vor.u32 %v2629, %v2633
        %v2636 = vshll.u32 %v2513, 16
        %v2638 = vrot.slane %v2636, 1
        %v2639 = vsel %vm431, %v2634, %v2638
        %v2641 = vshrl.u32 %v2450, 16
        %v2643 = vshll.u32 %v2450, 16
        %v2645 = vrot.slane %v2643, 1
        %v2646 = vor.u32 %v2641, %v2645
        %v2648 = vshll.u32 %v2514, 16
        %v2650 = vrot.slane %v2648, 1
        %v2651 = vsel %vm431, %v2646, %v2650
        %v2653 = vshrl.u32 %v2451, 16
        %v2655 = vshll.u32 %v2451, 16
        %v2657 = vrot.slane %v2655, 1
        %v2658 = vor.u32 %v2653, %v2657
        %v2660 = vshll.u32 %v2515, 16
        %v2662 = vrot.slane %v2660, 1
        %v2663 = vsel %vm431, %v2658, %v2662
        %v2665 = vshrl.u32 %v2452, 16
        %v2667 = vshll.u32 %v2452, 16
        %v2669 = vrot.slane %v2667, 1
        %v2670 = vor.u32 %v2665, %v2669
        %v2672 = vshll.u32 %v2516, 16
        %v2674 = vrot.slane %v2672, 1
        %v2675 = vsel %vm431, %v2670, %v2674
        %v2677 = vshrl.u32 %v2453, 16
        %v2679 = vshll.u32 %v2453, 16
        %v2681 = vrot.slane %v2679, 1
        %v2682 = vor.u32 %v2677, %v2681
        %v2684 = vshll.u32 %v2517, 16
        %v2686 = vrot.slane %v2684, 1
        %v2687 = vsel %vm431, %v2682, %v2686
        %v2689 = vshrl.u32 %v2454, 16
        %v2691 = vshll.u32 %v2454, 16
        %v2693 = vrot.slane %v2691, 1
        %v2694 = vor.u32 %v2689, %v2693
        %v2696 = vshll.u32 %v2518, 16
        %v2698 = vrot.slane %v2696, 1
        %v2699 = vsel %vm431, %v2694, %v2698
        %v2701 = vshrl.u32 %v2455, 16
        %v2703 = vshll.u32 %v2455, 16
        %v2705 = vrot.slane %v2703, 1
        %v2706 = vor.u32 %v2701, %v2705
        %v2708 = vshll.u32 %v2519, 16
        %v2710 = vrot.slane %v2708, 1
        %v2711 = vsel %vm431, %v2706, %v2710
        %v2728 = vrot.slane %v2440, 1
        %v2729 = vrot.slane %v2504, 1
        %v2730 = vsel %vm640, %v2728, %v2729
        %v2731 = vrot.slane %v2441, 1
        %v2732 = vrot.slane %v2505, 1
        %v2733 = vsel %vm640, %v2731, %v2732
        %v2734 = vrot.slane %v2442, 1
        %v2735 = vrot.slane %v2506, 1
        %v2736 = vsel %vm640, %v2734, %v2735
        %v2737 = vrot.slane %v2443, 1
        %v2738 = vrot.slane %v2507, 1
        %v2739 = vsel %vm640, %v2737, %v2738
        %v2740 = vrot.slane %v2444, 1
        %v2741 = vrot.slane %v2508, 1
        %v2742 = vsel %vm640, %v2740, %v2741
        %v2743 = vrot.slane %v2445, 1
        %v2744 = vrot.slane %v2509, 1
        %v2745 = vsel %vm640, %v2743, %v2744
        %v2746 = vrot.slane %v2446, 1
        %v2747 = vrot.slane %v2510, 1
        %v2748 = vsel %vm640, %v2746, %v2747
        %v2749 = vrot.slane %v2447, 1
        %v2750 = vrot.slane %v2511, 1
        %v2751 = vsel %vm640, %v2749, %v2750
        %v2752 = vrot.slane %v2448, 1
        %v2753 = vrot.slane %v2512, 1
        %v2754 = vsel %vm640, %v2752, %v2753
        %v2755 = vrot.slane %v2449, 1
        %v2756 = vrot.slane %v2513, 1
        %v2757 = vsel %vm640, %v2755, %v2756
        %v2758 = vrot.slane %v2450, 1
        %v2759 = vrot.slane %v2514, 1
        %v2760 = vsel %vm640, %v2758, %v2759
        %v2761 = vrot.slane %v2451, 1
        %v2762 = vrot.slane %v2515, 1
        %v2763 = vsel %vm640, %v2761, %v2762
        %v2764 = vrot.slane %v2452, 1
        %v2765 = vrot.slane %v2516, 1
        %v2766 = vsel %vm640, %v2764, %v2765
        %v2767 = vrot.slane %v2453, 1
        %v2768 = vrot.slane %v2517, 1
        %v2769 = vsel %vm640, %v2767, %v2768
        %v2770 = vrot.slane %v2454, 1
        %v2771 = vrot.slane %v2518, 1
        %v2772 = vsel %vm640, %v2770, %v2771
        %v2773 = vrot.slane %v2455, 1
        %v2774 = vrot.slane %v2519, 1
        %v2775 = vsel %vm640, %v2773, %v2774
        %s2792 = scalar_lea.vmem [#allocation6], 384
        %v2793 = vld [vmem:[%s2792] sm:$0xf]
        %v2794 = vld [vmem:[%s2792 + $0x4] sm:$0xf]
        %v2795 = vld [vmem:[%s2792 + $0x8] sm:$0xf]
        %v2796 = vld [vmem:[%s2792 + $0xc] sm:$0xf]
        %v2797 = vld [vmem:[%s2792 + $0x10] sm:$0xf]
        %v2798 = vld [vmem:[%s2792 + $0x14] sm:$0xf]
        %v2799 = vld [vmem:[%s2792 + $0x18] sm:$0xf]
        %v2800 = vld [vmem:[%s2792 + $0x1c] sm:$0xf]
        %v2801 = vld [vmem:[%s2792 + $0x20] sm:$0xf]
        %v2802 = vld [vmem:[%s2792 + $0x24] sm:$0xf]
        %v2803 = vld [vmem:[%s2792 + $0x28] sm:$0xf]
        %v2804 = vld [vmem:[%s2792 + $0x2c] sm:$0xf]
        %v2805 = vld [vmem:[%s2792 + $0x30] sm:$0xf]
        %v2806 = vld [vmem:[%s2792 + $0x34] sm:$0xf]
        %v2807 = vld [vmem:[%s2792 + $0x38] sm:$0xf]
        %v2808 = vld [vmem:[%s2792 + $0x3c] sm:$0xf]
        %v2809 = vld [vmem:[%s2792 + $0x40] sm:$0xf]
        %v2810 = vld [vmem:[%s2792 + $0x44] sm:$0xf]
        %v2811 = vld [vmem:[%s2792 + $0x48] sm:$0xf]
        %v2812 = vld [vmem:[%s2792 + $0x4c] sm:$0xf]
        %v2813 = vld [vmem:[%s2792 + $0x50] sm:$0xf]
        %v2814 = vld [vmem:[%s2792 + $0x54] sm:$0xf]
        %v2815 = vld [vmem:[%s2792 + $0x58] sm:$0xf]
        %v2816 = vld [vmem:[%s2792 + $0x5c] sm:$0xf]
        %v2817 = vld [vmem:[%s2792 + $0x60] sm:$0xf]
        %v2818 = vld [vmem:[%s2792 + $0x64] sm:$0xf]
        %v2819 = vld [vmem:[%s2792 + $0x68] sm:$0xf]
        %v2820 = vld [vmem:[%s2792 + $0x6c] sm:$0xf]
        %v2821 = vld [vmem:[%s2792 + $0x70] sm:$0xf]
        %v2822 = vld [vmem:[%s2792 + $0x74] sm:$0xf]
        %v2823 = vld [vmem:[%s2792 + $0x78] sm:$0xf]
        %v2824 = vld [vmem:[%s2792 + $0x7c] sm:$0xf]
        %v2825 = vld [vmem:[%s2792 + $0x80] sm:$0xf]
        %v2826 = vld [vmem:[%s2792 + $0x84] sm:$0xf]
        %v2827 = vld [vmem:[%s2792 + $0x88] sm:$0xf]
        %v2828 = vld [vmem:[%s2792 + $0x8c] sm:$0xf]
        %v2829 = vld [vmem:[%s2792 + $0x90] sm:$0xf]
        %v2830 = vld [vmem:[%s2792 + $0x94] sm:$0xf]
        %v2831 = vld [vmem:[%s2792 + $0x98] sm:$0xf]
        %v2832 = vld [vmem:[%s2792 + $0x9c] sm:$0xf]
        %v2833 = vld [vmem:[%s2792 + $0xa0] sm:$0xf]
        %v2834 = vld [vmem:[%s2792 + $0xa4] sm:$0xf]
        %v2835 = vld [vmem:[%s2792 + $0xa8] sm:$0xf]
        %v2836 = vld [vmem:[%s2792 + $0xac] sm:$0xf]
        %v2837 = vld [vmem:[%s2792 + $0xb0] sm:$0xf]
        %v2838 = vld [vmem:[%s2792 + $0xb4] sm:$0xf]
        %v2839 = vld [vmem:[%s2792 + $0xb8] sm:$0xf]
        %v2840 = vld [vmem:[%s2792 + $0xbc] sm:$0xf]
        %v2889 = vunpack.c.l.b16 %v2793
        %v2890 = vunpack.c.l.b16 %v2794
        %v2891 = vunpack.c.l.b16 %v2795
        %v2892 = vunpack.c.l.b16 %v2796
        %v2893 = vunpack.c.l.b16 %v2797
        %v2894 = vunpack.c.l.b16 %v2798
        %v2895 = vunpack.c.l.b16 %v2799
        %v2896 = vunpack.c.l.b16 %v2800
        %v2897 = vunpack.c.l.b16 %v2801
        %v2898 = vunpack.c.l.b16 %v2802
        %v2899 = vunpack.c.l.b16 %v2803
        %v2900 = vunpack.c.l.b16 %v2804
        %v2901 = vunpack.c.l.b16 %v2805
        %v2902 = vunpack.c.l.b16 %v2806
        %v2903 = vunpack.c.l.b16 %v2807
        %v2904 = vunpack.c.l.b16 %v2808
        %v2905 = vunpack.c.l.b16 %v2809
        %v2906 = vunpack.c.l.b16 %v2810
        %v2907 = vunpack.c.l.b16 %v2811
        %v2908 = vunpack.c.l.b16 %v2812
        %v2909 = vunpack.c.l.b16 %v2813
        %v2910 = vunpack.c.l.b16 %v2814
        %v2911 = vunpack.c.l.b16 %v2815
        %v2912 = vunpack.c.l.b16 %v2816
        %v2913 = vunpack.c.l.b16 %v2817
        %v2914 = vunpack.c.l.b16 %v2818
        %v2915 = vunpack.c.l.b16 %v2819
        %v2916 = vunpack.c.l.b16 %v2820
        %v2917 = vunpack.c.l.b16 %v2821
        %v2918 = vunpack.c.l.b16 %v2822
        %v2919 = vunpack.c.l.b16 %v2823
        %v2920 = vunpack.c.l.b16 %v2824
        %v2921 = vunpack.c.l.b16 %v2825
        %v2922 = vunpack.c.l.b16 %v2826
        %v2923 = vunpack.c.l.b16 %v2827
        %v2924 = vunpack.c.l.b16 %v2828
        %v2925 = vunpack.c.l.b16 %v2829
        %v2926 = vunpack.c.l.b16 %v2830
        %v2927 = vunpack.c.l.b16 %v2831
        %v2928 = vunpack.c.l.b16 %v2832
        %v2929 = vunpack.c.l.b16 %v2833
        %v2930 = vunpack.c.l.b16 %v2834
        %v2931 = vunpack.c.l.b16 %v2835
        %v2932 = vunpack.c.l.b16 %v2836
        %v2933 = vunpack.c.l.b16 %v2837
        %v2934 = vunpack.c.l.b16 %v2838
        %v2935 = vunpack.c.l.b16 %v2839
        %v2936 = vunpack.c.l.b16 %v2840
        %v2937 = vpack.c.b16 %v2890, %v2889
        %v2938 = vpack.c.b16 %v2892, %v2891
        %v2939 = vpack.c.b16 %v2894, %v2893
        %v2940 = vpack.c.b16 %v2896, %v2895
        %v2941 = vpack.c.b16 %v2898, %v2897
        %v2942 = vpack.c.b16 %v2900, %v2899
        %v2943 = vpack.c.b16 %v2902, %v2901
        %v2944 = vpack.c.b16 %v2904, %v2903
        %v2945 = vpack.c.b16 %v2906, %v2905
        %v2946 = vpack.c.b16 %v2908, %v2907
        %v2947 = vpack.c.b16 %v2910, %v2909
        %v2948 = vpack.c.b16 %v2912, %v2911
        %v2949 = vpack.c.b16 %v2914, %v2913
        %v2950 = vpack.c.b16 %v2916, %v2915
        %v2951 = vpack.c.b16 %v2918, %v2917
        %v2952 = vpack.c.b16 %v2920, %v2919
        %v2953 = vpack.c.b16 %v2922, %v2921
        %v2954 = vpack.c.b16 %v2924, %v2923
        %v2955 = vpack.c.b16 %v2926, %v2925
        %v2956 = vpack.c.b16 %v2928, %v2927
        %v2957 = vpack.c.b16 %v2930, %v2929
        %v2958 = vpack.c.b16 %v2932, %v2931
        %v2959 = vpack.c.b16 %v2934, %v2933
        %v2960 = vpack.c.b16 %v2936, %v2935
        %2985 = vmatprep.subr.bf16.mxu0 0
        %2986 = vmatpush1.bf16.msra.mxu0 %v2937
        %2987 = vmatprep.subr.bf16.mxu0 0
        %2988 = vmatpush1.bf16.msra.mxu0 %v2938
        %2989 = vmatprep.subr.bf16.mxu0 0
        %2990 = vmatpush1.bf16.msra.mxu0 %v2939
        %2991 = vmatprep.subr.bf16.mxu0 0
        %2992 = vmatpush1.bf16.msra.mxu0 %v2940
        %2993 = vmatprep.subr.bf16.mxu0 0
        %2994 = vmatpush1.bf16.msra.mxu0 %v2941
        %2995 = vmatprep.subr.bf16.mxu0 0
        %2996 = vmatpush1.bf16.msra.mxu0 %v2942
        %2997 = vmatprep.subr.bf16.mxu0 0
        %2998 = vmatpush1.bf16.msra.mxu0 %v2943
        %2999 = vmatprep.subr.bf16.mxu0 0
        %3000 = vmatpush1.bf16.msra.mxu0 %v2944
        %3001 = vmatprep.subr.bf16.mxu0 0
        %3002 = vmatpush1.bf16.msra.mxu0 %v2945
        %3003 = vmatprep.subr.bf16.mxu0 0
        %3004 = vmatpush1.bf16.msra.mxu0 %v2946
        %3005 = vmatprep.subr.bf16.mxu0 0
        %3006 = vmatpush1.bf16.msra.mxu0 %v2947
        %3007 = vmatprep.subr.bf16.mxu0 0
        %3008 = vmatpush1.bf16.msra.mxu0 %v2948
        %3009 = vmatprep.subr.bf16.mxu0 0
        %3010 = vmatpush1.bf16.msra.mxu0 %v2949
        %3011 = vmatprep.subr.bf16.mxu0 0
        %3012 = vmatpush1.bf16.msra.mxu0 %v2950
        %3013 = vmatprep.subr.bf16.mxu0 0
        %3014 = vmatpush1.bf16.msra.mxu0 %v2951
        %3015 = vmatprep.subr.bf16.mxu0 0
        %3016 = vmatpush1.bf16.msra.mxu0 %v2952
        %3017 = vmatprep.mubr.bf16.mxu0 %v2531
        %3018 = vmatmul.mubr.bf16.gmra.mrb[0].mxu0 %v2440
        %v3019 = vpop.f32.mrb[0].mxu0
        %v3020 = vadd.f32 0.0, %v3019
        %v3021 = vpop.f32.mrb[0].mxu0
        %v3022 = vpop.f32.mrb[0].mxu0
        %v3023 = vadd.f32 0.0, %v3022
        %v3024 = vpop.f32.mrb[0].mxu0
        %3025 = vmatprep.mubr.bf16.mxu0 %v2543
        %3026 = vmatmul.mubr.bf16.gmra.mrb[0].mxu0 %v2441
        %v3027 = vpop.f32.mrb[0].mxu0
        %v3028 = vadd.f32 0.0, %v3027
        %v3029 = vpop.f32.mrb[0].mxu0
        %v3030 = vpop.f32.mrb[0].mxu0
        %v3031 = vadd.f32 0.0, %v3030
        %v3032 = vpop.f32.mrb[0].mxu0
        %3033 = vmatprep.mubr.bf16.mxu0 %v2555
        %3034 = vmatmul.mubr.bf16.gmra.mrb[0].mxu0 %v2442
        %v3035 = vpop.f32.mrb[0].mxu0
        %v3036 = vadd.f32 0.0, %v3035
        %v3037 = vpop.f32.mrb[0].mxu0
        %v3038 = vpop.f32.mrb[0].mxu0
        %v3039 = vadd.f32 0.0, %v3038
        %v3040 = vpop.f32.mrb[0].mxu0
        %3041 = vmatprep.mubr.bf16.mxu0 %v2567
        %3042 = vmatmul.mubr.bf16.gmra.mrb[0].mxu0 %v2443
        %v3043 = vpop.f32.mrb[0].mxu0
        %v3044 = vadd.f32 0.0, %v3043
        %v3045 = vpop.f32.mrb[0].mxu0
        %v3046 = vpop.f32.mrb[0].mxu0
        %v3047 = vadd.f32 0.0, %v3046
        %v3048 = vpop.f32.mrb[0].mxu0
        %3049 = vmatprep.mubr.bf16.mxu0 %v2579
        %3050 = vmatmul.mubr.bf16.gmra.mrb[0].mxu0 %v2444
        %v3051 = vpop.f32.mrb[0].mxu0
        %v3052 = vadd.f32 0.0, %v3051
        %v3053 = vpop.f32.mrb[0].mxu0
        %v3054 = vpop.f32.mrb[0].mxu0
        %v3055 = vadd.f32 0.0, %v3054
        %v3056 = vpop.f32.mrb[0].mxu0
        %3057 = vmatprep.mubr.bf16.mxu0 %v2591
        %3058 = vmatmul.mubr.bf16.gmra.mrb[0].mxu0 %v2445
        %v3059 = vpop.f32.mrb[0].mxu0
        %v3060 = vadd.f32 0.0, %v3059
        %v3061 = vpop.f32.mrb[0].mxu0
        %v3062 = vpop.f32.mrb[0].mxu0
        %v3063 = vadd.f32 0.0, %v3062
        %v3064 = vpop.f32.mrb[0].mxu0
        %3065 = vmatprep.mubr.bf16.mxu0 %v2603
        %3066 = vmatmul.mubr.bf16.gmra.mrb[0].mxu0 %v2446
        %v3067 = vpop.f32.mrb[0].mxu0
        %v3068 = vadd.f32 0.0, %v3067
        %v3069 = vpop.f32.mrb[0].mxu0
        %v3070 = vpop.f32.mrb[0].mxu0
        %v3071 = vadd.f32 0.0, %v3070
        %v3072 = vpop.f32.mrb[0].mxu0
        %3073 = vmatprep.mubr.bf16.mxu0 %v2615
        %3074 = vmatmul.mubr.bf16.gmra.mrb[0].mxu0 %v2447
        %v3075 = vpop.f32.mrb[0].mxu0
        %v3076 = vadd.f32 0.0, %v3075
        %v3077 = vpop.f32.mrb[0].mxu0
        %v3078 = vpop.f32.mrb[0].mxu0
        %v3079 = vadd.f32 0.0, %v3078
        %v3080 = vpop.f32.mrb[0].mxu0
        %3081 = vmatprep.mubr.bf16.mxu0 %v2627
        %3082 = vmatmul.mubr.bf16.gmra.mrb[0].mxu0 %v2448
        %v3083 = vpop.f32.mrb[0].mxu0
        %v3084 = vadd.f32 0.0, %v3083
        %v3085 = vpop.f32.mrb[0].mxu0
        %v3086 = vpop.f32.mrb[0].mxu0
        %v3087 = vadd.f32 0.0, %v3086
        %v3088 = vpop.f32.mrb[0].mxu0
        %3089 = vmatprep.mubr.bf16.mxu0 %v2639
        %3090 = vmatmul.mubr.bf16.gmra.mrb[0].mxu0 %v2449
        %v3091 = vpop.f32.mrb[0].mxu0
        %v3092 = vadd.f32 0.0, %v3091
        %v3093 = vpop.f32.mrb[0].mxu0
        %v3094 = vpop.f32.mrb[0].mxu0
        %v3095 = vadd.f32 0.0, %v3094
        %v3096 = vpop.f32.mrb[0].mxu0
        %3097 = vmatprep.mubr.bf16.mxu0 %v2651
        %3098 = vmatmul.mubr.bf16.gmra.mrb[0].mxu0 %v2450
        %v3099 = vpop.f32.mrb[0].mxu0
        %v3100 = vadd.f32 0.0, %v3099
        %v3101 = vpop.f32.mrb[0].mxu0
        %v3102 = vpop.f32.mrb[0].mxu0
        %v3103 = vadd.f32 0.0, %v3102
        %v3104 = vpop.f32.mrb[0].mxu0
        %3105 = vmatprep.mubr.bf16.mxu0 %v2663
        %3106 = vmatmul.mubr.bf16.gmra.mrb[0].mxu0 %v2451
        %v3107 = vpop.f32.mrb[0].mxu0
        %v3108 = vadd.f32 0.0, %v3107
        %v3109 = vpop.f32.mrb[0].mxu0
        %v3110 = vpop.f32.mrb[0].mxu0
        %v3111 = vadd.f32 0.0, %v3110
        %v3112 = vpop.f32.mrb[0].mxu0
        %3113 = vmatprep.mubr.bf16.mxu0 %v2675
        %3114 = vmatmul.mubr.bf16.gmra.mrb[0].mxu0 %v2452
        %v3115 = vpop.f32.mrb[0].mxu0
        %v3116 = vadd.f32 0.0, %v3115
        %v3117 = vpop.f32.mrb[0].mxu0
        %v3118 = vpop.f32.mrb[0].mxu0
        %v3119 = vadd.f32 0.0, %v3118
        %v3120 = vpop.f32.mrb[0].mxu0
        %3121 = vmatprep.mubr.bf16.mxu0 %v2687
        %3122 = vmatmul.mubr.bf16.gmra.mrb[0].mxu0 %v2453
        %v3123 = vpop.f32.mrb[0].mxu0
        %v3124 = vadd.f32 0.0, %v3123
        %v3125 = vpop.f32.mrb[0].mxu0
        %v3126 = vpop.f32.mrb[0].mxu0
        %v3127 = vadd.f32 0.0, %v3126
        %v3128 = vpop.f32.mrb[0].mxu0
        %3129 = vmatprep.mubr.bf16.mxu0 %v2699
        %3130 = vmatmul.mubr.bf16.gmra.mrb[0].mxu0 %v2454
        %v3131 = vpop.f32.mrb[0].mxu0
        %v3132 = vadd.f32 0.0, %v3131
        %v3133 = vpop.f32.mrb[0].mxu0
        %v3134 = vpop.f32.mrb[0].mxu0
        %v3135 = vadd.f32 0.0, %v3134
        %v3136 = vpop.f32.mrb[0].mxu0
        %3137 = vmatprep.mubr.bf16.mxu0 %v2711
        %3138 = vmatmul.mubr.bf16.gmra.mrb[0].mxu0 %v2455
        %v3139 = vpop.f32.mrb[0].mxu0
        %v3140 = vadd.f32 0.0, %v3139
        %v3141 = vpop.f32.mrb[0].mxu0
        %v3142 = vpop.f32.mrb[0].mxu0
        %v3143 = vadd.f32 0.0, %v3142
        %v3144 = vpop.f32.mrb[0].mxu0
        %3145 = vdwg.mxu0
        %3146 = vmatprep.subr.bf16.mxu0 0
        %3147 = vmatpush1.bf16.msra.mxu0 %v2953
        %3148 = vmatprep.subr.bf16.mxu0 0
        %3149 = vmatpush1.bf16.msra.mxu0 %v2954
        %3150 = vmatprep.subr.bf16.mxu0 0
        %3151 = vmatpush1.bf16.msra.mxu0 %v2955
        %3152 = vmatprep.subr.bf16.mxu0 0
        %3153 = vmatpush1.bf16.msra.mxu0 %v2956
        %3154 = vmatprep.subr.bf16.mxu0 0
        %3155 = vmatpush1.bf16.msra.mxu0 %v2957
        %3156 = vmatprep.subr.bf16.mxu0 0
        %3157 = vmatpush1.bf16.msra.mxu0 %v2958
        %3158 = vmatprep.subr.bf16.mxu0 0
        %3159 = vmatpush1.bf16.msra.mxu0 %v2959
        %3160 = vmatprep.subr.bf16.mxu0 0
        %3161 = vmatpush1.bf16.msra.mxu0 %v2960
        %3162 = vmatprep.subr.bf16.mxu0 0
        %3163 = vmatpush1.bf16.msra.mxu0 0
        %3164 = vmatprep.subr.bf16.mxu0 0
        %3165 = vmatpush1.bf16.msra.mxu0 0
        %3166 = vmatprep.subr.bf16.mxu0 0
        %3167 = vmatpush1.bf16.msra.mxu0 0
        %3168 = vmatprep.subr.bf16.mxu0 0
        %3169 = vmatpush1.bf16.msra.mxu0 0
        %3170 = vmatprep.subr.bf16.mxu0 0
        %3171 = vmatpush1.bf16.msra.mxu0 0
        %3172 = vmatprep.subr.bf16.mxu0 0
        %3173 = vmatpush1.bf16.msra.mxu0 0
        %3174 = vmatprep.subr.bf16.mxu0 0
        %3175 = vmatpush1.bf16.msra.mxu0 0
        %3176 = vmatprep.subr.bf16.mxu0 0
        %3177 = vmatpush1.bf16.msra.mxu0 0
        %3178 = vmatprep.mubr.bf16.mxu0 0
        %3179 = vmatmul.mubr.bf16.gmra.mrb[0].mxu0 %v2730
        %v3180 = vpop.f32.mrb[0].mxu0
        %v3181 = vadd.f32 %v3020, %v3180
        %v3182 = vpop.f32.mrb[0].mxu0
        %v3183 = vpop.f32.mrb[0].mxu0
        %v3184 = vadd.f32 %v3023, %v3183
        %v3185 = vpop.f32.mrb[0].mxu0
        %3186 = vmatprep.mubr.bf16.mxu0 0
        %3187 = vmatmul.mubr.bf16.gmra.mrb[0].mxu0 %v2733
        %v3188 = vpop.f32.mrb[0].mxu0
        %v3189 = vadd.f32 %v3028, %v3188
        %v3190 = vpop.f32.mrb[0].mxu0
        %v3191 = vpop.f32.mrb[0].mxu0
        %v3192 = vadd.f32 %v3031, %v3191
        %v3193 = vpop.f32.mrb[0].mxu0
        %3194 = vmatprep.mubr.bf16.mxu0 0
        %3195 = vmatmul.mubr.bf16.gmra.mrb[0].mxu0 %v2736
        %v3196 = vpop.f32.mrb[0].mxu0
        %v3197 = vadd.f32 %v3036, %v3196
        %v3198 = vpop.f32.mrb[0].mxu0
        %v3199 = vpop.f32.mrb[0].mxu0
        %v3200 = vadd.f32 %v3039, %v3199
        %v3201 = vpop.f32.mrb[0].mxu0
        %3202 = vmatprep.mubr.bf16.mxu0 0
        %3203 = vmatmul.mubr.bf16.gmra.mrb[0].mxu0 %v2739
        %v3204 = vpop.f32.mrb[0].mxu0
        %v3205 = vadd.f32 %v3044, %v3204
        %v3206 = vpop.f32.mrb[0].mxu0
        %v3207 = vpop.f32.mrb[0].mxu0
        %v3208 = vadd.f32 %v3047, %v3207
        %v3209 = vpop.f32.mrb[0].mxu0
        %3210 = vmatprep.mubr.bf16.mxu0 0
        %3211 = vmatmul.mubr.bf16.gmra.mrb[0].mxu0 %v2742
        %v3212 = vpop.f32.mrb[0].mxu0
        %v3213 = vadd.f32 %v3052, %v3212
        %v3214 = vpop.f32.mrb[0].mxu0
        %v3215 = vpop.f32.mrb[0].mxu0
        %v3216 = vadd.f32 %v3055, %v3215
        %v3217 = vpop.f32.mrb[0].mxu0
        %3218 = vmatprep.mubr.bf16.mxu0 0
        %3219 = vmatmul.mubr.bf16.gmra.mrb[0].mxu0 %v2745
        %v3220 = vpop.f32.mrb[0].mxu0
        %v3221 = vadd.f32 %v3060, %v3220
        %v3222 = vpop.f32.mrb[0].mxu0
        %v3223 = vpop.f32.mrb[0].mxu0
        %v3224 = vadd.f32 %v3063, %v3223
        %v3225 = vpop.f32.mrb[0].mxu0
        %3226 = vmatprep.mubr.bf16.mxu0 0
        %3227 = vmatmul.mubr.bf16.gmra.mrb[0].mxu0 %v2748
        %v3228 = vpop.f32.mrb[0].mxu0
        %v3229 = vadd.f32 %v3068, %v3228
        %v3230 = vpop.f32.mrb[0].mxu0
        %v3231 = vpop.f32.mrb[0].mxu0
        %v3232 = vadd.f32 %v3071, %v3231
        %v3233 = vpop.f32.mrb[0].mxu0
        %3234 = vmatprep.mubr.bf16.mxu0 0
        %3235 = vmatmul.mubr.bf16.gmra.mrb[0].mxu0 %v2751
        %v3236 = vpop.f32.mrb[0].mxu0
        %v3237 = vadd.f32 %v3076, %v3236
        %v3238 = vpop.f32.mrb[0].mxu0
        %v3239 = vpop.f32.mrb[0].mxu0
        %v3240 = vadd.f32 %v3079, %v3239
        %v3241 = vpop.f32.mrb[0].mxu0
        %3242 = vmatprep.mubr.bf16.mxu0 0
        %3243 = vmatmul.mubr.bf16.gmra.mrb[0].mxu0 %v2754
        %v3244 = vpop.f32.mrb[0].mxu0
        %v3245 = vadd.f32 %v3084, %v3244
        %v3246 = vpop.f32.mrb[0].mxu0
        %v3247 = vpop.f32.mrb[0].mxu0
        %v3248 = vadd.f32 %v3087, %v3247
        %v3249 = vpop.f32.mrb[0].mxu0
        %3250 = vmatprep.mubr.bf16.mxu0 0
        %3251 = vmatmul.mubr.bf16.gmra.mrb[0].mxu0 %v2757
        %v3252 = vpop.f32.mrb[0].mxu0
        %v3253 = vadd.f32 %v3092, %v3252
        %v3254 = vpop.f32.mrb[0].mxu0
        %v3255 = vpop.f32.mrb[0].mxu0
        %v3256 = vadd.f32 %v3095, %v3255
        %v3257 = vpop.f32.mrb[0].mxu0
        %3258 = vmatprep.mubr.bf16.mxu0 0
        %3259 = vmatmul.mubr.bf16.gmra.mrb[0].mxu0 %v2760
        %v3260 = vpop.f32.mrb[0].mxu0
        %v3261 = vadd.f32 %v3100, %v3260
        %v3262 = vpop.f32.mrb[0].mxu0
        %v3263 = vpop.f32.mrb[0].mxu0
        %v3264 = vadd.f32 %v3103, %v3263
        %v3265 = vpop.f32.mrb[0].mxu0
        %3266 = vmatprep.mubr.bf16.mxu0 0
        %3267 = vmatmul.mubr.bf16.gmra.mrb[0].mxu0 %v2763
        %v3268 = vpop.f32.mrb[0].mxu0
        %v3269 = vadd.f32 %v3108, %v3268
        %v3270 = vpop.f32.mrb[0].mxu0
        %v3271 = vpop.f32.mrb[0].mxu0
        %v3272 = vadd.f32 %v3111, %v3271
        %v3273 = vpop.f32.mrb[0].mxu0
        %3274 = vmatprep.mubr.bf16.mxu0 0
        %3275 = vmatmul.mubr.bf16.gmra.mrb[0].mxu0 %v2766
        %v3276 = vpop.f32.mrb[0].mxu0
        %v3277 = vadd.f32 %v3116, %v3276
        %v3278 = vpop.f32.mrb[0].mxu0
        %v3279 = vpop.f32.mrb[0].mxu0
        %v3280 = vadd.f32 %v3119, %v3279
        %v3281 = vpop.f32.mrb[0].mxu0
        %3282 = vmatprep.mubr.bf16.mxu0 0
        %3283 = vmatmul.mubr.bf16.gmra.mrb[0].mxu0 %v2769
        %v3284 = vpop.f32.mrb[0].mxu0
        %v3285 = vadd.f32 %v3124, %v3284
        %v3286 = vpop.f32.mrb[0].mxu0
        %v3287 = vpop.f32.mrb[0].mxu0
        %v3288 = vadd.f32 %v3127, %v3287
        %v3289 = vpop.f32.mrb[0].mxu0
        %3290 = vmatprep.mubr.bf16.mxu0 0
        %3291 = vmatmul.mubr.bf16.gmra.mrb[0].mxu0 %v2772
        %v3292 = vpop.f32.mrb[0].mxu0
        %v3293 = vadd.f32 %v3132, %v3292
        %v3294 = vpop.f32.mrb[0].mxu0
        %v3295 = vpop.f32.mrb[0].mxu0
        %v3296 = vadd.f32 %v3135, %v3295
        %v3297 = vpop.f32.mrb[0].mxu0
        %3298 = vmatprep.mubr.bf16.mxu0 0
        %3299 = vmatmul.mubr.bf16.gmra.mrb[0].mxu0 %v2775
        %v3300 = vpop.f32.mrb[0].mxu0
        %v3301 = vadd.f32 %v3140, %v3300
        %v3302 = vpop.f32.mrb[0].mxu0
        %v3303 = vpop.f32.mrb[0].mxu0
        %v3304 = vadd.f32 %v3143, %v3303
        %v3305 = vpop.f32.mrb[0].mxu0
        %3306 = vdwg.mxu0
        %v3307 = vld [vmem:[#allocation2] sm:$0xff]
        %v3308 = vld [vmem:[#allocation2 + $0x8] sm:$0xff]
        %v3309 = vld [vmem:[#allocation2 + $0x10] sm:$0xff]
        %v3310 = vld [vmem:[#allocation2 + $0x18] sm:$0xff]
        %v3311 = vld [vmem:[#allocation2 + $0x20] sm:$0xff]
        %v3312 = vld [vmem:[#allocation2 + $0x28] sm:$0xff]
        %v3313 = vld [vmem:[#allocation2 + $0x30] sm:$0xff]
        %v3314 = vld [vmem:[#allocation2 + $0x38] sm:$0xff]
        %v3315 = vld [vmem:[#allocation2 + $0x40] sm:$0xff]
        %v3316 = vld [vmem:[#allocation2 + $0x48] sm:$0xff]
        %v3317 = vld [vmem:[#allocation2 + $0x50] sm:$0xff]
        %v3318 = vld [vmem:[#allocation2 + $0x58] sm:$0xff]
        %v3319 = vld [vmem:[#allocation2 + $0x60] sm:$0xff]
        %v3320 = vld [vmem:[#allocation2 + $0x68] sm:$0xff]
        %v3321 = vld [vmem:[#allocation2 + $0x70] sm:$0xff]
        %v3322 = vld [vmem:[#allocation2 + $0x78] sm:$0xff]
        %v3323 = vld [vmem:[#allocation2 + $0x80] sm:$0xff]
        %v3324 = vld [vmem:[#allocation2 + $0x88] sm:$0xff]
        %v3325 = vld [vmem:[#allocation2 + $0x90] sm:$0xff]
        %v3326 = vld [vmem:[#allocation2 + $0x98] sm:$0xff]
        %v3327 = vld [vmem:[#allocation2 + $0xa0] sm:$0xff]
        %v3328 = vld [vmem:[#allocation2 + $0xa8] sm:$0xff]
        %v3329 = vld [vmem:[#allocation2 + $0xb0] sm:$0xff]
        %v3330 = vld [vmem:[#allocation2 + $0xb8] sm:$0xff]
        %v3331 = vld [vmem:[#allocation2 + $0xc0] sm:$0xff]
        %v3332 = vld [vmem:[#allocation2 + $0xc8] sm:$0xff]
        %v3333 = vld [vmem:[#allocation2 + $0xd0] sm:$0xff]
        %v3334 = vld [vmem:[#allocation2 + $0xd8] sm:$0xff]
        %v3335 = vld [vmem:[#allocation2 + $0xe0] sm:$0xff]
        %v3336 = vld [vmem:[#allocation2 + $0xe8] sm:$0xff]
        %v3337 = vld [vmem:[#allocation2 + $0xf0] sm:$0xff]
        %v3338 = vld [vmem:[#allocation2 + $0xf8] sm:$0xff]
        %v3339 = vadd.f32 %v3307, %v3181
        %v3340 = vadd.f32 %v3308, %v3184
        %v3341 = vadd.f32 %v3309, %v3189
        %v3342 = vadd.f32 %v3310, %v3192
        %v3343 = vadd.f32 %v3311, %v3197
        %v3344 = vadd.f32 %v3312, %v3200
        %v3345 = vadd.f32 %v3313, %v3205
        %v3346 = vadd.f32 %v3314, %v3208
        %v3347 = vadd.f32 %v3315, %v3213
        %v3348 = vadd.f32 %v3316, %v3216
        %v3349 = vadd.f32 %v3317, %v3221
        %v3350 = vadd.f32 %v3318, %v3224
        %v3351 = vadd.f32 %v3319, %v3229
        %v3352 = vadd.f32 %v3320, %v3232
        %v3353 = vadd.f32 %v3321, %v3237
        %v3354 = vadd.f32 %v3322, %v3240
        %v3355 = vadd.f32 %v3323, %v3245
        %v3356 = vadd.f32 %v3324, %v3248
        %v3357 = vadd.f32 %v3325, %v3253
        %v3358 = vadd.f32 %v3326, %v3256
        %v3359 = vadd.f32 %v3327, %v3261
        %v3360 = vadd.f32 %v3328, %v3264
        %v3361 = vadd.f32 %v3329, %v3269
        %v3362 = vadd.f32 %v3330, %v3272
        %v3363 = vadd.f32 %v3331, %v3277
        %v3364 = vadd.f32 %v3332, %v3280
        %v3365 = vadd.f32 %v3333, %v3285
        %v3366 = vadd.f32 %v3334, %v3288
        %v3367 = vadd.f32 %v3335, %v3293
        %v3368 = vadd.f32 %v3336, %v3296
        %v3369 = vadd.f32 %v3337, %v3301
        %v3370 = vadd.f32 %v3338, %v3304
        %3371 = vst [vmem:[#allocation2] sm:$0xff] %v3339
        %3372 = vst [vmem:[#allocation2 + $0x8] sm:$0xff] %v3340
        %3373 = vst [vmem:[#allocation2 + $0x10] sm:$0xff] %v3341
        %3374 = vst [vmem:[#allocation2 + $0x18] sm:$0xff] %v3342
        %3375 = vst [vmem:[#allocation2 + $0x20] sm:$0xff] %v3343
        %3376 = vst [vmem:[#allocation2 + $0x28] sm:$0xff] %v3344
        %3377 = vst [vmem:[#allocation2 + $0x30] sm:$0xff] %v3345
        %3378 = vst [vmem:[#allocation2 + $0x38] sm:$0xff] %v3346
        %3379 = vst [vmem:[#allocation2 + $0x40] sm:$0xff] %v3347
        %3380 = vst [vmem:[#allocation2 + $0x48] sm:$0xff] %v3348
        %3381 = vst [vmem:[#allocation2 + $0x50] sm:$0xff] %v3349
        %3382 = vst [vmem:[#allocation2 + $0x58] sm:$0xff] %v3350
        %3383 = vst [vmem:[#allocation2 + $0x60] sm:$0xff] %v3351
        %3384 = vst [vmem:[#allocation2 + $0x68] sm:$0xff] %v3352
        %3385 = vst [vmem:[#allocation2 + $0x70] sm:$0xff] %v3353
        %3386 = vst [vmem:[#allocation2 + $0x78] sm:$0xff] %v3354
        %3387 = vst [vmem:[#allocation2 + $0x80] sm:$0xff] %v3355
        %3388 = vst [vmem:[#allocation2 + $0x88] sm:$0xff] %v3356
        %3389 = vst [vmem:[#allocation2 + $0x90] sm:$0xff] %v3357
        %3390 = vst [vmem:[#allocation2 + $0x98] sm:$0xff] %v3358
        %3391 = vst [vmem:[#allocation2 + $0xa0] sm:$0xff] %v3359
        %3392 = vst [vmem:[#allocation2 + $0xa8] sm:$0xff] %v3360
        %3393 = vst [vmem:[#allocation2 + $0xb0] sm:$0xff] %v3361
        %3394 = vst [vmem:[#allocation2 + $0xb8] sm:$0xff] %v3362
        %3395 = vst [vmem:[#allocation2 + $0xc0] sm:$0xff] %v3363
        %3396 = vst [vmem:[#allocation2 + $0xc8] sm:$0xff] %v3364
        %3397 = vst [vmem:[#allocation2 + $0xd0] sm:$0xff] %v3365
        %3398 = vst [vmem:[#allocation2 + $0xd8] sm:$0xff] %v3366
        %3399 = vst [vmem:[#allocation2 + $0xe0] sm:$0xff] %v3367
        %3400 = vst [vmem:[#allocation2 + $0xe8] sm:$0xff] %v3368
        %3401 = vst [vmem:[#allocation2 + $0xf0] sm:$0xff] %v3369
        %3402 = vst [vmem:[#allocation2 + $0xf8] sm:$0xff] %v3370
        %v3403 = vld [vmem:[#allocation2] sm:$0xff]
        %v3404 = vld [vmem:[#allocation2 + $0x8] sm:$0xff]
        %v3405 = vld [vmem:[#allocation2 + $0x10] sm:$0xff]
        %v3406 = vld [vmem:[#allocation2 + $0x18] sm:$0xff]
        %v3407 = vld [vmem:[#allocation2 + $0x20] sm:$0xff]
        %v3408 = vld [vmem:[#allocation2 + $0x28] sm:$0xff]
        %v3409 = vld [vmem:[#allocation2 + $0x30] sm:$0xff]
        %v3410 = vld [vmem:[#allocation2 + $0x38] sm:$0xff]
        %v3411 = vld [vmem:[#allocation2 + $0x40] sm:$0xff]
        %v3412 = vld [vmem:[#allocation2 + $0x48] sm:$0xff]
        %v3413 = vld [vmem:[#allocation2 + $0x50] sm:$0xff]
        %v3414 = vld [vmem:[#allocation2 + $0x58] sm:$0xff]
        %v3415 = vld [vmem:[#allocation2 + $0x60] sm:$0xff]
        %v3416 = vld [vmem:[#allocation2 + $0x68] sm:$0xff]
        %v3417 = vld [vmem:[#allocation2 + $0x70] sm:$0xff]
        %v3418 = vld [vmem:[#allocation2 + $0x78] sm:$0xff]
        %v3419 = vld [vmem:[#allocation2 + $0x80] sm:$0xff]
        %v3420 = vld [vmem:[#allocation2 + $0x88] sm:$0xff]
        %v3421 = vld [vmem:[#allocation2 + $0x90] sm:$0xff]
        %v3422 = vld [vmem:[#allocation2 + $0x98] sm:$0xff]
        %v3423 = vld [vmem:[#allocation2 + $0xa0] sm:$0xff]
        %v3424 = vld [vmem:[#allocation2 + $0xa8] sm:$0xff]
        %v3425 = vld [vmem:[#allocation2 + $0xb0] sm:$0xff]
        %v3426 = vld [vmem:[#allocation2 + $0xb8] sm:$0xff]
        %v3427 = vld [vmem:[#allocation2 + $0xc0] sm:$0xff]
        %v3428 = vld [vmem:[#allocation2 + $0xc8] sm:$0xff]
        %v3429 = vld [vmem:[#allocation2 + $0xd0] sm:$0xff]
        %v3430 = vld [vmem:[#allocation2 + $0xd8] sm:$0xff]
        %v3431 = vld [vmem:[#allocation2 + $0xe0] sm:$0xff]
        %v3432 = vld [vmem:[#allocation2 + $0xe8] sm:$0xff]
        %v3433 = vld [vmem:[#allocation2 + $0xf0] sm:$0xff]
        %v3434 = vld [vmem:[#allocation2 + $0xf8] sm:$0xff]
        %v3435 = vpack.c.bf16 %v3404, %v3403
        %v3436 = vpack.c.bf16 %v3406, %v3405
        %v3437 = vpack.c.bf16 %v3408, %v3407
        %v3438 = vpack.c.bf16 %v3410, %v3409
        %v3439 = vpack.c.bf16 %v3412, %v3411
        %v3440 = vpack.c.bf16 %v3414, %v3413
        %v3441 = vpack.c.bf16 %v3416, %v3415
        %v3442 = vpack.c.bf16 %v3418, %v3417
        %v3443 = vpack.c.bf16 %v3420, %v3419
        %v3444 = vpack.c.bf16 %v3422, %v3421
        %v3445 = vpack.c.bf16 %v3424, %v3423
        %v3446 = vpack.c.bf16 %v3426, %v3425
        %v3447 = vpack.c.bf16 %v3428, %v3427
        %v3448 = vpack.c.bf16 %v3430, %v3429
        %v3449 = vpack.c.bf16 %v3432, %v3431
        %v3450 = vpack.c.bf16 %v3434, %v3433
        %v3467 = vunpack.c.l.b16 %v3435
        %v3468 = vunpack.c.h.b16 %v3435
        %v3469 = vunpack.c.l.b16 %v3436
        %v3470 = vunpack.c.h.b16 %v3436
        %v3471 = vunpack.c.l.b16 %v3437
        %v3472 = vunpack.c.h.b16 %v3437
        %v3473 = vunpack.c.l.b16 %v3438
        %v3474 = vunpack.c.h.b16 %v3438
        %v3475 = vunpack.c.l.b16 %v3439
        %v3476 = vunpack.c.h.b16 %v3439
        %v3477 = vunpack.c.l.b16 %v3440
        %v3478 = vunpack.c.h.b16 %v3440
        %v3479 = vunpack.c.l.b16 %v3441
        %v3480 = vunpack.c.h.b16 %v3441
        %v3481 = vunpack.c.l.b16 %v3442
        %v3482 = vunpack.c.h.b16 %v3442
        %v3483 = vunpack.c.l.b16 %v3443
        %v3484 = vunpack.c.h.b16 %v3443
        %v3485 = vunpack.c.l.b16 %v3444
        %v3486 = vunpack.c.h.b16 %v3444
        %v3487 = vunpack.c.l.b16 %v3445
        %v3488 = vunpack.c.h.b16 %v3445
        %v3489 = vunpack.c.l.b16 %v3446
        %v3490 = vunpack.c.h.b16 %v3446
        %v3491 = vunpack.c.l.b16 %v3447
        %v3492 = vunpack.c.h.b16 %v3447
        %v3493 = vunpack.c.l.b16 %v3448
        %v3494 = vunpack.c.h.b16 %v3448
        %v3495 = vunpack.c.l.b16 %v3449
        %v3496 = vunpack.c.h.b16 %v3449
        %v3497 = vunpack.c.l.b16 %v3450
        %v3498 = vunpack.c.h.b16 %v3450
        %v3499 = vpack.c.b16 %v3467, %v3467
        %v3500 = vpack.c.b16 %v3468, %v3468
        %v3501 = vpack.c.b16 %v3469, %v3469
        %v3502 = vpack.c.b16 %v3470, %v3470
        %v3503 = vpack.c.b16 %v3471, %v3471
        %v3504 = vpack.c.b16 %v3472, %v3472
        %v3505 = vpack.c.b16 %v3473, %v3473
        %v3506 = vpack.c.b16 %v3474, %v3474
        %v3507 = vpack.c.b16 %v3475, %v3475
        %v3508 = vpack.c.b16 %v3476, %v3476
        %v3509 = vpack.c.b16 %v3477, %v3477
        %v3510 = vpack.c.b16 %v3478, %v3478
        %v3511 = vpack.c.b16 %v3479, %v3479
        %v3512 = vpack.c.b16 %v3480, %v3480
        %v3513 = vpack.c.b16 %v3481, %v3481
        %v3514 = vpack.c.b16 %v3482, %v3482
        %v3515 = vpack.c.b16 %v3483, %v3483
        %v3516 = vpack.c.b16 %v3484, %v3484
        %v3517 = vpack.c.b16 %v3485, %v3485
        %v3518 = vpack.c.b16 %v3486, %v3486
        %v3519 = vpack.c.b16 %v3487, %v3487
        %v3520 = vpack.c.b16 %v3488, %v3488
        %v3521 = vpack.c.b16 %v3489, %v3489
        %v3522 = vpack.c.b16 %v3490, %v3490
        %v3523 = vpack.c.b16 %v3491, %v3491
        %v3524 = vpack.c.b16 %v3492, %v3492
        %v3525 = vpack.c.b16 %v3493, %v3493
        %v3526 = vpack.c.b16 %v3494, %v3494
        %v3527 = vpack.c.b16 %v3495, %v3495
        %v3528 = vpack.c.b16 %v3496, %v3496
        %v3529 = vpack.c.b16 %v3497, %v3497
        %v3530 = vpack.c.b16 %v3498, %v3498
        %3563 = vst [vmem:[%s230] sm:$0xf] %v3499
        %3564 = vst [vmem:[%s230 + $0x4] sm:$0xf] %v3500
        %3565 = vst [vmem:[%s230 + $0x8] sm:$0xf] %v3501
        %3566 = vst [vmem:[%s230 + $0xc] sm:$0xf] %v3502
        %3567 = vst [vmem:[%s230 + $0x10] sm:$0xf] %v3503
        %3568 = vst [vmem:[%s230 + $0x14] sm:$0xf] %v3504
        %3569 = vst [vmem:[%s230 + $0x18] sm:$0xf] %v3505
        %3570 = vst [vmem:[%s230 + $0x1c] sm:$0xf] %v3506
        %3571 = vst [vmem:[%s230 + $0x20] sm:$0xf] %v3507
        %3572 = vst [vmem:[%s230 + $0x24] sm:$0xf] %v3508
        %3573 = vst [vmem:[%s230 + $0x28] sm:$0xf] %v3509
        %3574 = vst [vmem:[%s230 + $0x2c] sm:$0xf] %v3510
        %3575 = vst [vmem:[%s230 + $0x30] sm:$0xf] %v3511
        %3576 = vst [vmem:[%s230 + $0x34] sm:$0xf] %v3512
        %3577 = vst [vmem:[%s230 + $0x38] sm:$0xf] %v3513
        %3578 = vst [vmem:[%s230 + $0x3c] sm:$0xf] %v3514
        %3579 = vst [vmem:[%s230 + $0x40] sm:$0xf] %v3515
        %3580 = vst [vmem:[%s230 + $0x44] sm:$0xf] %v3516
        %3581 = vst [vmem:[%s230 + $0x48] sm:$0xf] %v3517
        %3582 = vst [vmem:[%s230 + $0x4c] sm:$0xf] %v3518
        %3583 = vst [vmem:[%s230 + $0x50] sm:$0xf] %v3519
        %3584 = vst [vmem:[%s230 + $0x54] sm:$0xf] %v3520
        %3585 = vst [vmem:[%s230 + $0x58] sm:$0xf] %v3521
        %3586 = vst [vmem:[%s230 + $0x5c] sm:$0xf] %v3522
        %3587 = vst [vmem:[%s230 + $0x60] sm:$0xf] %v3523
        %3588 = vst [vmem:[%s230 + $0x64] sm:$0xf] %v3524
        %3589 = vst [vmem:[%s230 + $0x68] sm:$0xf] %v3525
        %3590 = vst [vmem:[%s230 + $0x6c] sm:$0xf] %v3526
        %3591 = vst [vmem:[%s230 + $0x70] sm:$0xf] %v3527
        %3592 = vst [vmem:[%s230 + $0x74] sm:$0xf] %v3528
        %3593 = vst [vmem:[%s230 + $0x78] sm:$0xf] %v3529
        %3594 = vst [vmem:[%s230 + $0x7c] sm:$0xf] %v3530
        %v3595 = vadd.f32 %v3403, %v3404
        %v3596 = vadd.f32 %v3595, %v3405
        %v3597 = vadd.f32 %v3596, %v3406
        %v3598 = vadd.f32 %v3597, %v3407
        %v3599 = vadd.f32 %v3598, %v3408
        %v3600 = vadd.f32 %v3599, %v3409
        %v3601 = vadd.f32 %v3600, %v3410
        %v3602 = vadd.f32 %v3601, %v3411
        %v3603 = vadd.f32 %v3602, %v3412
        %v3604 = vadd.f32 %v3603, %v3413
        %v3605 = vadd.f32 %v3604, %v3414
        %v3606 = vadd.f32 %v3605, %v3415
        %v3607 = vadd.f32 %v3606, %v3416
        %v3608 = vadd.f32 %v3607, %v3417
        %v3609 = vadd.f32 %v3608, %v3418
        %v3610 = vadd.f32 %v3609, %v3419
        %v3611 = vadd.f32 %v3610, %v3420
        %v3612 = vadd.f32 %v3611, %v3421
        %v3613 = vadd.f32 %v3612, %v3422
        %v3614 = vadd.f32 %v3613, %v3423
        %v3615 = vadd.f32 %v3614, %v3424
        %v3616 = vadd.f32 %v3615, %v3425
        %v3617 = vadd.f32 %v3616, %v3426
        %v3618 = vadd.f32 %v3617, %v3427
        %v3619 = vadd.f32 %v3618, %v3428
        %v3620 = vadd.f32 %v3619, %v3429
        %v3621 = vadd.f32 %v3620, %v3430
        %v3622 = vadd.f32 %v3621, %v3431
        %v3623 = vadd.f32 %v3622, %v3432
        %v3624 = vadd.f32 %v3623, %v3433
        %v3625 = vadd.f32 %v3624, %v3434
        %v3626 = vrot.slane %v3625, 4
        %v3627 = vadd.f32 %v3625, %v3626
        %v3628 = vrot.slane %v3627, 2
        %v3629 = vadd.f32 %v3627, %v3628
        %v3630 = vrot.slane %v3629, 1
        %v3631 = vadd.f32 %v3629, %v3630
        %v3632 = vmul.f32 %v3631, 0.00390625
        %v3633 = vsub.f32 %v3403, %v3632
        %v3634 = vsub.f32 %v3404, %v3632
        %v3635 = vsub.f32 %v3405, %v3632
        %v3636 = vsub.f32 %v3406, %v3632
        %v3637 = vsub.f32 %v3407, %v3632
        %v3638 = vsub.f32 %v3408, %v3632
        %v3639 = vsub.f32 %v3409, %v3632
        %v3640 = vsub.f32 %v3410, %v3632
        %v3641 = vsub.f32 %v3411, %v3632
        %v3642 = vsub.f32 %v3412, %v3632
        %v3643 = vsub.f32 %v3413, %v3632
        %v3644 = vsub.f32 %v3414, %v3632
        %v3645 = vsub.f32 %v3415, %v3632
        %v3646 = vsub.f32 %v3416, %v3632
        %v3647 = vsub.f32 %v3417, %v3632
        %v3648 = vsub.f32 %v3418, %v3632
        %v3649 = vsub.f32 %v3419, %v3632
        %v3650 = vsub.f32 %v3420, %v3632
        %v3651 = vsub.f32 %v3421, %v3632
        %v3652 = vsub.f32 %v3422, %v3632
        %v3653 = vsub.f32 %v3423, %v3632
        %v3654 = vsub.f32 %v3424, %v3632
        %v3655 = vsub.f32 %v3425, %v3632
        %v3656 = vsub.f32 %v3426, %v3632
        %v3657 = vsub.f32 %v3427, %v3632
        %v3658 = vsub.f32 %v3428, %v3632
        %v3659 = vsub.f32 %v3429, %v3632
        %v3660 = vsub.f32 %v3430, %v3632
        %v3661 = vsub.f32 %v3431, %v3632
        %v3662 = vsub.f32 %v3432, %v3632
        %v3663 = vsub.f32 %v3433, %v3632
        %v3664 = vsub.f32 %v3434, %v3632
        %v3665 = vmul.f32 %v3633, %v3633
        %v3666 = vmul.f32 %v3634, %v3634
        %v3667 = vmul.f32 %v3635, %v3635
        %v3668 = vmul.f32 %v3636, %v3636
        %v3669 = vmul.f32 %v3637, %v3637
        %v3670 = vmul.f32 %v3638, %v3638
        %v3671 = vmul.f32 %v3639, %v3639
        %v3672 = vmul.f32 %v3640, %v3640
        %v3673 = vmul.f32 %v3641, %v3641
        %v3674 = vmul.f32 %v3642, %v3642
        %v3675 = vmul.f32 %v3643, %v3643
        %v3676 = vmul.f32 %v3644, %v3644
        %v3677 = vmul.f32 %v3645, %v3645
        %v3678 = vmul.f32 %v3646, %v3646
        %v3679 = vmul.f32 %v3647, %v3647
        %v3680 = vmul.f32 %v3648, %v3648
        %v3681 = vmul.f32 %v3649, %v3649
        %v3682 = vmul.f32 %v3650, %v3650
        %v3683 = vmul.f32 %v3651, %v3651
        %v3684 = vmul.f32 %v3652, %v3652
        %v3685 = vmul.f32 %v3653, %v3653
        %v3686 = vmul.f32 %v3654, %v3654
        %v3687 = vmul.f32 %v3655, %v3655
        %v3688 = vmul.f32 %v3656, %v3656
        %v3689 = vmul.f32 %v3657, %v3657
        %v3690 = vmul.f32 %v3658, %v3658
        %v3691 = vmul.f32 %v3659, %v3659
        %v3692 = vmul.f32 %v3660, %v3660
        %v3693 = vmul.f32 %v3661, %v3661
        %v3694 = vmul.f32 %v3662, %v3662
        %v3695 = vmul.f32 %v3663, %v3663
        %v3696 = vmul.f32 %v3664, %v3664
        %v3697 = vadd.f32 %v3665, %v3666
        %v3698 = vadd.f32 %v3697, %v3667
        %v3699 = vadd.f32 %v3698, %v3668
        %v3700 = vadd.f32 %v3699, %v3669
        %v3701 = vadd.f32 %v3700, %v3670
        %v3702 = vadd.f32 %v3701, %v3671
        %v3703 = vadd.f32 %v3702, %v3672
        %v3704 = vadd.f32 %v3703, %v3673
        %v3705 = vadd.f32 %v3704, %v3674
        %v3706 = vadd.f32 %v3705, %v3675
        %v3707 = vadd.f32 %v3706, %v3676
        %v3708 = vadd.f32 %v3707, %v3677
        %v3709 = vadd.f32 %v3708, %v3678
        %v3710 = vadd.f32 %v3709, %v3679
        %v3711 = vadd.f32 %v3710, %v3680
        %v3712 = vadd.f32 %v3711, %v3681
        %v3713 = vadd.f32 %v3712, %v3682
        %v3714 = vadd.f32 %v3713, %v3683
        %v3715 = vadd.f32 %v3714, %v3684
        %v3716 = vadd.f32 %v3715, %v3685
        %v3717 = vadd.f32 %v3716, %v3686
        %v3718 = vadd.f32 %v3717, %v3687
        %v3719 = vadd.f32 %v3718, %v3688
        %v3720 = vadd.f32 %v3719, %v3689
        %v3721 = vadd.f32 %v3720, %v3690
        %v3722 = vadd.f32 %v3721, %v3691
        %v3723 = vadd.f32 %v3722, %v3692
        %v3724 = vadd.f32 %v3723, %v3693
        %v3725 = vadd.f32 %v3724, %v3694
        %v3726 = vadd.f32 %v3725, %v3695
        %v3727 = vadd.f32 %v3726, %v3696
        %v3728 = vrot.slane %v3727, 4
        %v3729 = vadd.f32 %v3727, %v3728
        %v3730 = vrot.slane %v3729, 2
        %v3731 = vadd.f32 %v3729, %v3730
        %v3732 = vrot.slane %v3731, 1
        %v3733 = vadd.f32 %v3731, %v3732
        %vm3734 = vcmask 1040384
        %v3735 = vsel %vm3734, %v3632, %v3733
        %3736 = vst [vmem:[%s237] sm:$0x3] %v3735
        %s3737 = sand.u32 %s99, 1
        %s3738 = scalar_lea.sflag [#allocation5], %s3737
        %s3739 = sand.u32 %s99, 1
        %s3740 = smul.addr %s3739, 128
        %s3741 = scalar_lea.vmem [#allocation8], %s3740
        %s3742 = sand.u32 %s127, 1
        %s3743 = scalar_lea.sflag [#allocation10], %s3742
        %s3744 = sand.u32 %s127, 1
        %s3745 = smul.addr %s3744, 2
        %s3746 = scalar_lea.vmem [#allocation9], %s3745
        // Predicated region
        $region37: #{tpu_custom_call.1} parent=27 // pred_check
          %p3747 = pneg %p109
        $region38: #{tpu_custom_call.1} parent=27 // pred_check_branch
          %3749 = sbr.rel (%p3747) target = $region40
        $region39: #{tpu_custom_call.1} parent=27 // pred_region
          %s3751 = ssub.s32 2048, 2048
          %3752 = vsyncadd %s3738, %s3751
          %s3753 = smul.addr %s30, 32
          %s3754 = sadd.s32 %s29, %s3753
          %s3755 = smul.addr %s3754, 64
          %s3756 = scalar_lea.hbm %s2, %s3755
          %s3757 = sshll.u32 %s3741, 4
          %s3758 = int_to_ptr.vmem [resolvable:$true] %s3757
          %3763 = dma.vmem_to_hbm [thread:$0]  %s3758, 2048, %s3756, %s3738, 64, 64, 4
        $region40: #{tpu_custom_call.1} parent=27 // pred_fallthru
          _
        // Predicated region
        $region41: #{tpu_custom_call.1} parent=27 // pred_check
          %p3764 = pneg %p137
        $region42: #{tpu_custom_call.1} parent=27 // pred_check_branch
          %3766 = sbr.rel (%p3764) target = $region44
        $region43: #{tpu_custom_call.1} parent=27 // pred_region
          %s3768 = ssub.s32 32, 32
          %3769 = vsyncadd %s3743, %s3768
          %s3770 = sadd.s32 %s29, %s30
          %s3771 = smul.addr %s3770, 32
          %s3772 = scalar_lea.hbm %s3, %s3771
          %s3774 = sshll.u32 %s3746, 4
          %s3775 = int_to_ptr.vmem [resolvable:$true] %s3774
          %3777 = dma.vmem_to_hbm [thread:$0]  %s3775, 32, %s3772, %s3743
        $region44: #{tpu_custom_call.1} parent=27 // pred_fallthru
          _
      $region28: #{tpu_custom_call.1} parent=5 // pred_fallthru
        _
      %p3778 = scmp.le.s32.totalorder 2, %s20
      // Predicated region
      $region45: #{tpu_custom_call.1} parent=5 // pred_check
        %p3779 = pneg %p3778
      $region46: #{tpu_custom_call.1} parent=5 // pred_check_branch
        %3781 = sbr.rel (%p3779) target = $region48
      $region47: #{tpu_custom_call.1} parent=5 // pred_region
        %s3782 = ssub.s32 %s20, 2
        // Predicated region
        $region49: #{tpu_custom_call.1} parent=47 // pred_check
          %p3783 = pneg %p115
        $region50: #{tpu_custom_call.1} parent=47 // pred_check_branch
          %3785 = sbr.rel (%p3783) target = $region52
        $region51: #{tpu_custom_call.1} parent=47 // pred_region
          %s3786 = sand.u32 %s100, 1
          %s3787 = scalar_lea.sflag [#allocation5], %s3786
          %s3788 = sand.u32 %s100, 1
          %s3789 = smul.addr %s3788, 128
          %s3790 = scalar_lea.vmem [#allocation8], %s3789
          %3791 = dma.done %s3787, 2048
        $region52: #{tpu_custom_call.1} parent=47 // pred_fallthru
          _
        // Predicated region
        $region53: #{tpu_custom_call.1} parent=47 // pred_check
          %p3792 = pneg %p143
        $region54: #{tpu_custom_call.1} parent=47 // pred_check_branch
          %3794 = sbr.rel (%p3792) target = $region56
        $region55: #{tpu_custom_call.1} parent=47 // pred_region
          %s3795 = sand.u32 %s128, 1
          %s3796 = scalar_lea.sflag [#allocation10], %s3795
          %s3797 = sand.u32 %s128, 1
          %s3798 = smul.addr %s3797, 2
          %s3799 = scalar_lea.vmem [#allocation9], %s3798
          %3800 = dma.done %s3796, 32
        $region56: #{tpu_custom_call.1} parent=47 // pred_fallthru
          _
      $region48: #{tpu_custom_call.1} parent=5 // pred_fallthru
        _
    $region6: #{tpu_custom_call.1} parent=1 // loop_footer
      %s24 = sadd.s32 1, %s20
    $region7: #{tpu_custom_call.1} parent=1 // loop_footer_branch
      %19 = sbr.rel target = $region3
    $region8: #{tpu_custom_call.1} parent=1 // loop_exit
      _
    %3801 = vsyncpa [#allocation4], 1
    %s3802 = scalar_lea.sflag [#allocation4], 1
    %3803 = vsyncpa %s3802, 1
    %3804 = vsyncpa [#allocation7], 1
    %3805 = vsyncpa [#allocation5], 1
    %s3806 = scalar_lea.sflag [#allocation5], 1
    %3807 = vsyncpa %s3806, 1
    %3808 = vsyncpa [#allocation10], 1
    %s3809 = scalar_lea.sflag [#allocation10], 1
    %3810 = vsyncpa %s3809, 1

</llo_original>
